<compile_context>
chip_gen: v5e
topology: v5e:2x2
jax: 0.10.0
libtpu: 0.0.40
codegen_flags: <defaults>
</compile_context>

<pallas_src>
import math
import numpy as np
import jax
import jax.numpy as jnp
from jax.experimental import pallas as pl
from jax.experimental.pallas import tpu as pltpu

LANE = 128
HIGH = jax.lax.Precision.HIGHEST


def _round_up(x, m):
    return ((x + m - 1) // m) * m


# ----------------------------------------------------------------------------
# Pallas kernel: full CriticNetwork forward for a block of TB graph states.
# ----------------------------------------------------------------------------
def critic_kernel(pool_r_ref, region_ref, pool_b_ref, nodes_ref,
                  w_ref, bias_ref, out_ref):
    f32 = jnp.float32

    def mm(x, w):
        return jnp.dot(x, w, precision=HIGH, preferred_element_type=f32)

    # Segment-mean pooling as MXU matmuls.
    g = mm(pool_r_ref[...], region_ref[...])        # [TB, 128] region mean (lanes 0..Dr)
    bmean = mm(pool_b_ref[...], nodes_ref[...])     # [TB, 128] boundary mean (lanes 0..Dn)
    # A state with no boundary nodes has an all-zero pooling row.
    has_boundary = jnp.sum(pool_b_ref[...], axis=1, keepdims=True) > 0.0   # [TB, 1]

    bias = bias_ref[...]                            # [8, 128]
    relu = lambda x: jnp.maximum(x, 0.0)

    def affine(x, widx, bidx):
        return mm(x, w_ref[widx]) + bias[bidx:bidx + 1, :]

    # state_encoder (Dropout = identity in eval mode)
    h1 = relu(affine(g, 0, 0))                      # Linear(region_dim -> H) + ReLU
    gs = relu(affine(h1, 1, 1))                     # Linear(H -> H/2) + ReLU

    # boundary_encoder
    h3 = relu(affine(bmean, 2, 2))                  # Linear(node_dim -> H/2) + ReLU
    binfo = affine(h3, 3, 3)                        # Linear(H/2 -> H/4)
    binfo = jnp.where(has_boundary, binfo, 0.0)     # empty-boundary path -> zeros

    # value_head: cat([gs, binfo]) @ W5  ==  gs @ W5g + binfo @ W5b
    vh = relu(mm(gs, w_ref[4]) + mm(binfo, w_ref[5]) + bias[4:5, :])
    v = affine(vh, 6, 5)                            # Linear(H/2 -> 1); value in lane 0
    out_ref[...] = v


# ----------------------------------------------------------------------------
# Parameters (xavier_uniform like _init_weights; stored [in, out])
# ----------------------------------------------------------------------------
def xavier_uniform(key, fan_in, fan_out, dtype=jnp.float32):
    bound = math.sqrt(6.0 / (fan_in + fan_out))
    return jax.random.uniform(key, (fan_in, fan_out), dtype, -bound, bound)


def make_params(key, node_dim, region_dim, hidden_dim):
    h, h2, h4 = hidden_dim, hidden_dim // 2, hidden_dim // 4
    ks = jax.random.split(key, 6)
    return dict(
        w1=xavier_uniform(ks[0], region_dim, h), b1=jnp.zeros((1, h), jnp.float32),
        w2=xavier_uniform(ks[1], h, h2),         b2=jnp.zeros((1, h2), jnp.float32),
        w3=xavier_uniform(ks[2], node_dim, h2),  b3=jnp.zeros((1, h2), jnp.float32),
        w4=xavier_uniform(ks[3], h2, h4),        b4=jnp.zeros((1, h4), jnp.float32),
        w5=xavier_uniform(ks[4], h2 + h4, h2),   b5=jnp.zeros((1, h2), jnp.float32),
        w6=xavier_uniform(ks[5], h2, 1),         b6=jnp.zeros((1, 1), jnp.float32),
    )


def pack_params(params, hidden_dim):
    """One [7,128,128] weight slab (w1,w2,w3,w4,w5_gs,w5_binfo,w6) + one [8,128] bias slab."""
    h2 = hidden_dim // 2

    def pad_tile(w):
        t = np.zeros((LANE, LANE), np.float32)
        w = np.asarray(w, np.float32)
        t[:w.shape[0], :w.shape[1]] = w
        return t

    w5 = np.asarray(params["w5"], np.float32)
    tiles = [params["w1"], params["w2"], params["w3"], params["w4"],
             w5[:h2, :], w5[h2:, :], params["w6"]]
    w_pack = np.stack([pad_tile(t) for t in tiles], axis=0)        # [7, 128, 128]

    b_pack = np.zeros((8, LANE), np.float32)
    for i, name in enumerate(["b1", "b2", "b3", "b4", "b5", "b6"]):
        b = np.asarray(params[name], np.float32)
        b_pack[i, :b.shape[1]] = b[0]
    return jnp.asarray(w_pack), jnp.asarray(b_pack)


# ----------------------------------------------------------------------------
# Host glue: build padded, lane-dense kernel inputs for a batch of states
# ----------------------------------------------------------------------------
def build_batch_inputs(node_embeddings, region_embeddings, boundary_lists, tb=8):
    node_embeddings = np.asarray(node_embeddings, np.float32)      # [B, N, Dn]
    region_embeddings = np.asarray(region_embeddings, np.float32)  # [B, P, Dr]
    B, N, Dn = node_embeddings.shape
    _, P, Dr = region_embeddings.shape
    b_pad = _round_up(max(B, tb), tb)
    rk = _round_up(B * P, LANE)
    nk = _round_up(B * N, LANE)

    region_all = np.zeros((rk, LANE), np.float32)
    region_all[:B * P, :Dr] = region_embeddings.reshape(B * P, Dr)
    nodes_all = np.zeros((nk, LANE), np.float32)
    nodes_all[:B * N, :Dn] = node_embeddings.reshape(B * N, Dn)

    pool_r = np.zeros((b_pad, rk), np.float32)
    pool_b = np.zeros((b_pad, nk), np.float32)
    for b in range(B):
        pool_r[b, b * P:(b + 1) * P] = 1.0 / P
        idx = np.asarray(boundary_lists[b]).reshape(-1).astype(np.int64)
        if idx.size > 0:
            # duplicate-aware mean: matches node_embeddings[boundary_nodes].mean()
            np.add.at(pool_b[b], b * N + idx, 1.0 / idx.size)
    return (jnp.asarray(pool_r), jnp.asarray(region_all),
            jnp.asarray(pool_b), jnp.asarray(nodes_all), b_pad)


# ----------------------------------------------------------------------------
# Wrappers
# ----------------------------------------------------------------------------
def critic_forward_batched(params, node_embeddings, region_embeddings,
                           boundary_lists, hidden_dim, tb=8):
    assert tb % 8 == 0
    B = np.asarray(node_embeddings).shape[0]
    w_pack, b_pack = pack_params(params, hidden_dim)
    pool_r, region_all, pool_b, nodes_all, b_pad = build_batch_inputs(
        node_embeddings, region_embeddings, boundary_lists, tb)
    rk, nk = region_all.shape[0], nodes_all.shape[0]

    out = pl.pallas_call(
        critic_kernel,
        out_shape=jax.ShapeDtypeStruct((b_pad, LANE), jnp.float32),
        grid=(b_pad // tb,),
        in_specs=[
            pl.BlockSpec((tb, rk),           lambda i: (i, 0)),
            pl.BlockSpec((rk, LANE),         lambda i: (0, 0)),
            pl.BlockSpec((tb, nk),           lambda i: (i, 0)),
            pl.BlockSpec((nk, LANE),         lambda i: (0, 0)),
            pl.BlockSpec((7, LANE, LANE),    lambda i: (0, 0, 0)),
            pl.BlockSpec((8, LANE),          lambda i: (0, 0)),
        ],
        out_specs=pl.BlockSpec((tb, LANE), lambda i: (i, 0)),
        compiler_params=pltpu.CompilerParams(
            dimension_semantics=("parallel",)),
    )(pool_r, region_all, pool_b, nodes_all, w_pack, b_pack)
    return out[:B, 0]                      # state values, shape [B]


def critic_forward(params, node_embeddings, region_embeddings, boundary_nodes,
                   hidden_dim):
    """Single-state API matching the PyTorch forward; returns shape [1]."""
    return critic_forward_batched(params, np.asarray(node_embeddings)[None],
                                  np.asarray(region_embeddings)[None],
                                  [np.asarray(boundary_nodes)], hidden_dim)


# ----------------------------------------------------------------------------
# Pure-JAX per-state reference (mirrors the PyTorch module)
# ----------------------------------------------------------------------------
def critic_reference(params, node_emb, region_emb, boundary_idx, hidden_dim):
    with jax.default_matmul_precision("highest"):
        relu = lambda x: jnp.maximum(x, 0.0)
        g = jnp.mean(region_emb, axis=0, keepdims=True)
        gs = relu(relu(g @ params["w1"] + params["b1"]) @ params["w2"] + params["b2"])
        bidx = np.asarray(boundary_idx).reshape(-1)
        if bidx.size > 0:
            bmean = jnp.mean(node_emb[jnp.asarray(bidx)], axis=0, keepdims=True)
            binfo = relu(bmean @ params["w3"] + params["b3"]) @ params["w4"] + params["b4"]
        else:
            binfo = jnp.zeros((1, hidden_dim // 4), jnp.float32)
        comb = jnp.concatenate([gs, binfo], axis=1)
        v = relu(comb @ params["w5"] + params["b5"]) @ params["w6"] + params["b6"]
        return v[:, 0]


if __name__ == "__main__":
    node_dim, region_dim, hidden_dim = 16, 16, 32
    total_nodes, num_partitions = 16, 4
    B = 10                                            # batch of graph states

    key = jax.random.PRNGKey(0)
    k_par, k_node, k_reg = jax.random.split(key, 3)

    params = make_params(k_par, node_dim, region_dim, hidden_dim)
    node_embeddings = jax.random.normal(k_node, (B, total_nodes, node_dim), jnp.float32)
    region_embeddings = jax.random.normal(k_reg, (B, num_partitions, region_dim), jnp.float32)

    rng = np.random.default_rng(0)
    boundary_lists = []
    for b in range(B):
        if b == 0:
            boundary_lists.append(np.zeros((0,), np.int32))        # empty-boundary path
        elif b == 1:
            boundary_lists.append(np.array([3, 3, 7], np.int32))   # duplicate indices
        else:
            k = int(rng.integers(1, total_nodes))
            boundary_lists.append(rng.integers(0, total_nodes, size=k).astype(np.int32))

    values = critic_forward_batched(params, node_embeddings, region_embeddings,
                                    boundary_lists, hidden_dim)
    values = jax.block_until_ready(values)

    ref = jnp.concatenate([
        critic_reference(params, node_embeddings[b], region_embeddings[b],
                         boundary_lists[b], hidden_dim) for b in range(B)])

    assert values.shape == (B,)
    assert jnp.allclose(values, ref, atol=1e-3, rtol=1e-3), (values, ref)

    # single-state API (same signature semantics as the PyTorch forward)
    v1 = jax.block_until_ready(
        critic_forward(params, node_embeddings[0], region_embeddings[0],
                       boundary_lists[2], hidden_dim))
    r1 = critic_reference(params, node_embeddings[0], region_embeddings[0],
                          boundary_lists[2], hidden_dim)
    assert v1.shape == (1,)
    assert jnp.allclose(v1, r1, atol=1e-3, rtol=1e-3), (v1, r1)

    print("KERNEL_OK")
</pallas_src>

<mosaic_0001>
module attributes {stable_mosaic.version = 11 : i64} {
  func.func @critic_kernel(%arg0: i32, %arg1: memref<8x128xf32, #tpu.memory_space<vmem>>, %arg2: memref<128x128xf32, #tpu.memory_space<vmem>>, %arg3: memref<8x256xf32, #tpu.memory_space<vmem>>, %arg4: memref<256x128xf32, #tpu.memory_space<vmem>>, %arg5: memref<7x128x128xf32, #tpu.memory_space<vmem>>, %arg6: memref<8x128xf32, #tpu.memory_space<vmem>>, %arg7: memref<8x128xf32, #tpu.memory_space<vmem>>) attributes {dimension_semantics = [#tpu.dimension_semantics<parallel>], iteration_bounds = array<i64: 2>, scalar_prefetch = 0 : i64, scratch_operands = 0 : i64, tpu.core_type = #tpu.core_type<tc>, window_params = [{transform_indices = @transform_0, window_bounds = array<i64: 8, 128>}, {pipeline_mode = #tpu.pipeline_mode<synchronous>, transform_indices = @transform_1, window_bounds = array<i64: 128, 128>}, {transform_indices = @transform_2, window_bounds = array<i64: 8, 256>}, {pipeline_mode = #tpu.pipeline_mode<synchronous>, transform_indices = @transform_3, window_bounds = array<i64: 256, 128>}, {pipeline_mode = #tpu.pipeline_mode<synchronous>, transform_indices = @transform_4, window_bounds = array<i64: 7, 128, 128>}, {pipeline_mode = #tpu.pipeline_mode<synchronous>, transform_indices = @transform_5, window_bounds = array<i64: 8, 128>}, {transform_indices = @transform_6, window_bounds = array<i64: 8, 128>}]} {
    %c0 = arith.constant 0 : index
    %c0_0 = arith.constant 0 : index
    %0 = vector.load %arg1[%c0, %c0_0] : memref<8x128xf32, #tpu.memory_space<vmem>>, vector<8x128xf32>
    %c0_1 = arith.constant 0 : index
    %c0_2 = arith.constant 0 : index
    %1 = vector.load %arg2[%c0_1, %c0_2] : memref<128x128xf32, #tpu.memory_space<vmem>>, vector<128x128xf32>
    %cst = arith.constant dense<0.000000e+00> : vector<8x128xf32>
    %2 = tpu.matmul %0, %1, %cst {dimension_numbers = #tpu.dot_dimension_numbers<[1], [0], [0], [1], [0, 0, 1, 1], [], []>, precision = #tpu.contract_precision<fp32>} : vector<8x128xf32>, vector<128x128xf32>, vector<8x128xf32> -> vector<8x128xf32>
    %c0_3 = arith.constant 0 : index
    %c0_4 = arith.constant 0 : index
    %3 = vector.load %arg3[%c0_3, %c0_4] : memref<8x256xf32, #tpu.memory_space<vmem>>, vector<8x256xf32>
    %c0_5 = arith.constant 0 : index
    %c0_6 = arith.constant 0 : index
    %4 = vector.load %arg4[%c0_5, %c0_6] : memref<256x128xf32, #tpu.memory_space<vmem>>, vector<256x128xf32>
    %cst_7 = arith.constant dense<0.000000e+00> : vector<8x128xf32>
    %5 = tpu.matmul %3, %4, %cst_7 {dimension_numbers = #tpu.dot_dimension_numbers<[1], [0], [0], [1], [0, 0, 1, 1], [], []>, precision = #tpu.contract_precision<fp32>} : vector<8x256xf32>, vector<256x128xf32>, vector<8x128xf32> -> vector<8x128xf32>
    %c0_8 = arith.constant 0 : index
    %c0_9 = arith.constant 0 : index
    %6 = vector.load %arg3[%c0_8, %c0_9] : memref<8x256xf32, #tpu.memory_space<vmem>>, vector<8x256xf32>
    %cst_10 = arith.constant dense<0.000000e+00> : vector<8xf32>
    %7 = vector.multi_reduction <add>, %6, %cst_10 [1] : vector<8x256xf32> to vector<8xf32>
    %8 = vector.shape_cast %7 : vector<8xf32> to vector<8x1xf32>
    %cst_11 = arith.constant 0.000000e+00 : f32
    %9 = vector.broadcast %cst_11 : f32 to vector<8x1xf32>
    %10 = arith.cmpf ogt, %8, %9 : vector<8x1xf32>
    %c0_12 = arith.constant 0 : index
    %c0_13 = arith.constant 0 : index
    %11 = vector.load %arg6[%c0_12, %c0_13] : memref<8x128xf32, #tpu.memory_space<vmem>>, vector<8x128xf32>
    %c0_14 = arith.constant 0 : index
    %c0_15 = arith.constant 0 : index
    %c0_16 = arith.constant 0 : index
    %12 = vector.load %arg5[%c0_14, %c0_15, %c0_16] : memref<7x128x128xf32, #tpu.memory_space<vmem>>, vector<1x128x128xf32>
    %13 = vector.shape_cast %12 : vector<1x128x128xf32> to vector<128x128xf32>
    %cst_17 = arith.constant dense<0.000000e+00> : vector<8x128xf32>
    %14 = tpu.matmul %2, %13, %cst_17 {dimension_numbers = #tpu.dot_dimension_numbers<[1], [0], [0], [1], [0, 0, 1, 1], [], []>, precision = #tpu.contract_precision<fp32>} : vector<8x128xf32>, vector<128x128xf32>, vector<8x128xf32> -> vector<8x128xf32>
    %15 = vector.extract_strided_slice %11 {offsets = [0, 0], sizes = [1, 128], strides = [1, 1]} : vector<8x128xf32> to vector<1x128xf32>
    %16 = vector.broadcast %15 : vector<1x128xf32> to vector<8x128xf32>
    %17 = arith.addf %14, %16 : vector<8x128xf32>
    %cst_18 = arith.constant 0.000000e+00 : f32
    %18 = vector.broadcast %cst_18 : f32 to vector<8x128xf32>
    %19 = arith.maximumf %17, %18 : vector<8x128xf32>
    %c1 = arith.constant 1 : index
    %c0_19 = arith.constant 0 : index
    %c0_20 = arith.constant 0 : index
    %20 = vector.load %arg5[%c1, %c0_19, %c0_20] : memref<7x128x128xf32, #tpu.memory_space<vmem>>, vector<1x128x128xf32>
    %21 = vector.shape_cast %20 : vector<1x128x128xf32> to vector<128x128xf32>
    %cst_21 = arith.constant dense<0.000000e+00> : vector<8x128xf32>
    %22 = tpu.matmul %19, %21, %cst_21 {dimension_numbers = #tpu.dot_dimension_numbers<[1], [0], [0], [1], [0, 0, 1, 1], [], []>, precision = #tpu.contract_precision<fp32>} : vector<8x128xf32>, vector<128x128xf32>, vector<8x128xf32> -> vector<8x128xf32>
    %23 = vector.extract_strided_slice %11 {offsets = [1, 0], sizes = [1, 128], strides = [1, 1]} : vector<8x128xf32> to vector<1x128xf32>
    %24 = vector.broadcast %23 : vector<1x128xf32> to vector<8x128xf32>
    %25 = arith.addf %22, %24 : vector<8x128xf32>
    %cst_22 = arith.constant 0.000000e+00 : f32
    %26 = vector.broadcast %cst_22 : f32 to vector<8x128xf32>
    %27 = arith.maximumf %25, %26 : vector<8x128xf32>
    %c2 = arith.constant 2 : index
    %c0_23 = arith.constant 0 : index
    %c0_24 = arith.constant 0 : index
    %28 = vector.load %arg5[%c2, %c0_23, %c0_24] : memref<7x128x128xf32, #tpu.memory_space<vmem>>, vector<1x128x128xf32>
    %29 = vector.shape_cast %28 : vector<1x128x128xf32> to vector<128x128xf32>
    %cst_25 = arith.constant dense<0.000000e+00> : vector<8x128xf32>
    %30 = tpu.matmul %5, %29, %cst_25 {dimension_numbers = #tpu.dot_dimension_numbers<[1], [0], [0], [1], [0, 0, 1, 1], [], []>, precision = #tpu.contract_precision<fp32>} : vector<8x128xf32>, vector<128x128xf32>, vector<8x128xf32> -> vector<8x128xf32>
    %31 = vector.extract_strided_slice %11 {offsets = [2, 0], sizes = [1, 128], strides = [1, 1]} : vector<8x128xf32> to vector<1x128xf32>
    %32 = vector.broadcast %31 : vector<1x128xf32> to vector<8x128xf32>
    %33 = arith.addf %30, %32 : vector<8x128xf32>
    %cst_26 = arith.constant 0.000000e+00 : f32
    %34 = vector.broadcast %cst_26 : f32 to vector<8x128xf32>
    %35 = arith.maximumf %33, %34 : vector<8x128xf32>
    %c3 = arith.constant 3 : index
    %c0_27 = arith.constant 0 : index
    %c0_28 = arith.constant 0 : index
    %36 = vector.load %arg5[%c3, %c0_27, %c0_28] : memref<7x128x128xf32, #tpu.memory_space<vmem>>, vector<1x128x128xf32>
    %37 = vector.shape_cast %36 : vector<1x128x128xf32> to vector<128x128xf32>
    %cst_29 = arith.constant dense<0.000000e+00> : vector<8x128xf32>
    %38 = tpu.matmul %35, %37, %cst_29 {dimension_numbers = #tpu.dot_dimension_numbers<[1], [0], [0], [1], [0, 0, 1, 1], [], []>, precision = #tpu.contract_precision<fp32>} : vector<8x128xf32>, vector<128x128xf32>, vector<8x128xf32> -> vector<8x128xf32>
    %39 = vector.extract_strided_slice %11 {offsets = [3, 0], sizes = [1, 128], strides = [1, 1]} : vector<8x128xf32> to vector<1x128xf32>
    %40 = vector.broadcast %39 : vector<1x128xf32> to vector<8x128xf32>
    %41 = arith.addf %38, %40 : vector<8x128xf32>
    %cst_30 = arith.constant 0.000000e+00 : f32
    %42 = vector.shape_cast %10 : vector<8x1xi1> to vector<8x1xi1>
    %43 = vector.broadcast %42 : vector<8x1xi1> to vector<8x128xi1>
    %44 = vector.broadcast %cst_30 : f32 to vector<8x128xf32>
    %45 = arith.select %43, %41, %44 : vector<8x128xi1>, vector<8x128xf32>
    %c4 = arith.constant 4 : index
    %c0_31 = arith.constant 0 : index
    %c0_32 = arith.constant 0 : index
    %46 = vector.load %arg5[%c4, %c0_31, %c0_32] : memref<7x128x128xf32, #tpu.memory_space<vmem>>, vector<1x128x128xf32>
    %47 = vector.shape_cast %46 : vector<1x128x128xf32> to vector<128x128xf32>
    %cst_33 = arith.constant dense<0.000000e+00> : vector<8x128xf32>
    %48 = tpu.matmul %27, %47, %cst_33 {dimension_numbers = #tpu.dot_dimension_numbers<[1], [0], [0], [1], [0, 0, 1, 1], [], []>, precision = #tpu.contract_precision<fp32>} : vector<8x128xf32>, vector<128x128xf32>, vector<8x128xf32> -> vector<8x128xf32>
    %c5 = arith.constant 5 : index
    %c0_34 = arith.constant 0 : index
    %c0_35 = arith.constant 0 : index
    %49 = vector.load %arg5[%c5, %c0_34, %c0_35] : memref<7x128x128xf32, #tpu.memory_space<vmem>>, vector<1x128x128xf32>
    %50 = vector.shape_cast %49 : vector<1x128x128xf32> to vector<128x128xf32>
    %cst_36 = arith.constant dense<0.000000e+00> : vector<8x128xf32>
    %51 = tpu.matmul %45, %50, %cst_36 {dimension_numbers = #tpu.dot_dimension_numbers<[1], [0], [0], [1], [0, 0, 1, 1], [], []>, precision = #tpu.contract_precision<fp32>} : vector<8x128xf32>, vector<128x128xf32>, vector<8x128xf32> -> vector<8x128xf32>
    %52 = arith.addf %48, %51 : vector<8x128xf32>
    %53 = vector.extract_strided_slice %11 {offsets = [4, 0], sizes = [1, 128], strides = [1, 1]} : vector<8x128xf32> to vector<1x128xf32>
    %54 = vector.broadcast %53 : vector<1x128xf32> to vector<8x128xf32>
    %55 = arith.addf %52, %54 : vector<8x128xf32>
    %cst_37 = arith.constant 0.000000e+00 : f32
    %56 = vector.broadcast %cst_37 : f32 to vector<8x128xf32>
    %57 = arith.maximumf %55, %56 : vector<8x128xf32>
    %c6 = arith.constant 6 : index
    %c0_38 = arith.constant 0 : index
    %c0_39 = arith.constant 0 : index
    %58 = vector.load %arg5[%c6, %c0_38, %c0_39] : memref<7x128x128xf32, #tpu.memory_space<vmem>>, vector<1x128x128xf32>
    %59 = vector.shape_cast %58 : vector<1x128x128xf32> to vector<128x128xf32>
    %cst_40 = arith.constant dense<0.000000e+00> : vector<8x128xf32>
    %60 = tpu.matmul %57, %59, %cst_40 {dimension_numbers = #tpu.dot_dimension_numbers<[1], [0], [0], [1], [0, 0, 1, 1], [], []>, precision = #tpu.contract_precision<fp32>} : vector<8x128xf32>, vector<128x128xf32>, vector<8x128xf32> -> vector<8x128xf32>
    %61 = vector.extract_strided_slice %11 {offsets = [5, 0], sizes = [1, 128], strides = [1, 1]} : vector<8x128xf32> to vector<1x128xf32>
    %62 = vector.broadcast %61 : vector<1x128xf32> to vector<8x128xf32>
    %63 = arith.addf %60, %62 : vector<8x128xf32>
    %c0_41 = arith.constant 0 : index
    %c0_42 = arith.constant 0 : index
    %64 = vector.load %arg7[%c0_41, %c0_42] : memref<8x128xf32, #tpu.memory_space<vmem>>, vector<8x128xf32>
    tpu.vector_store %arg7[%c0_41, %c0_42], %63 {strides = array<i32>} : memref<8x128xf32, #tpu.memory_space<vmem>>, vector<8x128xf32>,
    return
  }
  func.func @transform_0(%arg0: i32) -> (i32, i32) {
    %c0_i32 = arith.constant 0 : i32
    %c0_i32_0 = arith.constant 0 : i32
    return %arg0, %c0_i32 : i32, i32
  }
  func.func @transform_1(%arg0: i32) -> (i32, i32) {
    %c0_i32 = arith.constant 0 : i32
    %c0_i32_0 = arith.constant 0 : i32
    %c0_i32_1 = arith.constant 0 : i32
    return %c0_i32, %c0_i32_0 : i32, i32
  }
  func.func @transform_2(%arg0: i32) -> (i32, i32) {
    %c0_i32 = arith.constant 0 : i32
    %c0_i32_0 = arith.constant 0 : i32
    return %arg0, %c0_i32 : i32, i32
  }
  func.func @transform_3(%arg0: i32) -> (i32, i32) {
    %c0_i32 = arith.constant 0 : i32
    %c0_i32_0 = arith.constant 0 : i32
    %c0_i32_1 = arith.constant 0 : i32
    return %c0_i32, %c0_i32_0 : i32, i32
  }
  func.func @transform_4(%arg0: i32) -> (i32, i32, i32) {
    %c0_i32 = arith.constant 0 : i32
    %c0_i32_0 = arith.constant 0 : i32
    %c0_i32_1 = arith.constant 0 : i32
    %c0_i32_2 = arith.constant 0 : i32
    return %c0_i32, %c0_i32_0, %c0_i32_1 : i32, i32, i32
  }
  func.func @transform_5(%arg0: i32) -> (i32, i32) {
    %c0_i32 = arith.constant 0 : i32
    %c0_i32_0 = arith.constant 0 : i32
    %c0_i32_1 = arith.constant 0 : i32
    return %c0_i32, %c0_i32_0 : i32, i32
  }
  func.func @transform_6(%arg0: i32) -> (i32, i32) {
    %c0_i32 = arith.constant 0 : i32
    %c0_i32_0 = arith.constant 0 : i32
    return %arg0, %c0_i32 : i32, i32
  }
}

</mosaic_0001>

<llo_original>
// kernel: tpu_custom_call.1
$region0: #{tpu_custom_call.1}
  #allocation0 [shape = 'u32[]', space=smem, size = 0x4, offset = 0x4, fixed_abs, tag = 'smem constant byte address 0x4 - core index']
  #allocation1 [shape = 'u32[72,128]{1,0:T(1,128)}', space=vmem, size = 0x9000, scoped, tag = 'internal scratch']
  %s0 = inlined_call_operand.hbm [shape: f32[16,128], index: 0, kind: input, shape index: {}]
  %s1 = inlined_call_operand.hbm [shape: f32[128,128], index: 1, kind: input, shape index: {}]
  %s2 = inlined_call_operand.hbm [shape: f32[16,256], index: 2, kind: input, shape index: {}]
  %s3 = inlined_call_operand.hbm [shape: f32[256,128], index: 3, kind: input, shape index: {}]
  %s4 = inlined_call_operand.hbm [shape: f32[7,128,128], index: 4, kind: input, shape index: {}]
  %s5 = inlined_call_operand.hbm [shape: f32[8,128], index: 5, kind: input, shape index: {}]
  %s6 = inlined_call_operand.hbm [shape: f32[16,128], index: 6, kind: output, shape index: {}]
  %s7 = sld [smem:[#allocation0]]
  $region81: #{tpu_custom_call.1} parent=0
    _
  %s9 = ssub.s32 1, %s7
  %s10 = scalar_select 0, %s9, %s7
  $region1: #{tpu_custom_call.1} parent=0
    #allocation2 [shape = 'u8[8192]{0}', space=vmem, size = 0x2000, scoped, tag = 'input window, operand 0']
    #allocation3 [shape = 's32[2]{0}', space=sflag, size = 0x8, scoped, tag = 'scoped memory for tpu_custom_call.1']
    #allocation4 [shape = 's32[2]{0}', space=sflag, size = 0x8, scoped, tag = 'scoped memory for tpu_custom_call.1']
    #allocation5 [shape = 'u8[65536]{0}', space=vmem, size = 0x10000, scoped, tag = 'input window, operand 1, single buffered']
    #allocation6 [shape = 's32[1]{0}', space=sflag, size = 0x4, scoped, tag = 'scoped memory for tpu_custom_call.1']
    #allocation7 [shape = 'u8[16384]{0}', space=vmem, size = 0x4000, scoped, tag = 'input window, operand 2']
    #allocation8 [shape = 'u8[131072]{0}', space=vmem, size = 0x20000, scoped, tag = 'input window, operand 3, single buffered']
    #allocation9 [shape = 'u8[458752]{0}', space=vmem, size = 0x70000, scoped, tag = 'input window, operand 4, single buffered']
    #allocation10 [shape = 's32[1]{0}', space=sflag, size = 0x4, scoped, tag = 'scoped memory for tpu_custom_call.1']
    #allocation11 [shape = 'u8[4096]{0}', space=vmem, size = 0x1000, scoped, tag = 'input window, operand 5, single buffered']
    #allocation12 [shape = 'u8[8192]{0}', space=vmem, size = 0x2000, scoped, tag = 'output window, operand 0']
    %11 = vsyncpa [#allocation3], 0
    %s12 = scalar_lea.sflag [#allocation3], 1
    %13 = vsyncpa %s12, 0
    %14 = vsyncpa [#allocation6], 0
    %15 = vsyncpa [#allocation10], 0
    %16 = vsyncpa [#allocation4], 0
    %s17 = scalar_lea.sflag [#allocation4], 1
    %18 = vsyncpa %s17, 0
    loop: start=0, step=1, limit=4
    $region2: #{tpu_custom_call.1} parent=1 // loop_pre_header
      _
    $region3: #{tpu_custom_call.1} parent=1 // loop_header
      %s20 = sphi 0, %s24
      %p21 = scmp.ge.s32.totalorder %s20, 4
      %s30 = sphi 0, %s32
      %s33 = sphi 0, %s30
      %s34 = sphi 0, %s33
      %s50 = sphi 0, %s34
      %s54 = sphi 0, %s54
      %s56 = sphi 0, %s54
      %s57 = sphi 0, %s56
      %s71 = sphi 0, %s57
      %s77 = sphi 0, %s79
      %s80 = sphi 0, %s77
      %s81 = sphi 0, %s80
      %s97 = sphi 0, %s81
      %s101 = sphi 0, %s101
      %s103 = sphi 0, %s101
      %s104 = sphi 0, %s103
      %s118 = sphi 0, %s104
      %s122 = sphi 0, %s122
      %s124 = sphi 0, %s122
      %s125 = sphi 0, %s124
      %s139 = sphi 0, %s125
      %s143 = sphi 0, %s143
      %s145 = sphi 0, %s143
      %s146 = sphi 0, %s145
      %s160 = sphi 0, %s146
      %s166 = sphi 0, %s168
      %s169 = sphi 0, %s166
      %s170 = sphi 0, %s169
      %s186 = sphi 0, %s170
    $region4: #{tpu_custom_call.1} parent=1 // loop_header_branch
      %23 = sbr.rel (%p21) target = $region8
    $region5: #{tpu_custom_call.1} parent=1 // loop_body
      %s25 = ssub.s32 %s20, 1
      %s26 = ssub.s32 %s20, 2
      %s27 = sadd.s32 %s20, 1
      %s28 = ssub.s32 %s20, %s27
      %p29 = scmp.eq.s32.totalorder %s28, 0
      %s31 = sadd.s32 %s30, 1
      %s32 = scalar_select %p29, %s30, %s31
      %p35 = pneg %p29
      %p36 = scmp.eq.s32.totalorder %s20, 1
      %p37 = por %p35, %p36
      %p38 = scmp.ne.s32.totalorder %s30, %s33
      %p39 = scmp.eq.s32.totalorder %s20, 0
      %p40 = por %p38, %p39
      %p41 = scmp.ne.s32.totalorder %s30, %s33
      %p42 = scmp.eq.s32.totalorder %s25, 1
      %p43 = por %p41, %p42
      %p44 = scmp.ne.s32.totalorder %s33, %s34
      %p45 = scmp.eq.s32.totalorder %s25, 0
      %p46 = por %p44, %p45
      %p47 = scmp.ne.s32.totalorder %s33, %s34
      %p48 = scmp.eq.s32.totalorder %s26, 1
      %p49 = por %p47, %p48
      %p51 = scmp.ne.s32.totalorder %s34, %s50
      %p52 = scmp.eq.s32.totalorder %s26, 0
      %p53 = por %p51, %p52
      %s55 = sadd.s32 %s54, 1
      %p58 = scmp.eq.s32.totalorder %s20, 1
      %p59 = scmp.ne.s32.totalorder %s54, %s56
      %p60 = scmp.eq.s32.totalorder %s20, 0
      %p61 = por %p59, %p60
      %p62 = scmp.ne.s32.totalorder %s54, %s56
      %p63 = scmp.eq.s32.totalorder %s25, 1
      %p64 = por %p62, %p63
      %p65 = scmp.ne.s32.totalorder %s56, %s57
      %p66 = scmp.eq.s32.totalorder %s25, 0
      %p67 = por %p65, %p66
      %p68 = scmp.ne.s32.totalorder %s56, %s57
      %p69 = scmp.eq.s32.totalorder %s26, 1
      %p70 = por %p68, %p69
      %p72 = scmp.ne.s32.totalorder %s57, %s71
      %p73 = scmp.eq.s32.totalorder %s26, 0
      %p74 = por %p72, %p73
      %s75 = ssub.s32 %s20, %s27
      %p76 = scmp.eq.s32.totalorder %s75, 0
      %s78 = sadd.s32 %s77, 1
      %s79 = scalar_select %p76, %s77, %s78
      %p82 = pneg %p76
      %p83 = scmp.eq.s32.totalorder %s20, 1
      %p84 = por %p82, %p83
      %p85 = scmp.ne.s32.totalorder %s77, %s80
      %p86 = scmp.eq.s32.totalorder %s20, 0
      %p87 = por %p85, %p86
      %p88 = scmp.ne.s32.totalorder %s77, %s80
      %p89 = scmp.eq.s32.totalorder %s25, 1
      %p90 = por %p88, %p89
      %p91 = scmp.ne.s32.totalorder %s80, %s81
      %p92 = scmp.eq.s32.totalorder %s25, 0
      %p93 = por %p91, %p92
      %p94 = scmp.ne.s32.totalorder %s80, %s81
      %p95 = scmp.eq.s32.totalorder %s26, 1
      %p96 = por %p94, %p95
      %p98 = scmp.ne.s32.totalorder %s81, %s97
      %p99 = scmp.eq.s32.totalorder %s26, 0
      %p100 = por %p98, %p99
      %s102 = sadd.s32 %s101, 1
      %p105 = scmp.eq.s32.totalorder %s20, 1
      %p106 = scmp.ne.s32.totalorder %s101, %s103
      %p107 = scmp.eq.s32.totalorder %s20, 0
      %p108 = por %p106, %p107
      %p109 = scmp.ne.s32.totalorder %s101, %s103
      %p110 = scmp.eq.s32.totalorder %s25, 1
      %p111 = por %p109, %p110
      %p112 = scmp.ne.s32.totalorder %s103, %s104
      %p113 = scmp.eq.s32.totalorder %s25, 0
      %p114 = por %p112, %p113
      %p115 = scmp.ne.s32.totalorder %s103, %s104
      %p116 = scmp.eq.s32.totalorder %s26, 1
      %p117 = por %p115, %p116
      %p119 = scmp.ne.s32.totalorder %s104, %s118
      %p120 = scmp.eq.s32.totalorder %s26, 0
      %p121 = por %p119, %p120
      %s123 = sadd.s32 %s122, 1
      %p126 = scmp.eq.s32.totalorder %s20, 1
      %p127 = scmp.ne.s32.totalorder %s122, %s124
      %p128 = scmp.eq.s32.totalorder %s20, 0
      %p129 = por %p127, %p128
      %p130 = scmp.ne.s32.totalorder %s122, %s124
      %p131 = scmp.eq.s32.totalorder %s25, 1
      %p132 = por %p130, %p131
      %p133 = scmp.ne.s32.totalorder %s124, %s125
      %p134 = scmp.eq.s32.totalorder %s25, 0
      %p135 = por %p133, %p134
      %p136 = scmp.ne.s32.totalorder %s124, %s125
      %p137 = scmp.eq.s32.totalorder %s26, 1
      %p138 = por %p136, %p137
      %p140 = scmp.ne.s32.totalorder %s125, %s139
      %p141 = scmp.eq.s32.totalorder %s26, 0
      %p142 = por %p140, %p141
      %s144 = sadd.s32 %s143, 1
      %p147 = scmp.eq.s32.totalorder %s20, 1
      %p148 = scmp.ne.s32.totalorder %s143, %s145
      %p149 = scmp.eq.s32.totalorder %s20, 0
      %p150 = por %p148, %p149
      %p151 = scmp.ne.s32.totalorder %s143, %s145
      %p152 = scmp.eq.s32.totalorder %s25, 1
      %p153 = por %p151, %p152
      %p154 = scmp.ne.s32.totalorder %s145, %s146
      %p155 = scmp.eq.s32.totalorder %s25, 0
      %p156 = por %p154, %p155
      %p157 = scmp.ne.s32.totalorder %s145, %s146
      %p158 = scmp.eq.s32.totalorder %s26, 1
      %p159 = por %p157, %p158
      %p161 = scmp.ne.s32.totalorder %s146, %s160
      %p162 = scmp.eq.s32.totalorder %s26, 0
      %p163 = por %p161, %p162
      %s164 = ssub.s32 %s20, %s27
      %p165 = scmp.eq.s32.totalorder %s164, 0
      %s167 = sadd.s32 %s166, 1
      %s168 = scalar_select %p165, %s166, %s167
      %p171 = pneg %p165
      %p172 = scmp.eq.s32.totalorder %s20, 1
      %p173 = por %p171, %p172
      %p174 = scmp.ne.s32.totalorder %s166, %s169
      %p175 = scmp.eq.s32.totalorder %s20, 0
      %p176 = por %p174, %p175
      %p177 = scmp.ne.s32.totalorder %s166, %s169
      %p178 = scmp.eq.s32.totalorder %s25, 1
      %p179 = por %p177, %p178
      %p180 = scmp.ne.s32.totalorder %s169, %s170
      %p181 = scmp.eq.s32.totalorder %s25, 0
      %p182 = por %p180, %p181
      %p183 = scmp.ne.s32.totalorder %s169, %s170
      %p184 = scmp.eq.s32.totalorder %s26, 1
      %p185 = por %p183, %p184
      %p187 = scmp.ne.s32.totalorder %s170, %s186
      %p188 = scmp.eq.s32.totalorder %s26, 0
      %p189 = por %p187, %p188
      %p190 = scmp.le.s32.totalorder 1, %s20
      %p191 = scmp.lt.s32.totalorder %s20, 3
      %p192 = pnand %p190, %p191
      %p193 = pneg %p192
      // Predicated region
      $region9: #{tpu_custom_call.1} parent=5 // pred_check
        _
      $region10: #{tpu_custom_call.1} parent=5 // pred_check_branch
        %195 = sbr.rel (%p192) target = $region12
      $region11: #{tpu_custom_call.1} parent=5 // pred_region
        %s196 = ssub.s32 %s20, 1
        // Predicated region
        $region13: #{tpu_custom_call.1} parent=11 // pred_check
          %p197 = pneg %p67
        $region14: #{tpu_custom_call.1} parent=11 // pred_check_branch
          %199 = sbr.rel (%p197) target = $region16
        $region15: #{tpu_custom_call.1} parent=11 // pred_region
          %201 = vsyncadd [#allocation6], 0
          %s202 = sshll.u32 %s1, 4
          %s203 = int_to_ptr.hbm [resolvable:$true] %s202
          %s204 = sshll.u32 [#allocation5], 4
          %s205 = int_to_ptr.vmem [resolvable:$true] %s204
          %210 = dma.hbm_to_vmem [thread:$0]  %s203, 2048, %s205, [#allocation6], 128, 128, 8
        $region16: #{tpu_custom_call.1} parent=11 // pred_fallthru
          _
        // Predicated region
        $region17: #{tpu_custom_call.1} parent=11 // pred_check
          %p211 = pneg %p114
        $region18: #{tpu_custom_call.1} parent=11 // pred_check_branch
          %213 = sbr.rel (%p211) target = $region20
        $region19: #{tpu_custom_call.1} parent=11 // pred_region
          %215 = vsyncadd [#allocation6], 0
          %s216 = sshll.u32 %s3, 4
          %s217 = int_to_ptr.hbm [resolvable:$true] %s216
          %s218 = sshll.u32 [#allocation8], 4
          %s219 = int_to_ptr.vmem [resolvable:$true] %s218
          %224 = dma.hbm_to_vmem [thread:$0]  %s217, 4096, %s219, [#allocation6], 128, 128, 8
        $region20: #{tpu_custom_call.1} parent=11 // pred_fallthru
          _
        // Predicated region
        $region21: #{tpu_custom_call.1} parent=11 // pred_check
          %p225 = pneg %p135
        $region22: #{tpu_custom_call.1} parent=11 // pred_check_branch
          %227 = sbr.rel (%p225) target = $region24
        $region23: #{tpu_custom_call.1} parent=11 // pred_region
          %229 = vsyncadd [#allocation10], 0
          %s230 = sshll.u32 %s4, 4
          %s231 = int_to_ptr.hbm [resolvable:$true] %s230
          %s232 = sshll.u32 [#allocation9], 4
          %s233 = int_to_ptr.vmem [resolvable:$true] %s232
          %238 = dma.hbm_to_vmem [thread:$0]  %s231, 14336, %s233, [#allocation10], 128, 128, 8
        $region24: #{tpu_custom_call.1} parent=11 // pred_fallthru
          _
        // Predicated region
        $region25: #{tpu_custom_call.1} parent=11 // pred_check
          %p239 = pneg %p156
        $region26: #{tpu_custom_call.1} parent=11 // pred_check_branch
          %241 = sbr.rel (%p239) target = $region28
        $region27: #{tpu_custom_call.1} parent=11 // pred_region
          %243 = vsyncadd [#allocation10], 0
          %s245 = sshll.u32 %s5, 4
          %s246 = int_to_ptr.hbm [resolvable:$true] %s245
          %s247 = sshll.u32 [#allocation11], 4
          %s248 = int_to_ptr.vmem [resolvable:$true] %s247
          %250 = dma.hbm_to_vmem [thread:$0]  %s246, 128, %s248, [#allocation10]
        $region28: #{tpu_custom_call.1} parent=11 // pred_fallthru
          _
      $region12: #{tpu_custom_call.1} parent=5 // pred_fallthru
        _
      %p251 = scmp.lt.s32.totalorder %s20, 2
      // Predicated region
      $region29: #{tpu_custom_call.1} parent=5 // pred_check
        %p252 = pneg %p251
      $region30: #{tpu_custom_call.1} parent=5 // pred_check_branch
        %254 = sbr.rel (%p252) target = $region32
      $region31: #{tpu_custom_call.1} parent=5 // pred_region
        // Predicated region
        $region33: #{tpu_custom_call.1} parent=31 // pred_check
          %p255 = pneg %p40
        $region34: #{tpu_custom_call.1} parent=31 // pred_check_branch
          %257 = sbr.rel (%p255) target = $region36
        $region35: #{tpu_custom_call.1} parent=31 // pred_region
          %s258 = sand.u32 %s20, 1
          %s259 = scalar_lea.sflag [#allocation3], %s258
          %s260 = sand.u32 %s30, 1
          %s261 = smul.addr %s260, 8
          %s262 = scalar_lea.vmem [#allocation2], %s261
          %264 = vsyncadd %s259, 0
          %s265 = smul.addr %s20, 8
          %s266 = scalar_lea.hbm %s0, %s265
          %s268 = sshll.u32 %s266, 4
          %s269 = int_to_ptr.hbm [resolvable:$true] %s268
          %s270 = sshll.u32 %s262, 4
          %s271 = int_to_ptr.vmem [resolvable:$true] %s270
          %273 = dma.hbm_to_vmem [thread:$0]  %s269, 128, %s271, %s259
        $region36: #{tpu_custom_call.1} parent=31 // pred_fallthru
          _
        // Predicated region
        $region37: #{tpu_custom_call.1} parent=31 // pred_check
          %p274 = pneg %p87
        $region38: #{tpu_custom_call.1} parent=31 // pred_check_branch
          %276 = sbr.rel (%p274) target = $region40
        $region39: #{tpu_custom_call.1} parent=31 // pred_region
          %s277 = sand.u32 %s20, 1
          %s278 = scalar_lea.sflag [#allocation3], %s277
          %s279 = sand.u32 %s77, 1
          %s280 = smul.addr %s279, 16
          %s281 = scalar_lea.vmem [#allocation7], %s280
          %283 = vsyncadd %s278, 0
          %s284 = smul.addr %s20, 2
          %s285 = smul.addr %s284, 8
          %s286 = scalar_lea.hbm %s2, %s285
          %s288 = sshll.u32 %s286, 4
          %s289 = int_to_ptr.hbm [resolvable:$true] %s288
          %s290 = sshll.u32 %s281, 4
          %s291 = int_to_ptr.vmem [resolvable:$true] %s290
          %293 = dma.hbm_to_vmem [thread:$0]  %s289, 256, %s291, %s278
        $region40: #{tpu_custom_call.1} parent=31 // pred_fallthru
          _
      $region32: #{tpu_custom_call.1} parent=5 // pred_fallthru
        _
      %p294 = scmp.le.s32.totalorder 1, %s20
      %p295 = scmp.lt.s32.totalorder %s20, 3
      %p296 = pnand %p294, %p295
      %p297 = pneg %p296
      // Predicated region
      $region41: #{tpu_custom_call.1} parent=5 // pred_check
        _
      $region42: #{tpu_custom_call.1} parent=5 // pred_check_branch
        %299 = sbr.rel (%p296) target = $region44
      $region43: #{tpu_custom_call.1} parent=5 // pred_region
        %s300 = ssub.s32 %s20, 1
        %s301 = sand.u32 %s25, 1
        %s302 = scalar_lea.sflag [#allocation3], %s301
        %s303 = sand.u32 %s33, 1
        %s304 = smul.addr %s303, 8
        %s305 = scalar_lea.vmem [#allocation2], %s304
        // Predicated region
        $region45: #{tpu_custom_call.1} parent=43 // pred_check
          %p306 = pneg %p46
        $region46: #{tpu_custom_call.1} parent=43 // pred_check_branch
          %308 = sbr.rel (%p306) target = $region48
        $region47: #{tpu_custom_call.1} parent=43 // pred_region
          %310 = dma.done %s302, 128
        $region48: #{tpu_custom_call.1} parent=43 // pred_fallthru
          _
        // Predicated region
        $region49: #{tpu_custom_call.1} parent=43 // pred_check
          %p311 = pneg %p67
        $region50: #{tpu_custom_call.1} parent=43 // pred_check_branch
          %313 = sbr.rel (%p311) target = $region52
        $region51: #{tpu_custom_call.1} parent=43 // pred_region
          %315 = dma.done [#allocation6], 2048
        $region52: #{tpu_custom_call.1} parent=43 // pred_fallthru
          _
        %s316 = sand.u32 %s25, 1
        %s317 = scalar_lea.sflag [#allocation3], %s316
        %s318 = sand.u32 %s80, 1
        %s319 = smul.addr %s318, 16
        %s320 = scalar_lea.vmem [#allocation7], %s319
        // Predicated region
        $region53: #{tpu_custom_call.1} parent=43 // pred_check
          %p321 = pneg %p93
        $region54: #{tpu_custom_call.1} parent=43 // pred_check_branch
          %323 = sbr.rel (%p321) target = $region56
        $region55: #{tpu_custom_call.1} parent=43 // pred_region
          %325 = dma.done %s317, 256
        $region56: #{tpu_custom_call.1} parent=43 // pred_fallthru
          _
        // Predicated region
        $region57: #{tpu_custom_call.1} parent=43 // pred_check
          %p326 = pneg %p114
        $region58: #{tpu_custom_call.1} parent=43 // pred_check_branch
          %328 = sbr.rel (%p326) target = $region60
        $region59: #{tpu_custom_call.1} parent=43 // pred_region
          %330 = dma.done [#allocation6], 4096
        $region60: #{tpu_custom_call.1} parent=43 // pred_fallthru
          _
        // Predicated region
        $region61: #{tpu_custom_call.1} parent=43 // pred_check
          %p331 = pneg %p135
        $region62: #{tpu_custom_call.1} parent=43 // pred_check_branch
          %333 = sbr.rel (%p331) target = $region64
        $region63: #{tpu_custom_call.1} parent=43 // pred_region
          %335 = dma.done [#allocation10], 14336
        $region64: #{tpu_custom_call.1} parent=43 // pred_fallthru
          _
        // Predicated region
        $region65: #{tpu_custom_call.1} parent=43 // pred_check
          %p336 = pneg %p156
        $region66: #{tpu_custom_call.1} parent=43 // pred_check_branch
          %338 = sbr.rel (%p336) target = $region68
        $region67: #{tpu_custom_call.1} parent=43 // pred_region
          %340 = dma.done [#allocation10], 128
        $region68: #{tpu_custom_call.1} parent=43 // pred_fallthru
          _
        %s341 = sand.u32 %s25, 1
        %s342 = scalar_lea.sflag [#allocation3], %s341
        %s343 = sand.u32 %s33, 1
        %s344 = smul.addr %s343, 8
        %s345 = scalar_lea.vmem [#allocation2], %s344
        %p346 = pneg %p46
        %p347 = pneg %p43
        %p348 = pneg %p67
        %p349 = pneg %p64
        %s350 = sand.u32 %s25, 1
        %s351 = scalar_lea.sflag [#allocation3], %s350
        %s352 = sand.u32 %s80, 1
        %s353 = smul.addr %s352, 16
        %s354 = scalar_lea.vmem [#allocation7], %s353
        %p355 = pneg %p93
        %p356 = pneg %p90
        %p357 = pneg %p114
        %p358 = pneg %p111
        %p359 = pneg %p135
        %p360 = pneg %p132
        %p361 = pneg %p156
        %p362 = pneg %p153
        %p363 = pneg %p182
        %p364 = pneg %p179
        %s365 = sand.u32 %s169, 1
        %s366 = scalar_lea.sflag [#allocation4], %s365
        %s367 = sand.u32 %s169, 1
        %s368 = smul.addr %s367, 8
        %s369 = scalar_lea.vmem [#allocation12], %s368
        %v370 = vld [vmem:[%s305] sm:$0xff]
        %v371 = vld [vmem:[#allocation5] sm:$0xff]
        %v372 = vld [vmem:[#allocation5 + $0x8] sm:$0xff]
        %v373 = vld [vmem:[#allocation5 + $0x10] sm:$0xff]
        %v374 = vld [vmem:[#allocation5 + $0x18] sm:$0xff]
        %v375 = vld [vmem:[#allocation5 + $0x20] sm:$0xff]
        %v376 = vld [vmem:[#allocation5 + $0x28] sm:$0xff]
        %v377 = vld [vmem:[#allocation5 + $0x30] sm:$0xff]
        %v378 = vld [vmem:[#allocation5 + $0x38] sm:$0xff]
        %v379 = vld [vmem:[#allocation5 + $0x40] sm:$0xff]
        %v380 = vld [vmem:[#allocation5 + $0x48] sm:$0xff]
        %v381 = vld [vmem:[#allocation5 + $0x50] sm:$0xff]
        %v382 = vld [vmem:[#allocation5 + $0x58] sm:$0xff]
        %v383 = vld [vmem:[#allocation5 + $0x60] sm:$0xff]
        %v384 = vld [vmem:[#allocation5 + $0x68] sm:$0xff]
        %v385 = vld [vmem:[#allocation5 + $0x70] sm:$0xff]
        %v386 = vld [vmem:[#allocation5 + $0x78] sm:$0xff]
        %v387 = vand.u32 %v386, 4294901760
        %388 = vmatpush.msra.mxu0 %v387
        %v389 = vand.u32 %v385, 4294901760
        %390 = vmatpush.msra.mxu0 %v389
        %v391 = vand.u32 %v384, 4294901760
        %392 = vmatpush.msra.mxu0 %v391
        %v393 = vand.u32 %v383, 4294901760
        %394 = vmatpush.msra.mxu0 %v393
        %v395 = vand.u32 %v382, 4294901760
        %396 = vmatpush.msra.mxu0 %v395
        %v397 = vand.u32 %v381, 4294901760
        %398 = vmatpush.msra.mxu0 %v397
        %v399 = vand.u32 %v380, 4294901760
        %400 = vmatpush.msra.mxu0 %v399
        %v401 = vand.u32 %v379, 4294901760
        %402 = vmatpush.msra.mxu0 %v401
        %v403 = vand.u32 %v378, 4294901760
        %404 = vmatpush.msra.mxu0 %v403
        %v405 = vand.u32 %v377, 4294901760
        %406 = vmatpush.msra.mxu0 %v405
        %v407 = vand.u32 %v376, 4294901760
        %408 = vmatpush.msra.mxu0 %v407
        %v409 = vand.u32 %v375, 4294901760
        %410 = vmatpush.msra.mxu0 %v409
        %v411 = vand.u32 %v374, 4294901760
        %412 = vmatpush.msra.mxu0 %v411
        %v413 = vand.u32 %v373, 4294901760
        %414 = vmatpush.msra.mxu0 %v413
        %v415 = vand.u32 %v372, 4294901760
        %416 = vmatpush.msra.mxu0 %v415
        %v417 = vand.u32 %v371, 4294901760
        %418 = vmatpush.msra.mxu0 %v417
        %v419 = vand.u32 %v370, 4294901760
        %v420 = vsub.f32 %v370, %v419
        %v421 = vand.u32 %v420, 4294901760
        %v422 = vsub.f32 %v420, %v421
        %v423 = vand.u32 %v422, 4294901760
        %424 = vmatmul.f32.gmra.mxu0 %v423
        %v425 = vpop.f32.mrf.mxu0
        %v426 = vadd.f32 0.0, %v425
        %427 = vdwg.mxu0
        %v428 = vand.u32 %v386, 4294901760
        %v429 = vsub.f32 %v386, %v428
        %v430 = vand.u32 %v429, 4294901760
        %v431 = vsub.f32 %v429, %v430
        %v432 = vand.u32 %v431, 4294901760
        %433 = vmatpush.msra.mxu0 %v432
        %v434 = vand.u32 %v385, 4294901760
        %v435 = vsub.f32 %v385, %v434
        %v436 = vand.u32 %v435, 4294901760
        %v437 = vsub.f32 %v435, %v436
        %v438 = vand.u32 %v437, 4294901760
        %439 = vmatpush.msra.mxu0 %v438
        %v440 = vand.u32 %v384, 4294901760
        %v441 = vsub.f32 %v384, %v440
        %v442 = vand.u32 %v441, 4294901760
        %v443 = vsub.f32 %v441, %v442
        %v444 = vand.u32 %v443, 4294901760
        %445 = vmatpush.msra.mxu0 %v444
        %v446 = vand.u32 %v383, 4294901760
        %v447 = vsub.f32 %v383, %v446
        %v448 = vand.u32 %v447, 4294901760
        %v449 = vsub.f32 %v447, %v448
        %v450 = vand.u32 %v449, 4294901760
        %451 = vmatpush.msra.mxu0 %v450
        %v452 = vand.u32 %v382, 4294901760
        %v453 = vsub.f32 %v382, %v452
        %v454 = vand.u32 %v453, 4294901760
        %v455 = vsub.f32 %v453, %v454
        %v456 = vand.u32 %v455, 4294901760
        %457 = vmatpush.msra.mxu0 %v456
        %v458 = vand.u32 %v381, 4294901760
        %v459 = vsub.f32 %v381, %v458
        %v460 = vand.u32 %v459, 4294901760
        %v461 = vsub.f32 %v459, %v460
        %v462 = vand.u32 %v461, 4294901760
        %463 = vmatpush.msra.mxu0 %v462
        %v464 = vand.u32 %v380, 4294901760
        %v465 = vsub.f32 %v380, %v464
        %v466 = vand.u32 %v465, 4294901760
        %v467 = vsub.f32 %v465, %v466
        %v468 = vand.u32 %v467, 4294901760
        %469 = vmatpush.msra.mxu0 %v468
        %v470 = vand.u32 %v379, 4294901760
        %v471 = vsub.f32 %v379, %v470
        %v472 = vand.u32 %v471, 4294901760
        %v473 = vsub.f32 %v471, %v472
        %v474 = vand.u32 %v473, 4294901760
        %475 = vmatpush.msra.mxu0 %v474
        %v476 = vand.u32 %v378, 4294901760
        %v477 = vsub.f32 %v378, %v476
        %v478 = vand.u32 %v477, 4294901760
        %v479 = vsub.f32 %v477, %v478
        %v480 = vand.u32 %v479, 4294901760
        %481 = vmatpush.msra.mxu0 %v480
        %v482 = vand.u32 %v377, 4294901760
        %v483 = vsub.f32 %v377, %v482
        %v484 = vand.u32 %v483, 4294901760
        %v485 = vsub.f32 %v483, %v484
        %v486 = vand.u32 %v485, 4294901760
        %487 = vmatpush.msra.mxu0 %v486
        %v488 = vand.u32 %v376, 4294901760
        %v489 = vsub.f32 %v376, %v488
        %v490 = vand.u32 %v489, 4294901760
        %v491 = vsub.f32 %v489, %v490
        %v492 = vand.u32 %v491, 4294901760
        %493 = vmatpush.msra.mxu0 %v492
        %v494 = vand.u32 %v375, 4294901760
        %v495 = vsub.f32 %v375, %v494
        %v496 = vand.u32 %v495, 4294901760
        %v497 = vsub.f32 %v495, %v496
        %v498 = vand.u32 %v497, 4294901760
        %499 = vmatpush.msra.mxu0 %v498
        %v500 = vand.u32 %v374, 4294901760
        %v501 = vsub.f32 %v374, %v500
        %v502 = vand.u32 %v501, 4294901760
        %v503 = vsub.f32 %v501, %v502
        %v504 = vand.u32 %v503, 4294901760
        %505 = vmatpush.msra.mxu0 %v504
        %v506 = vand.u32 %v373, 4294901760
        %v507 = vsub.f32 %v373, %v506
        %v508 = vand.u32 %v507, 4294901760
        %v509 = vsub.f32 %v507, %v508
        %v510 = vand.u32 %v509, 4294901760
        %511 = vmatpush.msra.mxu0 %v510
        %v512 = vand.u32 %v372, 4294901760
        %v513 = vsub.f32 %v372, %v512
        %v514 = vand.u32 %v513, 4294901760
        %v515 = vsub.f32 %v513, %v514
        %v516 = vand.u32 %v515, 4294901760
        %517 = vmatpush.msra.mxu0 %v516
        %v518 = vand.u32 %v371, 4294901760
        %v519 = vsub.f32 %v371, %v518
        %v520 = vand.u32 %v519, 4294901760
        %v521 = vsub.f32 %v519, %v520
        %v522 = vand.u32 %v521, 4294901760
        %523 = vmatpush.msra.mxu0 %v522
        %v524 = vand.u32 %v370, 4294901760
        %525 = vmatmul.f32.gmra.mxu0 %v524
        %v526 = vpop.f32.mrf.mxu0
        %v527 = vadd.f32 %v426, %v526
        %528 = vdwg.mxu0
        %v529 = vand.u32 %v386, 4294901760
        %v530 = vsub.f32 %v386, %v529
        %531 = vmatpush.msra.mxu0 %v530
        %v532 = vand.u32 %v385, 4294901760
        %v533 = vsub.f32 %v385, %v532
        %534 = vmatpush.msra.mxu0 %v533
        %v535 = vand.u32 %v384, 4294901760
        %v536 = vsub.f32 %v384, %v535
        %537 = vmatpush.msra.mxu0 %v536
        %v538 = vand.u32 %v383, 4294901760
        %v539 = vsub.f32 %v383, %v538
        %540 = vmatpush.msra.mxu0 %v539
        %v541 = vand.u32 %v382, 4294901760
        %v542 = vsub.f32 %v382, %v541
        %543 = vmatpush.msra.mxu0 %v542
        %v544 = vand.u32 %v381, 4294901760
        %v545 = vsub.f32 %v381, %v544
        %546 = vmatpush.msra.mxu0 %v545
        %v547 = vand.u32 %v380, 4294901760
        %v548 = vsub.f32 %v380, %v547
        %549 = vmatpush.msra.mxu0 %v548
        %v550 = vand.u32 %v379, 4294901760
        %v551 = vsub.f32 %v379, %v550
        %552 = vmatpush.msra.mxu0 %v551
        %v553 = vand.u32 %v378, 4294901760
        %v554 = vsub.f32 %v378, %v553
        %555 = vmatpush.msra.mxu0 %v554
        %v556 = vand.u32 %v377, 4294901760
        %v557 = vsub.f32 %v377, %v556
        %558 = vmatpush.msra.mxu0 %v557
        %v559 = vand.u32 %v376, 4294901760
        %v560 = vsub.f32 %v376, %v559
        %561 = vmatpush.msra.mxu0 %v560
        %v562 = vand.u32 %v375, 4294901760
        %v563 = vsub.f32 %v375, %v562
        %564 = vmatpush.msra.mxu0 %v563
        %v565 = vand.u32 %v374, 4294901760
        %v566 = vsub.f32 %v374, %v565
        %567 = vmatpush.msra.mxu0 %v566
        %v568 = vand.u32 %v373, 4294901760
        %v569 = vsub.f32 %v373, %v568
        %570 = vmatpush.msra.mxu0 %v569
        %v571 = vand.u32 %v372, 4294901760
        %v572 = vsub.f32 %v372, %v571
        %573 = vmatpush.msra.mxu0 %v572
        %v574 = vand.u32 %v371, 4294901760
        %v575 = vsub.f32 %v371, %v574
        %576 = vmatpush.msra.mxu0 %v575
        %v577 = vand.u32 %v370, 4294901760
        %v578 = vsub.f32 %v370, %v577
        %579 = vmatmul.f32.gmra.mxu0 %v578
        %v580 = vpop.f32.mrf.mxu0
        %v581 = vadd.f32 %v527, %v580
        %582 = vdwg.mxu0
        %v583 = vand.u32 %v386, 4294901760
        %584 = vmatpush.msra.mxu0 %v583
        %v585 = vand.u32 %v385, 4294901760
        %586 = vmatpush.msra.mxu0 %v585
        %v587 = vand.u32 %v384, 4294901760
        %588 = vmatpush.msra.mxu0 %v587
        %v589 = vand.u32 %v383, 4294901760
        %590 = vmatpush.msra.mxu0 %v589
        %v591 = vand.u32 %v382, 4294901760
        %592 = vmatpush.msra.mxu0 %v591
        %v593 = vand.u32 %v381, 4294901760
        %594 = vmatpush.msra.mxu0 %v593
        %v595 = vand.u32 %v380, 4294901760
        %596 = vmatpush.msra.mxu0 %v595
        %v597 = vand.u32 %v379, 4294901760
        %598 = vmatpush.msra.mxu0 %v597
        %v599 = vand.u32 %v378, 4294901760
        %600 = vmatpush.msra.mxu0 %v599
        %v601 = vand.u32 %v377, 4294901760
        %602 = vmatpush.msra.mxu0 %v601
        %v603 = vand.u32 %v376, 4294901760
        %604 = vmatpush.msra.mxu0 %v603
        %v605 = vand.u32 %v375, 4294901760
        %606 = vmatpush.msra.mxu0 %v605
        %v607 = vand.u32 %v374, 4294901760
        %608 = vmatpush.msra.mxu0 %v607
        %v609 = vand.u32 %v373, 4294901760
        %610 = vmatpush.msra.mxu0 %v609
        %v611 = vand.u32 %v372, 4294901760
        %612 = vmatpush.msra.mxu0 %v611
        %v613 = vand.u32 %v371, 4294901760
        %614 = vmatpush.msra.mxu0 %v613
        %v615 = vand.u32 %v370, 4294901760
        %v616 = vsub.f32 %v370, %v615
        %v617 = vand.u32 %v616, 4294901760
        %618 = vmatmul.f32.gmra.mxu0 %v617
        %v619 = vpop.f32.mrf.mxu0
        %v620 = vadd.f32 %v581, %v619
        %621 = vdwg.mxu0
        %v622 = vand.u32 %v386, 4294901760
        %v623 = vsub.f32 %v386, %v622
        %v624 = vand.u32 %v623, 4294901760
        %625 = vmatpush.msra.mxu0 %v624
        %v626 = vand.u32 %v385, 4294901760
        %v627 = vsub.f32 %v385, %v626
        %v628 = vand.u32 %v627, 4294901760
        %629 = vmatpush.msra.mxu0 %v628
        %v630 = vand.u32 %v384, 4294901760
        %v631 = vsub.f32 %v384, %v630
        %v632 = vand.u32 %v631, 4294901760
        %633 = vmatpush.msra.mxu0 %v632
        %v634 = vand.u32 %v383, 4294901760
        %v635 = vsub.f32 %v383, %v634
        %v636 = vand.u32 %v635, 4294901760
        %637 = vmatpush.msra.mxu0 %v636
        %v638 = vand.u32 %v382, 4294901760
        %v639 = vsub.f32 %v382, %v638
        %v640 = vand.u32 %v639, 4294901760
        %641 = vmatpush.msra.mxu0 %v640
        %v642 = vand.u32 %v381, 4294901760
        %v643 = vsub.f32 %v381, %v642
        %v644 = vand.u32 %v643, 4294901760
        %645 = vmatpush.msra.mxu0 %v644
        %v646 = vand.u32 %v380, 4294901760
        %v647 = vsub.f32 %v380, %v646
        %v648 = vand.u32 %v647, 4294901760
        %649 = vmatpush.msra.mxu0 %v648
        %v650 = vand.u32 %v379, 4294901760
        %v651 = vsub.f32 %v379, %v650
        %v652 = vand.u32 %v651, 4294901760
        %653 = vmatpush.msra.mxu0 %v652
        %v654 = vand.u32 %v378, 4294901760
        %v655 = vsub.f32 %v378, %v654
        %v656 = vand.u32 %v655, 4294901760
        %657 = vmatpush.msra.mxu0 %v656
        %v658 = vand.u32 %v377, 4294901760
        %v659 = vsub.f32 %v377, %v658
        %v660 = vand.u32 %v659, 4294901760
        %661 = vmatpush.msra.mxu0 %v660
        %v662 = vand.u32 %v376, 4294901760
        %v663 = vsub.f32 %v376, %v662
        %v664 = vand.u32 %v663, 4294901760
        %665 = vmatpush.msra.mxu0 %v664
        %v666 = vand.u32 %v375, 4294901760
        %v667 = vsub.f32 %v375, %v666
        %v668 = vand.u32 %v667, 4294901760
        %669 = vmatpush.msra.mxu0 %v668
        %v670 = vand.u32 %v374, 4294901760
        %v671 = vsub.f32 %v374, %v670
        %v672 = vand.u32 %v671, 4294901760
        %673 = vmatpush.msra.mxu0 %v672
        %v674 = vand.u32 %v373, 4294901760
        %v675 = vsub.f32 %v373, %v674
        %v676 = vand.u32 %v675, 4294901760
        %677 = vmatpush.msra.mxu0 %v676
        %v678 = vand.u32 %v372, 4294901760
        %v679 = vsub.f32 %v372, %v678
        %v680 = vand.u32 %v679, 4294901760
        %681 = vmatpush.msra.mxu0 %v680
        %v682 = vand.u32 %v371, 4294901760
        %v683 = vsub.f32 %v371, %v682
        %v684 = vand.u32 %v683, 4294901760
        %685 = vmatpush.msra.mxu0 %v684
        %v686 = vand.u32 %v370, 4294901760
        %687 = vmatmul.f32.gmra.mxu0 %v686
        %v688 = vpop.f32.mrf.mxu0
        %v689 = vadd.f32 %v620, %v688
        %690 = vdwg.mxu0
        %v691 = vand.u32 %v386, 4294901760
        %692 = vmatpush.msra.mxu0 %v691
        %v693 = vand.u32 %v385, 4294901760
        %694 = vmatpush.msra.mxu0 %v693
        %v695 = vand.u32 %v384, 4294901760
        %696 = vmatpush.msra.mxu0 %v695
        %v697 = vand.u32 %v383, 4294901760
        %698 = vmatpush.msra.mxu0 %v697
        %v699 = vand.u32 %v382, 4294901760
        %700 = vmatpush.msra.mxu0 %v699
        %v701 = vand.u32 %v381, 4294901760
        %702 = vmatpush.msra.mxu0 %v701
        %v703 = vand.u32 %v380, 4294901760
        %704 = vmatpush.msra.mxu0 %v703
        %v705 = vand.u32 %v379, 4294901760
        %706 = vmatpush.msra.mxu0 %v705
        %v707 = vand.u32 %v378, 4294901760
        %708 = vmatpush.msra.mxu0 %v707
        %v709 = vand.u32 %v377, 4294901760
        %710 = vmatpush.msra.mxu0 %v709
        %v711 = vand.u32 %v376, 4294901760
        %712 = vmatpush.msra.mxu0 %v711
        %v713 = vand.u32 %v375, 4294901760
        %714 = vmatpush.msra.mxu0 %v713
        %v715 = vand.u32 %v374, 4294901760
        %716 = vmatpush.msra.mxu0 %v715
        %v717 = vand.u32 %v373, 4294901760
        %718 = vmatpush.msra.mxu0 %v717
        %v719 = vand.u32 %v372, 4294901760
        %720 = vmatpush.msra.mxu0 %v719
        %v721 = vand.u32 %v371, 4294901760
        %722 = vmatpush.msra.mxu0 %v721
        %v723 = vand.u32 %v370, 4294901760
        %724 = vmatmul.f32.gmra.mxu0 %v723
        %v725 = vpop.f32.mrf.mxu0
        %v726 = vadd.f32 %v689, %v725
        %727 = vdwg.mxu0
        %v728 = vld [vmem:[%s320] sm:$0xff]
        %v729 = vld [vmem:[%s320 + $0x8] sm:$0xff]
        %v730 = vld [vmem:[#allocation8] sm:$0xff]
        %v731 = vld [vmem:[#allocation8 + $0x8] sm:$0xff]
        %v732 = vld [vmem:[#allocation8 + $0x10] sm:$0xff]
        %v733 = vld [vmem:[#allocation8 + $0x18] sm:$0xff]
        %v734 = vld [vmem:[#allocation8 + $0x20] sm:$0xff]
        %v735 = vld [vmem:[#allocation8 + $0x28] sm:$0xff]
        %v736 = vld [vmem:[#allocation8 + $0x30] sm:$0xff]
        %v737 = vld [vmem:[#allocation8 + $0x38] sm:$0xff]
        %v738 = vld [vmem:[#allocation8 + $0x40] sm:$0xff]
        %v739 = vld [vmem:[#allocation8 + $0x48] sm:$0xff]
        %v740 = vld [vmem:[#allocation8 + $0x50] sm:$0xff]
        %v741 = vld [vmem:[#allocation8 + $0x58] sm:$0xff]
        %v742 = vld [vmem:[#allocation8 + $0x60] sm:$0xff]
        %v743 = vld [vmem:[#allocation8 + $0x68] sm:$0xff]
        %v744 = vld [vmem:[#allocation8 + $0x70] sm:$0xff]
        %v745 = vld [vmem:[#allocation8 + $0x78] sm:$0xff]
        %v746 = vld [vmem:[#allocation8 + $0x80] sm:$0xff]
        %v747 = vld [vmem:[#allocation8 + $0x88] sm:$0xff]
        %v748 = vld [vmem:[#allocation8 + $0x90] sm:$0xff]
        %v749 = vld [vmem:[#allocation8 + $0x98] sm:$0xff]
        %v750 = vld [vmem:[#allocation8 + $0xa0] sm:$0xff]
        %v751 = vld [vmem:[#allocation8 + $0xa8] sm:$0xff]
        %v752 = vld [vmem:[#allocation8 + $0xb0] sm:$0xff]
        %v753 = vld [vmem:[#allocation8 + $0xb8] sm:$0xff]
        %v754 = vld [vmem:[#allocation8 + $0xc0] sm:$0xff]
        %v755 = vld [vmem:[#allocation8 + $0xc8] sm:$0xff]
        %v756 = vld [vmem:[#allocation8 + $0xd0] sm:$0xff]
        %v757 = vld [vmem:[#allocation8 + $0xd8] sm:$0xff]
        %v758 = vld [vmem:[#allocation8 + $0xe0] sm:$0xff]
        %v759 = vld [vmem:[#allocation8 + $0xe8] sm:$0xff]
        %v760 = vld [vmem:[#allocation8 + $0xf0] sm:$0xff]
        %v761 = vld [vmem:[#allocation8 + $0xf8] sm:$0xff]
        %v762 = vand.u32 %v745, 4294901760
        %763 = vmatpush.msra.mxu0 %v762
        %v764 = vand.u32 %v744, 4294901760
        %765 = vmatpush.msra.mxu0 %v764
        %v766 = vand.u32 %v743, 4294901760
        %767 = vmatpush.msra.mxu0 %v766
        %v768 = vand.u32 %v742, 4294901760
        %769 = vmatpush.msra.mxu0 %v768
        %v770 = vand.u32 %v741, 4294901760
        %771 = vmatpush.msra.mxu0 %v770
        %v772 = vand.u32 %v740, 4294901760
        %773 = vmatpush.msra.mxu0 %v772
        %v774 = vand.u32 %v739, 4294901760
        %775 = vmatpush.msra.mxu0 %v774
        %v776 = vand.u32 %v738, 4294901760
        %777 = vmatpush.msra.mxu0 %v776
        %v778 = vand.u32 %v737, 4294901760
        %779 = vmatpush.msra.mxu0 %v778
        %v780 = vand.u32 %v736, 4294901760
        %781 = vmatpush.msra.mxu0 %v780
        %v782 = vand.u32 %v735, 4294901760
        %783 = vmatpush.msra.mxu0 %v782
        %v784 = vand.u32 %v734, 4294901760
        %785 = vmatpush.msra.mxu0 %v784
        %v786 = vand.u32 %v733, 4294901760
        %787 = vmatpush.msra.mxu0 %v786
        %v788 = vand.u32 %v732, 4294901760
        %789 = vmatpush.msra.mxu0 %v788
        %v790 = vand.u32 %v731, 4294901760
        %791 = vmatpush.msra.mxu0 %v790
        %v792 = vand.u32 %v730, 4294901760
        %793 = vmatpush.msra.mxu0 %v792
        %v794 = vand.u32 %v728, 4294901760
        %v795 = vsub.f32 %v728, %v794
        %v796 = vand.u32 %v795, 4294901760
        %v797 = vsub.f32 %v795, %v796
        %v798 = vand.u32 %v797, 4294901760
        %799 = vmatmul.f32.gmra.mxu0 %v798
        %v800 = vpop.f32.mrf.mxu0
        %v801 = vadd.f32 0.0, %v800
        %802 = vdwg.mxu0
        %v803 = vand.u32 %v745, 4294901760
        %v804 = vsub.f32 %v745, %v803
        %v805 = vand.u32 %v804, 4294901760
        %v806 = vsub.f32 %v804, %v805
        %v807 = vand.u32 %v806, 4294901760
        %808 = vmatpush.msra.mxu0 %v807
        %v809 = vand.u32 %v744, 4294901760
        %v810 = vsub.f32 %v744, %v809
        %v811 = vand.u32 %v810, 4294901760
        %v812 = vsub.f32 %v810, %v811
        %v813 = vand.u32 %v812, 4294901760
        %814 = vmatpush.msra.mxu0 %v813
        %v815 = vand.u32 %v743, 4294901760
        %v816 = vsub.f32 %v743, %v815
        %v817 = vand.u32 %v816, 4294901760
        %v818 = vsub.f32 %v816, %v817
        %v819 = vand.u32 %v818, 4294901760
        %820 = vmatpush.msra.mxu0 %v819
        %v821 = vand.u32 %v742, 4294901760
        %v822 = vsub.f32 %v742, %v821
        %v823 = vand.u32 %v822, 4294901760
        %v824 = vsub.f32 %v822, %v823
        %v825 = vand.u32 %v824, 4294901760
        %826 = vmatpush.msra.mxu0 %v825
        %v827 = vand.u32 %v741, 4294901760
        %v828 = vsub.f32 %v741, %v827
        %v829 = vand.u32 %v828, 4294901760
        %v830 = vsub.f32 %v828, %v829
        %v831 = vand.u32 %v830, 4294901760
        %832 = vmatpush.msra.mxu0 %v831
        %v833 = vand.u32 %v740, 4294901760
        %v834 = vsub.f32 %v740, %v833
        %v835 = vand.u32 %v834, 4294901760
        %v836 = vsub.f32 %v834, %v835
        %v837 = vand.u32 %v836, 4294901760
        %838 = vmatpush.msra.mxu0 %v837
        %v839 = vand.u32 %v739, 4294901760
        %v840 = vsub.f32 %v739, %v839
        %v841 = vand.u32 %v840, 4294901760
        %v842 = vsub.f32 %v840, %v841
        %v843 = vand.u32 %v842, 4294901760
        %844 = vmatpush.msra.mxu0 %v843
        %v845 = vand.u32 %v738, 4294901760
        %v846 = vsub.f32 %v738, %v845
        %v847 = vand.u32 %v846, 4294901760
        %v848 = vsub.f32 %v846, %v847
        %v849 = vand.u32 %v848, 4294901760
        %850 = vmatpush.msra.mxu0 %v849
        %v851 = vand.u32 %v737, 4294901760
        %v852 = vsub.f32 %v737, %v851
        %v853 = vand.u32 %v852, 4294901760
        %v854 = vsub.f32 %v852, %v853
        %v855 = vand.u32 %v854, 4294901760
        %856 = vmatpush.msra.mxu0 %v855
        %v857 = vand.u32 %v736, 4294901760
        %v858 = vsub.f32 %v736, %v857
        %v859 = vand.u32 %v858, 4294901760
        %v860 = vsub.f32 %v858, %v859
        %v861 = vand.u32 %v860, 4294901760
        %862 = vmatpush.msra.mxu0 %v861
        %v863 = vand.u32 %v735, 4294901760
        %v864 = vsub.f32 %v735, %v863
        %v865 = vand.u32 %v864, 4294901760
        %v866 = vsub.f32 %v864, %v865
        %v867 = vand.u32 %v866, 4294901760
        %868 = vmatpush.msra.mxu0 %v867
        %v869 = vand.u32 %v734, 4294901760
        %v870 = vsub.f32 %v734, %v869
        %v871 = vand.u32 %v870, 4294901760
        %v872 = vsub.f32 %v870, %v871
        %v873 = vand.u32 %v872, 4294901760
        %874 = vmatpush.msra.mxu0 %v873
        %v875 = vand.u32 %v733, 4294901760
        %v876 = vsub.f32 %v733, %v875
        %v877 = vand.u32 %v876, 4294901760
        %v878 = vsub.f32 %v876, %v877
        %v879 = vand.u32 %v878, 4294901760
        %880 = vmatpush.msra.mxu0 %v879
        %v881 = vand.u32 %v732, 4294901760
        %v882 = vsub.f32 %v732, %v881
        %v883 = vand.u32 %v882, 4294901760
        %v884 = vsub.f32 %v882, %v883
        %v885 = vand.u32 %v884, 4294901760
        %886 = vmatpush.msra.mxu0 %v885
        %v887 = vand.u32 %v731, 4294901760
        %v888 = vsub.f32 %v731, %v887
        %v889 = vand.u32 %v888, 4294901760
        %v890 = vsub.f32 %v888, %v889
        %v891 = vand.u32 %v890, 4294901760
        %892 = vmatpush.msra.mxu0 %v891
        %v893 = vand.u32 %v730, 4294901760
        %v894 = vsub.f32 %v730, %v893
        %v895 = vand.u32 %v894, 4294901760
        %v896 = vsub.f32 %v894, %v895
        %v897 = vand.u32 %v896, 4294901760
        %898 = vmatpush.msra.mxu0 %v897
        %v899 = vand.u32 %v728, 4294901760
        %900 = vmatmul.f32.gmra.mxu0 %v899
        %v901 = vpop.f32.mrf.mxu0
        %v902 = vadd.f32 %v801, %v901
        %903 = vdwg.mxu0
        %v904 = vand.u32 %v745, 4294901760
        %v905 = vsub.f32 %v745, %v904
        %906 = vmatpush.msra.mxu0 %v905
        %v907 = vand.u32 %v744, 4294901760
        %v908 = vsub.f32 %v744, %v907
        %909 = vmatpush.msra.mxu0 %v908
        %v910 = vand.u32 %v743, 4294901760
        %v911 = vsub.f32 %v743, %v910
        %912 = vmatpush.msra.mxu0 %v911
        %v913 = vand.u32 %v742, 4294901760
        %v914 = vsub.f32 %v742, %v913
        %915 = vmatpush.msra.mxu0 %v914
        %v916 = vand.u32 %v741, 4294901760
        %v917 = vsub.f32 %v741, %v916
        %918 = vmatpush.msra.mxu0 %v917
        %v919 = vand.u32 %v740, 4294901760
        %v920 = vsub.f32 %v740, %v919
        %921 = vmatpush.msra.mxu0 %v920
        %v922 = vand.u32 %v739, 4294901760
        %v923 = vsub.f32 %v739, %v922
        %924 = vmatpush.msra.mxu0 %v923
        %v925 = vand.u32 %v738, 4294901760
        %v926 = vsub.f32 %v738, %v925
        %927 = vmatpush.msra.mxu0 %v926
        %v928 = vand.u32 %v737, 4294901760
        %v929 = vsub.f32 %v737, %v928
        %930 = vmatpush.msra.mxu0 %v929
        %v931 = vand.u32 %v736, 4294901760
        %v932 = vsub.f32 %v736, %v931
        %933 = vmatpush.msra.mxu0 %v932
        %v934 = vand.u32 %v735, 4294901760
        %v935 = vsub.f32 %v735, %v934
        %936 = vmatpush.msra.mxu0 %v935
        %v937 = vand.u32 %v734, 4294901760
        %v938 = vsub.f32 %v734, %v937
        %939 = vmatpush.msra.mxu0 %v938
        %v940 = vand.u32 %v733, 4294901760
        %v941 = vsub.f32 %v733, %v940
        %942 = vmatpush.msra.mxu0 %v941
        %v943 = vand.u32 %v732, 4294901760
        %v944 = vsub.f32 %v732, %v943
        %945 = vmatpush.msra.mxu0 %v944
        %v946 = vand.u32 %v731, 4294901760
        %v947 = vsub.f32 %v731, %v946
        %948 = vmatpush.msra.mxu0 %v947
        %v949 = vand.u32 %v730, 4294901760
        %v950 = vsub.f32 %v730, %v949
        %951 = vmatpush.msra.mxu0 %v950
        %v952 = vand.u32 %v728, 4294901760
        %v953 = vsub.f32 %v728, %v952
        %954 = vmatmul.f32.gmra.mxu0 %v953
        %v955 = vpop.f32.mrf.mxu0
        %v956 = vadd.f32 %v902, %v955
        %957 = vdwg.mxu0
        %v958 = vand.u32 %v745, 4294901760
        %959 = vmatpush.msra.mxu0 %v958
        %v960 = vand.u32 %v744, 4294901760
        %961 = vmatpush.msra.mxu0 %v960
        %v962 = vand.u32 %v743, 4294901760
        %963 = vmatpush.msra.mxu0 %v962
        %v964 = vand.u32 %v742, 4294901760
        %965 = vmatpush.msra.mxu0 %v964
        %v966 = vand.u32 %v741, 4294901760
        %967 = vmatpush.msra.mxu0 %v966
        %v968 = vand.u32 %v740, 4294901760
        %969 = vmatpush.msra.mxu0 %v968
        %v970 = vand.u32 %v739, 4294901760
        %971 = vmatpush.msra.mxu0 %v970
        %v972 = vand.u32 %v738, 4294901760
        %973 = vmatpush.msra.mxu0 %v972
        %v974 = vand.u32 %v737, 4294901760
        %975 = vmatpush.msra.mxu0 %v974
        %v976 = vand.u32 %v736, 4294901760
        %977 = vmatpush.msra.mxu0 %v976
        %v978 = vand.u32 %v735, 4294901760
        %979 = vmatpush.msra.mxu0 %v978
        %v980 = vand.u32 %v734, 4294901760
        %981 = vmatpush.msra.mxu0 %v980
        %v982 = vand.u32 %v733, 4294901760
        %983 = vmatpush.msra.mxu0 %v982
        %v984 = vand.u32 %v732, 4294901760
        %985 = vmatpush.msra.mxu0 %v984
        %v986 = vand.u32 %v731, 4294901760
        %987 = vmatpush.msra.mxu0 %v986
        %v988 = vand.u32 %v730, 4294901760
        %989 = vmatpush.msra.mxu0 %v988
        %v990 = vand.u32 %v728, 4294901760
        %v991 = vsub.f32 %v728, %v990
        %v992 = vand.u32 %v991, 4294901760
        %993 = vmatmul.f32.gmra.mxu0 %v992
        %v994 = vpop.f32.mrf.mxu0
        %v995 = vadd.f32 %v956, %v994
        %996 = vdwg.mxu0
        %v997 = vand.u32 %v745, 4294901760
        %v998 = vsub.f32 %v745, %v997
        %v999 = vand.u32 %v998, 4294901760
        %1000 = vmatpush.msra.mxu0 %v999
        %v1001 = vand.u32 %v744, 4294901760
        %v1002 = vsub.f32 %v744, %v1001
        %v1003 = vand.u32 %v1002, 4294901760
        %1004 = vmatpush.msra.mxu0 %v1003
        %v1005 = vand.u32 %v743, 4294901760
        %v1006 = vsub.f32 %v743, %v1005
        %v1007 = vand.u32 %v1006, 4294901760
        %1008 = vmatpush.msra.mxu0 %v1007
        %v1009 = vand.u32 %v742, 4294901760
        %v1010 = vsub.f32 %v742, %v1009
        %v1011 = vand.u32 %v1010, 4294901760
        %1012 = vmatpush.msra.mxu0 %v1011
        %v1013 = vand.u32 %v741, 4294901760
        %v1014 = vsub.f32 %v741, %v1013
        %v1015 = vand.u32 %v1014, 4294901760
        %1016 = vmatpush.msra.mxu0 %v1015
        %v1017 = vand.u32 %v740, 4294901760
        %v1018 = vsub.f32 %v740, %v1017
        %v1019 = vand.u32 %v1018, 4294901760
        %1020 = vmatpush.msra.mxu0 %v1019
        %v1021 = vand.u32 %v739, 4294901760
        %v1022 = vsub.f32 %v739, %v1021
        %v1023 = vand.u32 %v1022, 4294901760
        %1024 = vmatpush.msra.mxu0 %v1023
        %v1025 = vand.u32 %v738, 4294901760
        %v1026 = vsub.f32 %v738, %v1025
        %v1027 = vand.u32 %v1026, 4294901760
        %1028 = vmatpush.msra.mxu0 %v1027
        %v1029 = vand.u32 %v737, 4294901760
        %v1030 = vsub.f32 %v737, %v1029
        %v1031 = vand.u32 %v1030, 4294901760
        %1032 = vmatpush.msra.mxu0 %v1031
        %v1033 = vand.u32 %v736, 4294901760
        %v1034 = vsub.f32 %v736, %v1033
        %v1035 = vand.u32 %v1034, 4294901760
        %1036 = vmatpush.msra.mxu0 %v1035
        %v1037 = vand.u32 %v735, 4294901760
        %v1038 = vsub.f32 %v735, %v1037
        %v1039 = vand.u32 %v1038, 4294901760
        %1040 = vmatpush.msra.mxu0 %v1039
        %v1041 = vand.u32 %v734, 4294901760
        %v1042 = vsub.f32 %v734, %v1041
        %v1043 = vand.u32 %v1042, 4294901760
        %1044 = vmatpush.msra.mxu0 %v1043
        %v1045 = vand.u32 %v733, 4294901760
        %v1046 = vsub.f32 %v733, %v1045
        %v1047 = vand.u32 %v1046, 4294901760
        %1048 = vmatpush.msra.mxu0 %v1047
        %v1049 = vand.u32 %v732, 4294901760
        %v1050 = vsub.f32 %v732, %v1049
        %v1051 = vand.u32 %v1050, 4294901760
        %1052 = vmatpush.msra.mxu0 %v1051
        %v1053 = vand.u32 %v731, 4294901760
        %v1054 = vsub.f32 %v731, %v1053
        %v1055 = vand.u32 %v1054, 4294901760
        %1056 = vmatpush.msra.mxu0 %v1055
        %v1057 = vand.u32 %v730, 4294901760
        %v1058 = vsub.f32 %v730, %v1057
        %v1059 = vand.u32 %v1058, 4294901760
        %1060 = vmatpush.msra.mxu0 %v1059
        %v1061 = vand.u32 %v728, 4294901760
        %1062 = vmatmul.f32.gmra.mxu0 %v1061
        %v1063 = vpop.f32.mrf.mxu0
        %v1064 = vadd.f32 %v995, %v1063
        %1065 = vdwg.mxu0
        %v1066 = vand.u32 %v745, 4294901760
        %1067 = vmatpush.msra.mxu0 %v1066
        %v1068 = vand.u32 %v744, 4294901760
        %1069 = vmatpush.msra.mxu0 %v1068
        %v1070 = vand.u32 %v743, 4294901760
        %1071 = vmatpush.msra.mxu0 %v1070
        %v1072 = vand.u32 %v742, 4294901760
        %1073 = vmatpush.msra.mxu0 %v1072
        %v1074 = vand.u32 %v741, 4294901760
        %1075 = vmatpush.msra.mxu0 %v1074
        %v1076 = vand.u32 %v740, 4294901760
        %1077 = vmatpush.msra.mxu0 %v1076
        %v1078 = vand.u32 %v739, 4294901760
        %1079 = vmatpush.msra.mxu0 %v1078
        %v1080 = vand.u32 %v738, 4294901760
        %1081 = vmatpush.msra.mxu0 %v1080
        %v1082 = vand.u32 %v737, 4294901760
        %1083 = vmatpush.msra.mxu0 %v1082
        %v1084 = vand.u32 %v736, 4294901760
        %1085 = vmatpush.msra.mxu0 %v1084
        %v1086 = vand.u32 %v735, 4294901760
        %1087 = vmatpush.msra.mxu0 %v1086
        %v1088 = vand.u32 %v734, 4294901760
        %1089 = vmatpush.msra.mxu0 %v1088
        %v1090 = vand.u32 %v733, 4294901760
        %1091 = vmatpush.msra.mxu0 %v1090
        %v1092 = vand.u32 %v732, 4294901760
        %1093 = vmatpush.msra.mxu0 %v1092
        %v1094 = vand.u32 %v731, 4294901760
        %1095 = vmatpush.msra.mxu0 %v1094
        %v1096 = vand.u32 %v730, 4294901760
        %1097 = vmatpush.msra.mxu0 %v1096
        %v1098 = vand.u32 %v728, 4294901760
        %1099 = vmatmul.f32.gmra.mxu0 %v1098
        %v1100 = vpop.f32.mrf.mxu0
        %v1101 = vadd.f32 %v1064, %v1100
        %1102 = vdwg.mxu0
        %v1103 = vand.u32 %v761, 4294901760
        %1104 = vmatpush.msra.mxu0 %v1103
        %v1105 = vand.u32 %v760, 4294901760
        %1106 = vmatpush.msra.mxu0 %v1105
        %v1107 = vand.u32 %v759, 4294901760
        %1108 = vmatpush.msra.mxu0 %v1107
        %v1109 = vand.u32 %v758, 4294901760
        %1110 = vmatpush.msra.mxu0 %v1109
        %v1111 = vand.u32 %v757, 4294901760
        %1112 = vmatpush.msra.mxu0 %v1111
        %v1113 = vand.u32 %v756, 4294901760
        %1114 = vmatpush.msra.mxu0 %v1113
        %v1115 = vand.u32 %v755, 4294901760
        %1116 = vmatpush.msra.mxu0 %v1115
        %v1117 = vand.u32 %v754, 4294901760
        %1118 = vmatpush.msra.mxu0 %v1117
        %v1119 = vand.u32 %v753, 4294901760
        %1120 = vmatpush.msra.mxu0 %v1119
        %v1121 = vand.u32 %v752, 4294901760
        %1122 = vmatpush.msra.mxu0 %v1121
        %v1123 = vand.u32 %v751, 4294901760
        %1124 = vmatpush.msra.mxu0 %v1123
        %v1125 = vand.u32 %v750, 4294901760
        %1126 = vmatpush.msra.mxu0 %v1125
        %v1127 = vand.u32 %v749, 4294901760
        %1128 = vmatpush.msra.mxu0 %v1127
        %v1129 = vand.u32 %v748, 4294901760
        %1130 = vmatpush.msra.mxu0 %v1129
        %v1131 = vand.u32 %v747, 4294901760
        %1132 = vmatpush.msra.mxu0 %v1131
        %v1133 = vand.u32 %v746, 4294901760
        %1134 = vmatpush.msra.mxu0 %v1133
        %v1135 = vand.u32 %v729, 4294901760
        %v1136 = vsub.f32 %v729, %v1135
        %v1137 = vand.u32 %v1136, 4294901760
        %v1138 = vsub.f32 %v1136, %v1137
        %v1139 = vand.u32 %v1138, 4294901760
        %1140 = vmatmul.f32.gmra.mxu0 %v1139
        %v1141 = vpop.f32.mrf.mxu0
        %v1142 = vadd.f32 %v1101, %v1141
        %1143 = vdwg.mxu0
        %v1144 = vand.u32 %v761, 4294901760
        %v1145 = vsub.f32 %v761, %v1144
        %v1146 = vand.u32 %v1145, 4294901760
        %v1147 = vsub.f32 %v1145, %v1146
        %v1148 = vand.u32 %v1147, 4294901760
        %1149 = vmatpush.msra.mxu0 %v1148
        %v1150 = vand.u32 %v760, 4294901760
        %v1151 = vsub.f32 %v760, %v1150
        %v1152 = vand.u32 %v1151, 4294901760
        %v1153 = vsub.f32 %v1151, %v1152
        %v1154 = vand.u32 %v1153, 4294901760
        %1155 = vmatpush.msra.mxu0 %v1154
        %v1156 = vand.u32 %v759, 4294901760
        %v1157 = vsub.f32 %v759, %v1156
        %v1158 = vand.u32 %v1157, 4294901760
        %v1159 = vsub.f32 %v1157, %v1158
        %v1160 = vand.u32 %v1159, 4294901760
        %1161 = vmatpush.msra.mxu0 %v1160
        %v1162 = vand.u32 %v758, 4294901760
        %v1163 = vsub.f32 %v758, %v1162
        %v1164 = vand.u32 %v1163, 4294901760
        %v1165 = vsub.f32 %v1163, %v1164
        %v1166 = vand.u32 %v1165, 4294901760
        %1167 = vmatpush.msra.mxu0 %v1166
        %v1168 = vand.u32 %v757, 4294901760
        %v1169 = vsub.f32 %v757, %v1168
        %v1170 = vand.u32 %v1169, 4294901760
        %v1171 = vsub.f32 %v1169, %v1170
        %v1172 = vand.u32 %v1171, 4294901760
        %1173 = vmatpush.msra.mxu0 %v1172
        %v1174 = vand.u32 %v756, 4294901760
        %v1175 = vsub.f32 %v756, %v1174
        %v1176 = vand.u32 %v1175, 4294901760
        %v1177 = vsub.f32 %v1175, %v1176
        %v1178 = vand.u32 %v1177, 4294901760
        %1179 = vmatpush.msra.mxu0 %v1178
        %v1180 = vand.u32 %v755, 4294901760
        %v1181 = vsub.f32 %v755, %v1180
        %v1182 = vand.u32 %v1181, 4294901760
        %v1183 = vsub.f32 %v1181, %v1182
        %v1184 = vand.u32 %v1183, 4294901760
        %1185 = vmatpush.msra.mxu0 %v1184
        %v1186 = vand.u32 %v754, 4294901760
        %v1187 = vsub.f32 %v754, %v1186
        %v1188 = vand.u32 %v1187, 4294901760
        %v1189 = vsub.f32 %v1187, %v1188
        %v1190 = vand.u32 %v1189, 4294901760
        %1191 = vmatpush.msra.mxu0 %v1190
        %v1192 = vand.u32 %v753, 4294901760
        %v1193 = vsub.f32 %v753, %v1192
        %v1194 = vand.u32 %v1193, 4294901760
        %v1195 = vsub.f32 %v1193, %v1194
        %v1196 = vand.u32 %v1195, 4294901760
        %1197 = vmatpush.msra.mxu0 %v1196
        %v1198 = vand.u32 %v752, 4294901760
        %v1199 = vsub.f32 %v752, %v1198
        %v1200 = vand.u32 %v1199, 4294901760
        %v1201 = vsub.f32 %v1199, %v1200
        %v1202 = vand.u32 %v1201, 4294901760
        %1203 = vmatpush.msra.mxu0 %v1202
        %v1204 = vand.u32 %v751, 4294901760
        %v1205 = vsub.f32 %v751, %v1204
        %v1206 = vand.u32 %v1205, 4294901760
        %v1207 = vsub.f32 %v1205, %v1206
        %v1208 = vand.u32 %v1207, 4294901760
        %1209 = vmatpush.msra.mxu0 %v1208
        %v1210 = vand.u32 %v750, 4294901760
        %v1211 = vsub.f32 %v750, %v1210
        %v1212 = vand.u32 %v1211, 4294901760
        %v1213 = vsub.f32 %v1211, %v1212
        %v1214 = vand.u32 %v1213, 4294901760
        %1215 = vmatpush.msra.mxu0 %v1214
        %v1216 = vand.u32 %v749, 4294901760
        %v1217 = vsub.f32 %v749, %v1216
        %v1218 = vand.u32 %v1217, 4294901760
        %v1219 = vsub.f32 %v1217, %v1218
        %v1220 = vand.u32 %v1219, 4294901760
        %1221 = vmatpush.msra.mxu0 %v1220
        %v1222 = vand.u32 %v748, 4294901760
        %v1223 = vsub.f32 %v748, %v1222
        %v1224 = vand.u32 %v1223, 4294901760
        %v1225 = vsub.f32 %v1223, %v1224
        %v1226 = vand.u32 %v1225, 4294901760
        %1227 = vmatpush.msra.mxu0 %v1226
        %v1228 = vand.u32 %v747, 4294901760
        %v1229 = vsub.f32 %v747, %v1228
        %v1230 = vand.u32 %v1229, 4294901760
        %v1231 = vsub.f32 %v1229, %v1230
        %v1232 = vand.u32 %v1231, 4294901760
        %1233 = vmatpush.msra.mxu0 %v1232
        %v1234 = vand.u32 %v746, 4294901760
        %v1235 = vsub.f32 %v746, %v1234
        %v1236 = vand.u32 %v1235, 4294901760
        %v1237 = vsub.f32 %v1235, %v1236
        %v1238 = vand.u32 %v1237, 4294901760
        %1239 = vmatpush.msra.mxu0 %v1238
        %v1240 = vand.u32 %v729, 4294901760
        %1241 = vmatmul.f32.gmra.mxu0 %v1240
        %v1242 = vpop.f32.mrf.mxu0
        %v1243 = vadd.f32 %v1142, %v1242
        %1244 = vdwg.mxu0
        %v1245 = vand.u32 %v761, 4294901760
        %v1246 = vsub.f32 %v761, %v1245
        %1247 = vmatpush.msra.mxu0 %v1246
        %v1248 = vand.u32 %v760, 4294901760
        %v1249 = vsub.f32 %v760, %v1248
        %1250 = vmatpush.msra.mxu0 %v1249
        %v1251 = vand.u32 %v759, 4294901760
        %v1252 = vsub.f32 %v759, %v1251
        %1253 = vmatpush.msra.mxu0 %v1252
        %v1254 = vand.u32 %v758, 4294901760
        %v1255 = vsub.f32 %v758, %v1254
        %1256 = vmatpush.msra.mxu0 %v1255
        %v1257 = vand.u32 %v757, 4294901760
        %v1258 = vsub.f32 %v757, %v1257
        %1259 = vmatpush.msra.mxu0 %v1258
        %v1260 = vand.u32 %v756, 4294901760
        %v1261 = vsub.f32 %v756, %v1260
        %1262 = vmatpush.msra.mxu0 %v1261
        %v1263 = vand.u32 %v755, 4294901760
        %v1264 = vsub.f32 %v755, %v1263
        %1265 = vmatpush.msra.mxu0 %v1264
        %v1266 = vand.u32 %v754, 4294901760
        %v1267 = vsub.f32 %v754, %v1266
        %1268 = vmatpush.msra.mxu0 %v1267
        %v1269 = vand.u32 %v753, 4294901760
        %v1270 = vsub.f32 %v753, %v1269
        %1271 = vmatpush.msra.mxu0 %v1270
        %v1272 = vand.u32 %v752, 4294901760
        %v1273 = vsub.f32 %v752, %v1272
        %1274 = vmatpush.msra.mxu0 %v1273
        %v1275 = vand.u32 %v751, 4294901760
        %v1276 = vsub.f32 %v751, %v1275
        %1277 = vmatpush.msra.mxu0 %v1276
        %v1278 = vand.u32 %v750, 4294901760
        %v1279 = vsub.f32 %v750, %v1278
        %1280 = vmatpush.msra.mxu0 %v1279
        %v1281 = vand.u32 %v749, 4294901760
        %v1282 = vsub.f32 %v749, %v1281
        %1283 = vmatpush.msra.mxu0 %v1282
        %v1284 = vand.u32 %v748, 4294901760
        %v1285 = vsub.f32 %v748, %v1284
        %1286 = vmatpush.msra.mxu0 %v1285
        %v1287 = vand.u32 %v747, 4294901760
        %v1288 = vsub.f32 %v747, %v1287
        %1289 = vmatpush.msra.mxu0 %v1288
        %v1290 = vand.u32 %v746, 4294901760
        %v1291 = vsub.f32 %v746, %v1290
        %1292 = vmatpush.msra.mxu0 %v1291
        %v1293 = vand.u32 %v729, 4294901760
        %v1294 = vsub.f32 %v729, %v1293
        %1295 = vmatmul.f32.gmra.mxu0 %v1294
        %v1296 = vpop.f32.mrf.mxu0
        %v1297 = vadd.f32 %v1243, %v1296
        %1298 = vdwg.mxu0
        %v1299 = vand.u32 %v761, 4294901760
        %1300 = vmatpush.msra.mxu0 %v1299
        %v1301 = vand.u32 %v760, 4294901760
        %1302 = vmatpush.msra.mxu0 %v1301
        %v1303 = vand.u32 %v759, 4294901760
        %1304 = vmatpush.msra.mxu0 %v1303
        %v1305 = vand.u32 %v758, 4294901760
        %1306 = vmatpush.msra.mxu0 %v1305
        %v1307 = vand.u32 %v757, 4294901760
        %1308 = vmatpush.msra.mxu0 %v1307
        %v1309 = vand.u32 %v756, 4294901760
        %1310 = vmatpush.msra.mxu0 %v1309
        %v1311 = vand.u32 %v755, 4294901760
        %1312 = vmatpush.msra.mxu0 %v1311
        %v1313 = vand.u32 %v754, 4294901760
        %1314 = vmatpush.msra.mxu0 %v1313
        %v1315 = vand.u32 %v753, 4294901760
        %1316 = vmatpush.msra.mxu0 %v1315
        %v1317 = vand.u32 %v752, 4294901760
        %1318 = vmatpush.msra.mxu0 %v1317
        %v1319 = vand.u32 %v751, 4294901760
        %1320 = vmatpush.msra.mxu0 %v1319
        %v1321 = vand.u32 %v750, 4294901760
        %1322 = vmatpush.msra.mxu0 %v1321
        %v1323 = vand.u32 %v749, 4294901760
        %1324 = vmatpush.msra.mxu0 %v1323
        %v1325 = vand.u32 %v748, 4294901760
        %1326 = vmatpush.msra.mxu0 %v1325
        %v1327 = vand.u32 %v747, 4294901760
        %1328 = vmatpush.msra.mxu0 %v1327
        %v1329 = vand.u32 %v746, 4294901760
        %1330 = vmatpush.msra.mxu0 %v1329
        %v1331 = vand.u32 %v729, 4294901760
        %v1332 = vsub.f32 %v729, %v1331
        %v1333 = vand.u32 %v1332, 4294901760
        %1334 = vmatmul.f32.gmra.mxu0 %v1333
        %v1335 = vpop.f32.mrf.mxu0
        %v1336 = vadd.f32 %v1297, %v1335
        %1337 = vdwg.mxu0
        %v1338 = vand.u32 %v761, 4294901760
        %v1339 = vsub.f32 %v761, %v1338
        %v1340 = vand.u32 %v1339, 4294901760
        %1341 = vmatpush.msra.mxu0 %v1340
        %v1342 = vand.u32 %v760, 4294901760
        %v1343 = vsub.f32 %v760, %v1342
        %v1344 = vand.u32 %v1343, 4294901760
        %1345 = vmatpush.msra.mxu0 %v1344
        %v1346 = vand.u32 %v759, 4294901760
        %v1347 = vsub.f32 %v759, %v1346
        %v1348 = vand.u32 %v1347, 4294901760
        %1349 = vmatpush.msra.mxu0 %v1348
        %v1350 = vand.u32 %v758, 4294901760
        %v1351 = vsub.f32 %v758, %v1350
        %v1352 = vand.u32 %v1351, 4294901760
        %1353 = vmatpush.msra.mxu0 %v1352
        %v1354 = vand.u32 %v757, 4294901760
        %v1355 = vsub.f32 %v757, %v1354
        %v1356 = vand.u32 %v1355, 4294901760
        %1357 = vmatpush.msra.mxu0 %v1356
        %v1358 = vand.u32 %v756, 4294901760
        %v1359 = vsub.f32 %v756, %v1358
        %v1360 = vand.u32 %v1359, 4294901760
        %1361 = vmatpush.msra.mxu0 %v1360
        %v1362 = vand.u32 %v755, 4294901760
        %v1363 = vsub.f32 %v755, %v1362
        %v1364 = vand.u32 %v1363, 4294901760
        %1365 = vmatpush.msra.mxu0 %v1364
        %v1366 = vand.u32 %v754, 4294901760
        %v1367 = vsub.f32 %v754, %v1366
        %v1368 = vand.u32 %v1367, 4294901760
        %1369 = vmatpush.msra.mxu0 %v1368
        %v1370 = vand.u32 %v753, 4294901760
        %v1371 = vsub.f32 %v753, %v1370
        %v1372 = vand.u32 %v1371, 4294901760
        %1373 = vmatpush.msra.mxu0 %v1372
        %v1374 = vand.u32 %v752, 4294901760
        %v1375 = vsub.f32 %v752, %v1374
        %v1376 = vand.u32 %v1375, 4294901760
        %1377 = vmatpush.msra.mxu0 %v1376
        %v1378 = vand.u32 %v751, 4294901760
        %v1379 = vsub.f32 %v751, %v1378
        %v1380 = vand.u32 %v1379, 4294901760
        %1381 = vmatpush.msra.mxu0 %v1380
        %v1382 = vand.u32 %v750, 4294901760
        %v1383 = vsub.f32 %v750, %v1382
        %v1384 = vand.u32 %v1383, 4294901760
        %1385 = vmatpush.msra.mxu0 %v1384
        %v1386 = vand.u32 %v749, 4294901760
        %v1387 = vsub.f32 %v749, %v1386
        %v1388 = vand.u32 %v1387, 4294901760
        %1389 = vmatpush.msra.mxu0 %v1388
        %v1390 = vand.u32 %v748, 4294901760
        %v1391 = vsub.f32 %v748, %v1390
        %v1392 = vand.u32 %v1391, 4294901760
        %1393 = vmatpush.msra.mxu0 %v1392
        %v1394 = vand.u32 %v747, 4294901760
        %v1395 = vsub.f32 %v747, %v1394
        %v1396 = vand.u32 %v1395, 4294901760
        %1397 = vmatpush.msra.mxu0 %v1396
        %v1398 = vand.u32 %v746, 4294901760
        %v1399 = vsub.f32 %v746, %v1398
        %v1400 = vand.u32 %v1399, 4294901760
        %1401 = vmatpush.msra.mxu0 %v1400
        %v1402 = vand.u32 %v729, 4294901760
        %1403 = vmatmul.f32.gmra.mxu0 %v1402
        %v1404 = vpop.f32.mrf.mxu0
        %v1405 = vadd.f32 %v1336, %v1404
        %1406 = vdwg.mxu0
        %v1407 = vand.u32 %v761, 4294901760
        %1408 = vmatpush.msra.mxu0 %v1407
        %v1409 = vand.u32 %v760, 4294901760
        %1410 = vmatpush.msra.mxu0 %v1409
        %v1411 = vand.u32 %v759, 4294901760
        %1412 = vmatpush.msra.mxu0 %v1411
        %v1413 = vand.u32 %v758, 4294901760
        %1414 = vmatpush.msra.mxu0 %v1413
        %v1415 = vand.u32 %v757, 4294901760
        %1416 = vmatpush.msra.mxu0 %v1415
        %v1417 = vand.u32 %v756, 4294901760
        %1418 = vmatpush.msra.mxu0 %v1417
        %v1419 = vand.u32 %v755, 4294901760
        %1420 = vmatpush.msra.mxu0 %v1419
        %v1421 = vand.u32 %v754, 4294901760
        %1422 = vmatpush.msra.mxu0 %v1421
        %v1423 = vand.u32 %v753, 4294901760
        %1424 = vmatpush.msra.mxu0 %v1423
        %v1425 = vand.u32 %v752, 4294901760
        %1426 = vmatpush.msra.mxu0 %v1425
        %v1427 = vand.u32 %v751, 4294901760
        %1428 = vmatpush.msra.mxu0 %v1427
        %v1429 = vand.u32 %v750, 4294901760
        %1430 = vmatpush.msra.mxu0 %v1429
        %v1431 = vand.u32 %v749, 4294901760
        %1432 = vmatpush.msra.mxu0 %v1431
        %v1433 = vand.u32 %v748, 4294901760
        %1434 = vmatpush.msra.mxu0 %v1433
        %v1435 = vand.u32 %v747, 4294901760
        %1436 = vmatpush.msra.mxu0 %v1435
        %v1437 = vand.u32 %v746, 4294901760
        %1438 = vmatpush.msra.mxu0 %v1437
        %v1439 = vand.u32 %v729, 4294901760
        %1440 = vmatmul.f32.gmra.mxu0 %v1439
        %v1441 = vpop.f32.mrf.mxu0
        %v1442 = vadd.f32 %v1405, %v1441
        %1443 = vdwg.mxu0
        %v1444 = vadd.f32 %v728, %v729
        %1445 = vadd.xlane.f32.xlu0 %v1444
        %v1446 = vpop.xlane.xlu0 %1445
        %vm1447 = vcmp.gt.f32.partialorder %v1446, 0.0
        %v1448 = vld [vmem:[#allocation11] sm:$0xff]
        %v1449 = vld [vmem:[#allocation9] sm:$0xff]
        %v1450 = vld [vmem:[#allocation9 + $0x8] sm:$0xff]
        %v1451 = vld [vmem:[#allocation9 + $0x10] sm:$0xff]
        %v1452 = vld [vmem:[#allocation9 + $0x18] sm:$0xff]
        %v1453 = vld [vmem:[#allocation9 + $0x20] sm:$0xff]
        %v1454 = vld [vmem:[#allocation9 + $0x28] sm:$0xff]
        %v1455 = vld [vmem:[#allocation9 + $0x30] sm:$0xff]
        %v1456 = vld [vmem:[#allocation9 + $0x38] sm:$0xff]
        %v1457 = vld [vmem:[#allocation9 + $0x40] sm:$0xff]
        %v1458 = vld [vmem:[#allocation9 + $0x48] sm:$0xff]
        %v1459 = vld [vmem:[#allocation9 + $0x50] sm:$0xff]
        %v1460 = vld [vmem:[#allocation9 + $0x58] sm:$0xff]
        %v1461 = vld [vmem:[#allocation9 + $0x60] sm:$0xff]
        %v1462 = vld [vmem:[#allocation9 + $0x68] sm:$0xff]
        %v1463 = vld [vmem:[#allocation9 + $0x70] sm:$0xff]
        %v1464 = vld [vmem:[#allocation9 + $0x78] sm:$0xff]
        %v1465 = vperm.slane %v1448, 0
        %v1466 = vand.u32 %v1464, 4294901760
        %1467 = vmatpush.msra.mxu0 %v1466
        %v1468 = vand.u32 %v1463, 4294901760
        %1469 = vmatpush.msra.mxu0 %v1468
        %v1470 = vand.u32 %v1462, 4294901760
        %1471 = vmatpush.msra.mxu0 %v1470
        %v1472 = vand.u32 %v1461, 4294901760
        %1473 = vmatpush.msra.mxu0 %v1472
        %v1474 = vand.u32 %v1460, 4294901760
        %1475 = vmatpush.msra.mxu0 %v1474
        %v1476 = vand.u32 %v1459, 4294901760
        %1477 = vmatpush.msra.mxu0 %v1476
        %v1478 = vand.u32 %v1458, 4294901760
        %1479 = vmatpush.msra.mxu0 %v1478
        %v1480 = vand.u32 %v1457, 4294901760
        %1481 = vmatpush.msra.mxu0 %v1480
        %v1482 = vand.u32 %v1456, 4294901760
        %1483 = vmatpush.msra.mxu0 %v1482
        %v1484 = vand.u32 %v1455, 4294901760
        %1485 = vmatpush.msra.mxu0 %v1484
        %v1486 = vand.u32 %v1454, 4294901760
        %1487 = vmatpush.msra.mxu0 %v1486
        %v1488 = vand.u32 %v1453, 4294901760
        %1489 = vmatpush.msra.mxu0 %v1488
        %v1490 = vand.u32 %v1452, 4294901760
        %1491 = vmatpush.msra.mxu0 %v1490
        %v1492 = vand.u32 %v1451, 4294901760
        %1493 = vmatpush.msra.mxu0 %v1492
        %v1494 = vand.u32 %v1450, 4294901760
        %1495 = vmatpush.msra.mxu0 %v1494
        %v1496 = vand.u32 %v1449, 4294901760
        %1497 = vmatpush.msra.mxu0 %v1496
        %v1498 = vand.u32 %v726, 4294901760
        %v1499 = vsub.f32 %v726, %v1498
        %v1500 = vand.u32 %v1499, 4294901760
        %v1501 = vsub.f32 %v1499, %v1500
        %v1502 = vand.u32 %v1501, 4294901760
        %1503 = vmatmul.f32.gmra.mxu0 %v1502
        %v1504 = vpop.f32.mrf.mxu0
        %v1505 = vadd.f32 %v1465, %v1504
        %1506 = vdwg.mxu0
        %v1507 = vand.u32 %v1464, 4294901760
        %v1508 = vsub.f32 %v1464, %v1507
        %v1509 = vand.u32 %v1508, 4294901760
        %v1510 = vsub.f32 %v1508, %v1509
        %v1511 = vand.u32 %v1510, 4294901760
        %1512 = vmatpush.msra.mxu0 %v1511
        %v1513 = vand.u32 %v1463, 4294901760
        %v1514 = vsub.f32 %v1463, %v1513
        %v1515 = vand.u32 %v1514, 4294901760
        %v1516 = vsub.f32 %v1514, %v1515
        %v1517 = vand.u32 %v1516, 4294901760
        %1518 = vmatpush.msra.mxu0 %v1517
        %v1519 = vand.u32 %v1462, 4294901760
        %v1520 = vsub.f32 %v1462, %v1519
        %v1521 = vand.u32 %v1520, 4294901760
        %v1522 = vsub.f32 %v1520, %v1521
        %v1523 = vand.u32 %v1522, 4294901760
        %1524 = vmatpush.msra.mxu0 %v1523
        %v1525 = vand.u32 %v1461, 4294901760
        %v1526 = vsub.f32 %v1461, %v1525
        %v1527 = vand.u32 %v1526, 4294901760
        %v1528 = vsub.f32 %v1526, %v1527
        %v1529 = vand.u32 %v1528, 4294901760
        %1530 = vmatpush.msra.mxu0 %v1529
        %v1531 = vand.u32 %v1460, 4294901760
        %v1532 = vsub.f32 %v1460, %v1531
        %v1533 = vand.u32 %v1532, 4294901760
        %v1534 = vsub.f32 %v1532, %v1533
        %v1535 = vand.u32 %v1534, 4294901760
        %1536 = vmatpush.msra.mxu0 %v1535
        %v1537 = vand.u32 %v1459, 4294901760
        %v1538 = vsub.f32 %v1459, %v1537
        %v1539 = vand.u32 %v1538, 4294901760
        %v1540 = vsub.f32 %v1538, %v1539
        %v1541 = vand.u32 %v1540, 4294901760
        %1542 = vmatpush.msra.mxu0 %v1541
        %v1543 = vand.u32 %v1458, 4294901760
        %v1544 = vsub.f32 %v1458, %v1543
        %v1545 = vand.u32 %v1544, 4294901760
        %v1546 = vsub.f32 %v1544, %v1545
        %v1547 = vand.u32 %v1546, 4294901760
        %1548 = vmatpush.msra.mxu0 %v1547
        %v1549 = vand.u32 %v1457, 4294901760
        %v1550 = vsub.f32 %v1457, %v1549
        %v1551 = vand.u32 %v1550, 4294901760
        %v1552 = vsub.f32 %v1550, %v1551
        %v1553 = vand.u32 %v1552, 4294901760
        %1554 = vmatpush.msra.mxu0 %v1553
        %v1555 = vand.u32 %v1456, 4294901760
        %v1556 = vsub.f32 %v1456, %v1555
        %v1557 = vand.u32 %v1556, 4294901760
        %v1558 = vsub.f32 %v1556, %v1557
        %v1559 = vand.u32 %v1558, 4294901760
        %1560 = vmatpush.msra.mxu0 %v1559
        %v1561 = vand.u32 %v1455, 4294901760
        %v1562 = vsub.f32 %v1455, %v1561
        %v1563 = vand.u32 %v1562, 4294901760
        %v1564 = vsub.f32 %v1562, %v1563
        %v1565 = vand.u32 %v1564, 4294901760
        %1566 = vmatpush.msra.mxu0 %v1565
        %v1567 = vand.u32 %v1454, 4294901760
        %v1568 = vsub.f32 %v1454, %v1567
        %v1569 = vand.u32 %v1568, 4294901760
        %v1570 = vsub.f32 %v1568, %v1569
        %v1571 = vand.u32 %v1570, 4294901760
        %1572 = vmatpush.msra.mxu0 %v1571
        %v1573 = vand.u32 %v1453, 4294901760
        %v1574 = vsub.f32 %v1453, %v1573
        %v1575 = vand.u32 %v1574, 4294901760
        %v1576 = vsub.f32 %v1574, %v1575
        %v1577 = vand.u32 %v1576, 4294901760
        %1578 = vmatpush.msra.mxu0 %v1577
        %v1579 = vand.u32 %v1452, 4294901760
        %v1580 = vsub.f32 %v1452, %v1579
        %v1581 = vand.u32 %v1580, 4294901760
        %v1582 = vsub.f32 %v1580, %v1581
        %v1583 = vand.u32 %v1582, 4294901760
        %1584 = vmatpush.msra.mxu0 %v1583
        %v1585 = vand.u32 %v1451, 4294901760
        %v1586 = vsub.f32 %v1451, %v1585
        %v1587 = vand.u32 %v1586, 4294901760
        %v1588 = vsub.f32 %v1586, %v1587
        %v1589 = vand.u32 %v1588, 4294901760
        %1590 = vmatpush.msra.mxu0 %v1589
        %v1591 = vand.u32 %v1450, 4294901760
        %v1592 = vsub.f32 %v1450, %v1591
        %v1593 = vand.u32 %v1592, 4294901760
        %v1594 = vsub.f32 %v1592, %v1593
        %v1595 = vand.u32 %v1594, 4294901760
        %1596 = vmatpush.msra.mxu0 %v1595
        %v1597 = vand.u32 %v1449, 4294901760
        %v1598 = vsub.f32 %v1449, %v1597
        %v1599 = vand.u32 %v1598, 4294901760
        %v1600 = vsub.f32 %v1598, %v1599
        %v1601 = vand.u32 %v1600, 4294901760
        %1602 = vmatpush.msra.mxu0 %v1601
        %v1603 = vand.u32 %v726, 4294901760
        %1604 = vmatmul.f32.gmra.mxu0 %v1603
        %v1605 = vpop.f32.mrf.mxu0
        %v1606 = vadd.f32 %v1505, %v1605
        %1607 = vdwg.mxu0
        %v1608 = vand.u32 %v1464, 4294901760
        %v1609 = vsub.f32 %v1464, %v1608
        %1610 = vmatpush.msra.mxu0 %v1609
        %v1611 = vand.u32 %v1463, 4294901760
        %v1612 = vsub.f32 %v1463, %v1611
        %1613 = vmatpush.msra.mxu0 %v1612
        %v1614 = vand.u32 %v1462, 4294901760
        %v1615 = vsub.f32 %v1462, %v1614
        %1616 = vmatpush.msra.mxu0 %v1615
        %v1617 = vand.u32 %v1461, 4294901760
        %v1618 = vsub.f32 %v1461, %v1617
        %1619 = vmatpush.msra.mxu0 %v1618
        %v1620 = vand.u32 %v1460, 4294901760
        %v1621 = vsub.f32 %v1460, %v1620
        %1622 = vmatpush.msra.mxu0 %v1621
        %v1623 = vand.u32 %v1459, 4294901760
        %v1624 = vsub.f32 %v1459, %v1623
        %1625 = vmatpush.msra.mxu0 %v1624
        %v1626 = vand.u32 %v1458, 4294901760
        %v1627 = vsub.f32 %v1458, %v1626
        %1628 = vmatpush.msra.mxu0 %v1627
        %v1629 = vand.u32 %v1457, 4294901760
        %v1630 = vsub.f32 %v1457, %v1629
        %1631 = vmatpush.msra.mxu0 %v1630
        %v1632 = vand.u32 %v1456, 4294901760
        %v1633 = vsub.f32 %v1456, %v1632
        %1634 = vmatpush.msra.mxu0 %v1633
        %v1635 = vand.u32 %v1455, 4294901760
        %v1636 = vsub.f32 %v1455, %v1635
        %1637 = vmatpush.msra.mxu0 %v1636
        %v1638 = vand.u32 %v1454, 4294901760
        %v1639 = vsub.f32 %v1454, %v1638
        %1640 = vmatpush.msra.mxu0 %v1639
        %v1641 = vand.u32 %v1453, 4294901760
        %v1642 = vsub.f32 %v1453, %v1641
        %1643 = vmatpush.msra.mxu0 %v1642
        %v1644 = vand.u32 %v1452, 4294901760
        %v1645 = vsub.f32 %v1452, %v1644
        %1646 = vmatpush.msra.mxu0 %v1645
        %v1647 = vand.u32 %v1451, 4294901760
        %v1648 = vsub.f32 %v1451, %v1647
        %1649 = vmatpush.msra.mxu0 %v1648
        %v1650 = vand.u32 %v1450, 4294901760
        %v1651 = vsub.f32 %v1450, %v1650
        %1652 = vmatpush.msra.mxu0 %v1651
        %v1653 = vand.u32 %v1449, 4294901760
        %v1654 = vsub.f32 %v1449, %v1653
        %1655 = vmatpush.msra.mxu0 %v1654
        %v1656 = vand.u32 %v726, 4294901760
        %v1657 = vsub.f32 %v726, %v1656
        %1658 = vmatmul.f32.gmra.mxu0 %v1657
        %v1659 = vpop.f32.mrf.mxu0
        %v1660 = vadd.f32 %v1606, %v1659
        %1661 = vdwg.mxu0
        %v1662 = vand.u32 %v1464, 4294901760
        %1663 = vmatpush.msra.mxu0 %v1662
        %v1664 = vand.u32 %v1463, 4294901760
        %1665 = vmatpush.msra.mxu0 %v1664
        %v1666 = vand.u32 %v1462, 4294901760
        %1667 = vmatpush.msra.mxu0 %v1666
        %v1668 = vand.u32 %v1461, 4294901760
        %1669 = vmatpush.msra.mxu0 %v1668
        %v1670 = vand.u32 %v1460, 4294901760
        %1671 = vmatpush.msra.mxu0 %v1670
        %v1672 = vand.u32 %v1459, 4294901760
        %1673 = vmatpush.msra.mxu0 %v1672
        %v1674 = vand.u32 %v1458, 4294901760
        %1675 = vmatpush.msra.mxu0 %v1674
        %v1676 = vand.u32 %v1457, 4294901760
        %1677 = vmatpush.msra.mxu0 %v1676
        %v1678 = vand.u32 %v1456, 4294901760
        %1679 = vmatpush.msra.mxu0 %v1678
        %v1680 = vand.u32 %v1455, 4294901760
        %1681 = vmatpush.msra.mxu0 %v1680
        %v1682 = vand.u32 %v1454, 4294901760
        %1683 = vmatpush.msra.mxu0 %v1682
        %v1684 = vand.u32 %v1453, 4294901760
        %1685 = vmatpush.msra.mxu0 %v1684
        %v1686 = vand.u32 %v1452, 4294901760
        %1687 = vmatpush.msra.mxu0 %v1686
        %v1688 = vand.u32 %v1451, 4294901760
        %1689 = vmatpush.msra.mxu0 %v1688
        %v1690 = vand.u32 %v1450, 4294901760
        %1691 = vmatpush.msra.mxu0 %v1690
        %v1692 = vand.u32 %v1449, 4294901760
        %1693 = vmatpush.msra.mxu0 %v1692
        %v1694 = vand.u32 %v726, 4294901760
        %v1695 = vsub.f32 %v726, %v1694
        %v1696 = vand.u32 %v1695, 4294901760
        %1697 = vmatmul.f32.gmra.mxu0 %v1696
        %v1698 = vpop.f32.mrf.mxu0
        %v1699 = vadd.f32 %v1660, %v1698
        %1700 = vdwg.mxu0
        %v1701 = vand.u32 %v1464, 4294901760
        %v1702 = vsub.f32 %v1464, %v1701
        %v1703 = vand.u32 %v1702, 4294901760
        %1704 = vmatpush.msra.mxu0 %v1703
        %v1705 = vand.u32 %v1463, 4294901760
        %v1706 = vsub.f32 %v1463, %v1705
        %v1707 = vand.u32 %v1706, 4294901760
        %1708 = vmatpush.msra.mxu0 %v1707
        %v1709 = vand.u32 %v1462, 4294901760
        %v1710 = vsub.f32 %v1462, %v1709
        %v1711 = vand.u32 %v1710, 4294901760
        %1712 = vmatpush.msra.mxu0 %v1711
        %v1713 = vand.u32 %v1461, 4294901760
        %v1714 = vsub.f32 %v1461, %v1713
        %v1715 = vand.u32 %v1714, 4294901760
        %1716 = vmatpush.msra.mxu0 %v1715
        %v1717 = vand.u32 %v1460, 4294901760
        %v1718 = vsub.f32 %v1460, %v1717
        %v1719 = vand.u32 %v1718, 4294901760
        %1720 = vmatpush.msra.mxu0 %v1719
        %v1721 = vand.u32 %v1459, 4294901760
        %v1722 = vsub.f32 %v1459, %v1721
        %v1723 = vand.u32 %v1722, 4294901760
        %1724 = vmatpush.msra.mxu0 %v1723
        %v1725 = vand.u32 %v1458, 4294901760
        %v1726 = vsub.f32 %v1458, %v1725
        %v1727 = vand.u32 %v1726, 4294901760
        %1728 = vmatpush.msra.mxu0 %v1727
        %v1729 = vand.u32 %v1457, 4294901760
        %v1730 = vsub.f32 %v1457, %v1729
        %v1731 = vand.u32 %v1730, 4294901760
        %1732 = vmatpush.msra.mxu0 %v1731
        %v1733 = vand.u32 %v1456, 4294901760
        %v1734 = vsub.f32 %v1456, %v1733
        %v1735 = vand.u32 %v1734, 4294901760
        %1736 = vmatpush.msra.mxu0 %v1735
        %v1737 = vand.u32 %v1455, 4294901760
        %v1738 = vsub.f32 %v1455, %v1737
        %v1739 = vand.u32 %v1738, 4294901760
        %1740 = vmatpush.msra.mxu0 %v1739
        %v1741 = vand.u32 %v1454, 4294901760
        %v1742 = vsub.f32 %v1454, %v1741
        %v1743 = vand.u32 %v1742, 4294901760
        %1744 = vmatpush.msra.mxu0 %v1743
        %v1745 = vand.u32 %v1453, 4294901760
        %v1746 = vsub.f32 %v1453, %v1745
        %v1747 = vand.u32 %v1746, 4294901760
        %1748 = vmatpush.msra.mxu0 %v1747
        %v1749 = vand.u32 %v1452, 4294901760
        %v1750 = vsub.f32 %v1452, %v1749
        %v1751 = vand.u32 %v1750, 4294901760
        %1752 = vmatpush.msra.mxu0 %v1751
        %v1753 = vand.u32 %v1451, 4294901760
        %v1754 = vsub.f32 %v1451, %v1753
        %v1755 = vand.u32 %v1754, 4294901760
        %1756 = vmatpush.msra.mxu0 %v1755
        %v1757 = vand.u32 %v1450, 4294901760
        %v1758 = vsub.f32 %v1450, %v1757
        %v1759 = vand.u32 %v1758, 4294901760
        %1760 = vmatpush.msra.mxu0 %v1759
        %v1761 = vand.u32 %v1449, 4294901760
        %v1762 = vsub.f32 %v1449, %v1761
        %v1763 = vand.u32 %v1762, 4294901760
        %1764 = vmatpush.msra.mxu0 %v1763
        %v1765 = vand.u32 %v726, 4294901760
        %1766 = vmatmul.f32.gmra.mxu0 %v1765
        %v1767 = vpop.f32.mrf.mxu0
        %v1768 = vadd.f32 %v1699, %v1767
        %1769 = vdwg.mxu0
        %v1770 = vand.u32 %v1464, 4294901760
        %1771 = vmatpush.msra.mxu0 %v1770
        %v1772 = vand.u32 %v1463, 4294901760
        %1773 = vmatpush.msra.mxu0 %v1772
        %v1774 = vand.u32 %v1462, 4294901760
        %1775 = vmatpush.msra.mxu0 %v1774
        %v1776 = vand.u32 %v1461, 4294901760
        %1777 = vmatpush.msra.mxu0 %v1776
        %v1778 = vand.u32 %v1460, 4294901760
        %1779 = vmatpush.msra.mxu0 %v1778
        %v1780 = vand.u32 %v1459, 4294901760
        %1781 = vmatpush.msra.mxu0 %v1780
        %v1782 = vand.u32 %v1458, 4294901760
        %1783 = vmatpush.msra.mxu0 %v1782
        %v1784 = vand.u32 %v1457, 4294901760
        %1785 = vmatpush.msra.mxu0 %v1784
        %v1786 = vand.u32 %v1456, 4294901760
        %1787 = vmatpush.msra.mxu0 %v1786
        %v1788 = vand.u32 %v1455, 4294901760
        %1789 = vmatpush.msra.mxu0 %v1788
        %v1790 = vand.u32 %v1454, 4294901760
        %1791 = vmatpush.msra.mxu0 %v1790
        %v1792 = vand.u32 %v1453, 4294901760
        %1793 = vmatpush.msra.mxu0 %v1792
        %v1794 = vand.u32 %v1452, 4294901760
        %1795 = vmatpush.msra.mxu0 %v1794
        %v1796 = vand.u32 %v1451, 4294901760
        %1797 = vmatpush.msra.mxu0 %v1796
        %v1798 = vand.u32 %v1450, 4294901760
        %1799 = vmatpush.msra.mxu0 %v1798
        %v1800 = vand.u32 %v1449, 4294901760
        %1801 = vmatpush.msra.mxu0 %v1800
        %v1802 = vand.u32 %v726, 4294901760
        %1803 = vmatmul.f32.gmra.mxu0 %v1802
        %v1804 = vpop.f32.mrf.mxu0
        %v1805 = vadd.f32 %v1768, %v1804
        %1806 = vdwg.mxu0
        %v1807 = vmax.f32 %v1805, 0.0
        %s1808 = scalar_lea.vmem [#allocation9], 128
        %v1809 = vld [vmem:[%s1808] sm:$0xff]
        %v1810 = vld [vmem:[%s1808 + $0x8] sm:$0xff]
        %v1811 = vld [vmem:[%s1808 + $0x10] sm:$0xff]
        %v1812 = vld [vmem:[%s1808 + $0x18] sm:$0xff]
        %v1813 = vld [vmem:[%s1808 + $0x20] sm:$0xff]
        %v1814 = vld [vmem:[%s1808 + $0x28] sm:$0xff]
        %v1815 = vld [vmem:[%s1808 + $0x30] sm:$0xff]
        %v1816 = vld [vmem:[%s1808 + $0x38] sm:$0xff]
        %v1817 = vld [vmem:[%s1808 + $0x40] sm:$0xff]
        %v1818 = vld [vmem:[%s1808 + $0x48] sm:$0xff]
        %v1819 = vld [vmem:[%s1808 + $0x50] sm:$0xff]
        %v1820 = vld [vmem:[%s1808 + $0x58] sm:$0xff]
        %v1821 = vld [vmem:[%s1808 + $0x60] sm:$0xff]
        %v1822 = vld [vmem:[%s1808 + $0x68] sm:$0xff]
        %v1823 = vld [vmem:[%s1808 + $0x70] sm:$0xff]
        %v1824 = vld [vmem:[%s1808 + $0x78] sm:$0xff]
        %v1825 = vperm.slane %v1448, 1
        %v1826 = vand.u32 %v1824, 4294901760
        %1827 = vmatpush.msra.mxu0 %v1826
        %v1828 = vand.u32 %v1823, 4294901760
        %1829 = vmatpush.msra.mxu0 %v1828
        %v1830 = vand.u32 %v1822, 4294901760
        %1831 = vmatpush.msra.mxu0 %v1830
        %v1832 = vand.u32 %v1821, 4294901760
        %1833 = vmatpush.msra.mxu0 %v1832
        %v1834 = vand.u32 %v1820, 4294901760
        %1835 = vmatpush.msra.mxu0 %v1834
        %v1836 = vand.u32 %v1819, 4294901760
        %1837 = vmatpush.msra.mxu0 %v1836
        %v1838 = vand.u32 %v1818, 4294901760
        %1839 = vmatpush.msra.mxu0 %v1838
        %v1840 = vand.u32 %v1817, 4294901760
        %1841 = vmatpush.msra.mxu0 %v1840
        %v1842 = vand.u32 %v1816, 4294901760
        %1843 = vmatpush.msra.mxu0 %v1842
        %v1844 = vand.u32 %v1815, 4294901760
        %1845 = vmatpush.msra.mxu0 %v1844
        %v1846 = vand.u32 %v1814, 4294901760
        %1847 = vmatpush.msra.mxu0 %v1846
        %v1848 = vand.u32 %v1813, 4294901760
        %1849 = vmatpush.msra.mxu0 %v1848
        %v1850 = vand.u32 %v1812, 4294901760
        %1851 = vmatpush.msra.mxu0 %v1850
        %v1852 = vand.u32 %v1811, 4294901760
        %1853 = vmatpush.msra.mxu0 %v1852
        %v1854 = vand.u32 %v1810, 4294901760
        %1855 = vmatpush.msra.mxu0 %v1854
        %v1856 = vand.u32 %v1809, 4294901760
        %1857 = vmatpush.msra.mxu0 %v1856
        %v1858 = vand.u32 %v1807, 4294901760
        %v1859 = vsub.f32 %v1807, %v1858
        %v1860 = vand.u32 %v1859, 4294901760
        %v1861 = vsub.f32 %v1859, %v1860
        %v1862 = vand.u32 %v1861, 4294901760
        %1863 = vmatmul.f32.gmra.mxu0 %v1862
        %v1864 = vpop.f32.mrf.mxu0
        %v1865 = vadd.f32 %v1825, %v1864
        %1866 = vdwg.mxu0
        %v1867 = vand.u32 %v1824, 4294901760
        %v1868 = vsub.f32 %v1824, %v1867
        %v1869 = vand.u32 %v1868, 4294901760
        %v1870 = vsub.f32 %v1868, %v1869
        %v1871 = vand.u32 %v1870, 4294901760
        %1872 = vmatpush.msra.mxu0 %v1871
        %v1873 = vand.u32 %v1823, 4294901760
        %v1874 = vsub.f32 %v1823, %v1873
        %v1875 = vand.u32 %v1874, 4294901760
        %v1876 = vsub.f32 %v1874, %v1875
        %v1877 = vand.u32 %v1876, 4294901760
        %1878 = vmatpush.msra.mxu0 %v1877
        %v1879 = vand.u32 %v1822, 4294901760
        %v1880 = vsub.f32 %v1822, %v1879
        %v1881 = vand.u32 %v1880, 4294901760
        %v1882 = vsub.f32 %v1880, %v1881
        %v1883 = vand.u32 %v1882, 4294901760
        %1884 = vmatpush.msra.mxu0 %v1883
        %v1885 = vand.u32 %v1821, 4294901760
        %v1886 = vsub.f32 %v1821, %v1885
        %v1887 = vand.u32 %v1886, 4294901760
        %v1888 = vsub.f32 %v1886, %v1887
        %v1889 = vand.u32 %v1888, 4294901760
        %1890 = vmatpush.msra.mxu0 %v1889
        %v1891 = vand.u32 %v1820, 4294901760
        %v1892 = vsub.f32 %v1820, %v1891
        %v1893 = vand.u32 %v1892, 4294901760
        %v1894 = vsub.f32 %v1892, %v1893
        %v1895 = vand.u32 %v1894, 4294901760
        %1896 = vmatpush.msra.mxu0 %v1895
        %v1897 = vand.u32 %v1819, 4294901760
        %v1898 = vsub.f32 %v1819, %v1897
        %v1899 = vand.u32 %v1898, 4294901760
        %v1900 = vsub.f32 %v1898, %v1899
        %v1901 = vand.u32 %v1900, 4294901760
        %1902 = vmatpush.msra.mxu0 %v1901
        %v1903 = vand.u32 %v1818, 4294901760
        %v1904 = vsub.f32 %v1818, %v1903
        %v1905 = vand.u32 %v1904, 4294901760
        %v1906 = vsub.f32 %v1904, %v1905
        %v1907 = vand.u32 %v1906, 4294901760
        %1908 = vmatpush.msra.mxu0 %v1907
        %v1909 = vand.u32 %v1817, 4294901760
        %v1910 = vsub.f32 %v1817, %v1909
        %v1911 = vand.u32 %v1910, 4294901760
        %v1912 = vsub.f32 %v1910, %v1911
        %v1913 = vand.u32 %v1912, 4294901760
        %1914 = vmatpush.msra.mxu0 %v1913
        %v1915 = vand.u32 %v1816, 4294901760
        %v1916 = vsub.f32 %v1816, %v1915
        %v1917 = vand.u32 %v1916, 4294901760
        %v1918 = vsub.f32 %v1916, %v1917
        %v1919 = vand.u32 %v1918, 4294901760
        %1920 = vmatpush.msra.mxu0 %v1919
        %v1921 = vand.u32 %v1815, 4294901760
        %v1922 = vsub.f32 %v1815, %v1921
        %v1923 = vand.u32 %v1922, 4294901760
        %v1924 = vsub.f32 %v1922, %v1923
        %v1925 = vand.u32 %v1924, 4294901760
        %1926 = vmatpush.msra.mxu0 %v1925
        %v1927 = vand.u32 %v1814, 4294901760
        %v1928 = vsub.f32 %v1814, %v1927
        %v1929 = vand.u32 %v1928, 4294901760
        %v1930 = vsub.f32 %v1928, %v1929
        %v1931 = vand.u32 %v1930, 4294901760
        %1932 = vmatpush.msra.mxu0 %v1931
        %v1933 = vand.u32 %v1813, 4294901760
        %v1934 = vsub.f32 %v1813, %v1933
        %v1935 = vand.u32 %v1934, 4294901760
        %v1936 = vsub.f32 %v1934, %v1935
        %v1937 = vand.u32 %v1936, 4294901760
        %1938 = vmatpush.msra.mxu0 %v1937
        %v1939 = vand.u32 %v1812, 4294901760
        %v1940 = vsub.f32 %v1812, %v1939
        %v1941 = vand.u32 %v1940, 4294901760
        %v1942 = vsub.f32 %v1940, %v1941
        %v1943 = vand.u32 %v1942, 4294901760
        %1944 = vmatpush.msra.mxu0 %v1943
        %v1945 = vand.u32 %v1811, 4294901760
        %v1946 = vsub.f32 %v1811, %v1945
        %v1947 = vand.u32 %v1946, 4294901760
        %v1948 = vsub.f32 %v1946, %v1947
        %v1949 = vand.u32 %v1948, 4294901760
        %1950 = vmatpush.msra.mxu0 %v1949
        %v1951 = vand.u32 %v1810, 4294901760
        %v1952 = vsub.f32 %v1810, %v1951
        %v1953 = vand.u32 %v1952, 4294901760
        %v1954 = vsub.f32 %v1952, %v1953
        %v1955 = vand.u32 %v1954, 4294901760
        %1956 = vmatpush.msra.mxu0 %v1955
        %v1957 = vand.u32 %v1809, 4294901760
        %v1958 = vsub.f32 %v1809, %v1957
        %v1959 = vand.u32 %v1958, 4294901760
        %v1960 = vsub.f32 %v1958, %v1959
        %v1961 = vand.u32 %v1960, 4294901760
        %1962 = vmatpush.msra.mxu0 %v1961
        %v1963 = vand.u32 %v1807, 4294901760
        %1964 = vmatmul.f32.gmra.mxu0 %v1963
        %v1965 = vpop.f32.mrf.mxu0
        %v1966 = vadd.f32 %v1865, %v1965
        %1967 = vdwg.mxu0
        %v1968 = vand.u32 %v1824, 4294901760
        %v1969 = vsub.f32 %v1824, %v1968
        %1970 = vmatpush.msra.mxu0 %v1969
        %v1971 = vand.u32 %v1823, 4294901760
        %v1972 = vsub.f32 %v1823, %v1971
        %1973 = vmatpush.msra.mxu0 %v1972
        %v1974 = vand.u32 %v1822, 4294901760
        %v1975 = vsub.f32 %v1822, %v1974
        %1976 = vmatpush.msra.mxu0 %v1975
        %v1977 = vand.u32 %v1821, 4294901760
        %v1978 = vsub.f32 %v1821, %v1977
        %1979 = vmatpush.msra.mxu0 %v1978
        %v1980 = vand.u32 %v1820, 4294901760
        %v1981 = vsub.f32 %v1820, %v1980
        %1982 = vmatpush.msra.mxu0 %v1981
        %v1983 = vand.u32 %v1819, 4294901760
        %v1984 = vsub.f32 %v1819, %v1983
        %1985 = vmatpush.msra.mxu0 %v1984
        %v1986 = vand.u32 %v1818, 4294901760
        %v1987 = vsub.f32 %v1818, %v1986
        %1988 = vmatpush.msra.mxu0 %v1987
        %v1989 = vand.u32 %v1817, 4294901760
        %v1990 = vsub.f32 %v1817, %v1989
        %1991 = vmatpush.msra.mxu0 %v1990
        %v1992 = vand.u32 %v1816, 4294901760
        %v1993 = vsub.f32 %v1816, %v1992
        %1994 = vmatpush.msra.mxu0 %v1993
        %v1995 = vand.u32 %v1815, 4294901760
        %v1996 = vsub.f32 %v1815, %v1995
        %1997 = vmatpush.msra.mxu0 %v1996
        %v1998 = vand.u32 %v1814, 4294901760
        %v1999 = vsub.f32 %v1814, %v1998
        %2000 = vmatpush.msra.mxu0 %v1999
        %v2001 = vand.u32 %v1813, 4294901760
        %v2002 = vsub.f32 %v1813, %v2001
        %2003 = vmatpush.msra.mxu0 %v2002
        %v2004 = vand.u32 %v1812, 4294901760
        %v2005 = vsub.f32 %v1812, %v2004
        %2006 = vmatpush.msra.mxu0 %v2005
        %v2007 = vand.u32 %v1811, 4294901760
        %v2008 = vsub.f32 %v1811, %v2007
        %2009 = vmatpush.msra.mxu0 %v2008
        %v2010 = vand.u32 %v1810, 4294901760
        %v2011 = vsub.f32 %v1810, %v2010
        %2012 = vmatpush.msra.mxu0 %v2011
        %v2013 = vand.u32 %v1809, 4294901760
        %v2014 = vsub.f32 %v1809, %v2013
        %2015 = vmatpush.msra.mxu0 %v2014
        %v2016 = vand.u32 %v1807, 4294901760
        %v2017 = vsub.f32 %v1807, %v2016
        %2018 = vmatmul.f32.gmra.mxu0 %v2017
        %v2019 = vpop.f32.mrf.mxu0
        %v2020 = vadd.f32 %v1966, %v2019
        %2021 = vdwg.mxu0
        %v2022 = vand.u32 %v1824, 4294901760
        %2023 = vmatpush.msra.mxu0 %v2022
        %v2024 = vand.u32 %v1823, 4294901760
        %2025 = vmatpush.msra.mxu0 %v2024
        %v2026 = vand.u32 %v1822, 4294901760
        %2027 = vmatpush.msra.mxu0 %v2026
        %v2028 = vand.u32 %v1821, 4294901760
        %2029 = vmatpush.msra.mxu0 %v2028
        %v2030 = vand.u32 %v1820, 4294901760
        %2031 = vmatpush.msra.mxu0 %v2030
        %v2032 = vand.u32 %v1819, 4294901760
        %2033 = vmatpush.msra.mxu0 %v2032
        %v2034 = vand.u32 %v1818, 4294901760
        %2035 = vmatpush.msra.mxu0 %v2034
        %v2036 = vand.u32 %v1817, 4294901760
        %2037 = vmatpush.msra.mxu0 %v2036
        %v2038 = vand.u32 %v1816, 4294901760
        %2039 = vmatpush.msra.mxu0 %v2038
        %v2040 = vand.u32 %v1815, 4294901760
        %2041 = vmatpush.msra.mxu0 %v2040
        %v2042 = vand.u32 %v1814, 4294901760
        %2043 = vmatpush.msra.mxu0 %v2042
        %v2044 = vand.u32 %v1813, 4294901760
        %2045 = vmatpush.msra.mxu0 %v2044
        %v2046 = vand.u32 %v1812, 4294901760
        %2047 = vmatpush.msra.mxu0 %v2046
        %v2048 = vand.u32 %v1811, 4294901760
        %2049 = vmatpush.msra.mxu0 %v2048
        %v2050 = vand.u32 %v1810, 4294901760
        %2051 = vmatpush.msra.mxu0 %v2050
        %v2052 = vand.u32 %v1809, 4294901760
        %2053 = vmatpush.msra.mxu0 %v2052
        %v2054 = vand.u32 %v1807, 4294901760
        %v2055 = vsub.f32 %v1807, %v2054
        %v2056 = vand.u32 %v2055, 4294901760
        %2057 = vmatmul.f32.gmra.mxu0 %v2056
        %v2058 = vpop.f32.mrf.mxu0
        %v2059 = vadd.f32 %v2020, %v2058
        %2060 = vdwg.mxu0
        %v2061 = vand.u32 %v1824, 4294901760
        %v2062 = vsub.f32 %v1824, %v2061
        %v2063 = vand.u32 %v2062, 4294901760
        %2064 = vmatpush.msra.mxu0 %v2063
        %v2065 = vand.u32 %v1823, 4294901760
        %v2066 = vsub.f32 %v1823, %v2065
        %v2067 = vand.u32 %v2066, 4294901760
        %2068 = vmatpush.msra.mxu0 %v2067
        %v2069 = vand.u32 %v1822, 4294901760
        %v2070 = vsub.f32 %v1822, %v2069
        %v2071 = vand.u32 %v2070, 4294901760
        %2072 = vmatpush.msra.mxu0 %v2071
        %v2073 = vand.u32 %v1821, 4294901760
        %v2074 = vsub.f32 %v1821, %v2073
        %v2075 = vand.u32 %v2074, 4294901760
        %2076 = vmatpush.msra.mxu0 %v2075
        %v2077 = vand.u32 %v1820, 4294901760
        %v2078 = vsub.f32 %v1820, %v2077
        %v2079 = vand.u32 %v2078, 4294901760
        %2080 = vmatpush.msra.mxu0 %v2079
        %v2081 = vand.u32 %v1819, 4294901760
        %v2082 = vsub.f32 %v1819, %v2081
        %v2083 = vand.u32 %v2082, 4294901760
        %2084 = vmatpush.msra.mxu0 %v2083
        %v2085 = vand.u32 %v1818, 4294901760
        %v2086 = vsub.f32 %v1818, %v2085
        %v2087 = vand.u32 %v2086, 4294901760
        %2088 = vmatpush.msra.mxu0 %v2087
        %v2089 = vand.u32 %v1817, 4294901760
        %v2090 = vsub.f32 %v1817, %v2089
        %v2091 = vand.u32 %v2090, 4294901760
        %2092 = vmatpush.msra.mxu0 %v2091
        %v2093 = vand.u32 %v1816, 4294901760
        %v2094 = vsub.f32 %v1816, %v2093
        %v2095 = vand.u32 %v2094, 4294901760
        %2096 = vmatpush.msra.mxu0 %v2095
        %v2097 = vand.u32 %v1815, 4294901760
        %v2098 = vsub.f32 %v1815, %v2097
        %v2099 = vand.u32 %v2098, 4294901760
        %2100 = vmatpush.msra.mxu0 %v2099
        %v2101 = vand.u32 %v1814, 4294901760
        %v2102 = vsub.f32 %v1814, %v2101
        %v2103 = vand.u32 %v2102, 4294901760
        %2104 = vmatpush.msra.mxu0 %v2103
        %v2105 = vand.u32 %v1813, 4294901760
        %v2106 = vsub.f32 %v1813, %v2105
        %v2107 = vand.u32 %v2106, 4294901760
        %2108 = vmatpush.msra.mxu0 %v2107
        %v2109 = vand.u32 %v1812, 4294901760
        %v2110 = vsub.f32 %v1812, %v2109
        %v2111 = vand.u32 %v2110, 4294901760
        %2112 = vmatpush.msra.mxu0 %v2111
        %v2113 = vand.u32 %v1811, 4294901760
        %v2114 = vsub.f32 %v1811, %v2113
        %v2115 = vand.u32 %v2114, 4294901760
        %2116 = vmatpush.msra.mxu0 %v2115
        %v2117 = vand.u32 %v1810, 4294901760
        %v2118 = vsub.f32 %v1810, %v2117
        %v2119 = vand.u32 %v2118, 4294901760
        %2120 = vmatpush.msra.mxu0 %v2119
        %v2121 = vand.u32 %v1809, 4294901760
        %v2122 = vsub.f32 %v1809, %v2121
        %v2123 = vand.u32 %v2122, 4294901760
        %2124 = vmatpush.msra.mxu0 %v2123
        %v2125 = vand.u32 %v1807, 4294901760
        %2126 = vmatmul.f32.gmra.mxu0 %v2125
        %v2127 = vpop.f32.mrf.mxu0
        %v2128 = vadd.f32 %v2059, %v2127
        %2129 = vdwg.mxu0
        %v2130 = vand.u32 %v1824, 4294901760
        %2131 = vmatpush.msra.mxu0 %v2130
        %v2132 = vand.u32 %v1823, 4294901760
        %2133 = vmatpush.msra.mxu0 %v2132
        %v2134 = vand.u32 %v1822, 4294901760
        %2135 = vmatpush.msra.mxu0 %v2134
        %v2136 = vand.u32 %v1821, 4294901760
        %2137 = vmatpush.msra.mxu0 %v2136
        %v2138 = vand.u32 %v1820, 4294901760
        %2139 = vmatpush.msra.mxu0 %v2138
        %v2140 = vand.u32 %v1819, 4294901760
        %2141 = vmatpush.msra.mxu0 %v2140
        %v2142 = vand.u32 %v1818, 4294901760
        %2143 = vmatpush.msra.mxu0 %v2142
        %v2144 = vand.u32 %v1817, 4294901760
        %2145 = vmatpush.msra.mxu0 %v2144
        %v2146 = vand.u32 %v1816, 4294901760
        %2147 = vmatpush.msra.mxu0 %v2146
        %v2148 = vand.u32 %v1815, 4294901760
        %2149 = vmatpush.msra.mxu0 %v2148
        %v2150 = vand.u32 %v1814, 4294901760
        %2151 = vmatpush.msra.mxu0 %v2150
        %v2152 = vand.u32 %v1813, 4294901760
        %2153 = vmatpush.msra.mxu0 %v2152
        %v2154 = vand.u32 %v1812, 4294901760
        %2155 = vmatpush.msra.mxu0 %v2154
        %v2156 = vand.u32 %v1811, 4294901760
        %2157 = vmatpush.msra.mxu0 %v2156
        %v2158 = vand.u32 %v1810, 4294901760
        %2159 = vmatpush.msra.mxu0 %v2158
        %v2160 = vand.u32 %v1809, 4294901760
        %2161 = vmatpush.msra.mxu0 %v2160
        %v2162 = vand.u32 %v1807, 4294901760
        %2163 = vmatmul.f32.gmra.mxu0 %v2162
        %v2164 = vpop.f32.mrf.mxu0
        %v2165 = vadd.f32 %v2128, %v2164
        %2166 = vdwg.mxu0
        %v2167 = vmax.f32 %v2165, 0.0
        %s2168 = scalar_lea.vmem [#allocation9], 256
        %v2169 = vld [vmem:[%s2168] sm:$0xff]
        %v2170 = vld [vmem:[%s2168 + $0x8] sm:$0xff]
        %v2171 = vld [vmem:[%s2168 + $0x10] sm:$0xff]
        %v2172 = vld [vmem:[%s2168 + $0x18] sm:$0xff]
        %v2173 = vld [vmem:[%s2168 + $0x20] sm:$0xff]
        %v2174 = vld [vmem:[%s2168 + $0x28] sm:$0xff]
        %v2175 = vld [vmem:[%s2168 + $0x30] sm:$0xff]
        %v2176 = vld [vmem:[%s2168 + $0x38] sm:$0xff]
        %v2177 = vld [vmem:[%s2168 + $0x40] sm:$0xff]
        %v2178 = vld [vmem:[%s2168 + $0x48] sm:$0xff]
        %v2179 = vld [vmem:[%s2168 + $0x50] sm:$0xff]
        %v2180 = vld [vmem:[%s2168 + $0x58] sm:$0xff]
        %v2181 = vld [vmem:[%s2168 + $0x60] sm:$0xff]
        %v2182 = vld [vmem:[%s2168 + $0x68] sm:$0xff]
        %v2183 = vld [vmem:[%s2168 + $0x70] sm:$0xff]
        %v2184 = vld [vmem:[%s2168 + $0x78] sm:$0xff]
        %v2185 = vperm.slane %v1448, 2
        %v2186 = vand.u32 %v2184, 4294901760
        %2187 = vmatpush.msra.mxu0 %v2186
        %v2188 = vand.u32 %v2183, 4294901760
        %2189 = vmatpush.msra.mxu0 %v2188
        %v2190 = vand.u32 %v2182, 4294901760
        %2191 = vmatpush.msra.mxu0 %v2190
        %v2192 = vand.u32 %v2181, 4294901760
        %2193 = vmatpush.msra.mxu0 %v2192
        %v2194 = vand.u32 %v2180, 4294901760
        %2195 = vmatpush.msra.mxu0 %v2194
        %v2196 = vand.u32 %v2179, 4294901760
        %2197 = vmatpush.msra.mxu0 %v2196
        %v2198 = vand.u32 %v2178, 4294901760
        %2199 = vmatpush.msra.mxu0 %v2198
        %v2200 = vand.u32 %v2177, 4294901760
        %2201 = vmatpush.msra.mxu0 %v2200
        %v2202 = vand.u32 %v2176, 4294901760
        %2203 = vmatpush.msra.mxu0 %v2202
        %v2204 = vand.u32 %v2175, 4294901760
        %2205 = vmatpush.msra.mxu0 %v2204
        %v2206 = vand.u32 %v2174, 4294901760
        %2207 = vmatpush.msra.mxu0 %v2206
        %v2208 = vand.u32 %v2173, 4294901760
        %2209 = vmatpush.msra.mxu0 %v2208
        %v2210 = vand.u32 %v2172, 4294901760
        %2211 = vmatpush.msra.mxu0 %v2210
        %v2212 = vand.u32 %v2171, 4294901760
        %2213 = vmatpush.msra.mxu0 %v2212
        %v2214 = vand.u32 %v2170, 4294901760
        %2215 = vmatpush.msra.mxu0 %v2214
        %v2216 = vand.u32 %v2169, 4294901760
        %2217 = vmatpush.msra.mxu0 %v2216
        %v2218 = vand.u32 %v1442, 4294901760
        %v2219 = vsub.f32 %v1442, %v2218
        %v2220 = vand.u32 %v2219, 4294901760
        %v2221 = vsub.f32 %v2219, %v2220
        %v2222 = vand.u32 %v2221, 4294901760
        %2223 = vmatmul.f32.gmra.mxu0 %v2222
        %v2224 = vpop.f32.mrf.mxu0
        %v2225 = vadd.f32 %v2185, %v2224
        %2226 = vdwg.mxu0
        %v2227 = vand.u32 %v2184, 4294901760
        %v2228 = vsub.f32 %v2184, %v2227
        %v2229 = vand.u32 %v2228, 4294901760
        %v2230 = vsub.f32 %v2228, %v2229
        %v2231 = vand.u32 %v2230, 4294901760
        %2232 = vmatpush.msra.mxu0 %v2231
        %v2233 = vand.u32 %v2183, 4294901760
        %v2234 = vsub.f32 %v2183, %v2233
        %v2235 = vand.u32 %v2234, 4294901760
        %v2236 = vsub.f32 %v2234, %v2235
        %v2237 = vand.u32 %v2236, 4294901760
        %2238 = vmatpush.msra.mxu0 %v2237
        %v2239 = vand.u32 %v2182, 4294901760
        %v2240 = vsub.f32 %v2182, %v2239
        %v2241 = vand.u32 %v2240, 4294901760
        %v2242 = vsub.f32 %v2240, %v2241
        %v2243 = vand.u32 %v2242, 4294901760
        %2244 = vmatpush.msra.mxu0 %v2243
        %v2245 = vand.u32 %v2181, 4294901760
        %v2246 = vsub.f32 %v2181, %v2245
        %v2247 = vand.u32 %v2246, 4294901760
        %v2248 = vsub.f32 %v2246, %v2247
        %v2249 = vand.u32 %v2248, 4294901760
        %2250 = vmatpush.msra.mxu0 %v2249
        %v2251 = vand.u32 %v2180, 4294901760
        %v2252 = vsub.f32 %v2180, %v2251
        %v2253 = vand.u32 %v2252, 4294901760
        %v2254 = vsub.f32 %v2252, %v2253
        %v2255 = vand.u32 %v2254, 4294901760
        %2256 = vmatpush.msra.mxu0 %v2255
        %v2257 = vand.u32 %v2179, 4294901760
        %v2258 = vsub.f32 %v2179, %v2257
        %v2259 = vand.u32 %v2258, 4294901760
        %v2260 = vsub.f32 %v2258, %v2259
        %v2261 = vand.u32 %v2260, 4294901760
        %2262 = vmatpush.msra.mxu0 %v2261
        %v2263 = vand.u32 %v2178, 4294901760
        %v2264 = vsub.f32 %v2178, %v2263
        %v2265 = vand.u32 %v2264, 4294901760
        %v2266 = vsub.f32 %v2264, %v2265
        %v2267 = vand.u32 %v2266, 4294901760
        %2268 = vmatpush.msra.mxu0 %v2267
        %v2269 = vand.u32 %v2177, 4294901760
        %v2270 = vsub.f32 %v2177, %v2269
        %v2271 = vand.u32 %v2270, 4294901760
        %v2272 = vsub.f32 %v2270, %v2271
        %v2273 = vand.u32 %v2272, 4294901760
        %2274 = vmatpush.msra.mxu0 %v2273
        %v2275 = vand.u32 %v2176, 4294901760
        %v2276 = vsub.f32 %v2176, %v2275
        %v2277 = vand.u32 %v2276, 4294901760
        %v2278 = vsub.f32 %v2276, %v2277
        %v2279 = vand.u32 %v2278, 4294901760
        %2280 = vmatpush.msra.mxu0 %v2279
        %v2281 = vand.u32 %v2175, 4294901760
        %v2282 = vsub.f32 %v2175, %v2281
        %v2283 = vand.u32 %v2282, 4294901760
        %v2284 = vsub.f32 %v2282, %v2283
        %v2285 = vand.u32 %v2284, 4294901760
        %2286 = vmatpush.msra.mxu0 %v2285
        %v2287 = vand.u32 %v2174, 4294901760
        %v2288 = vsub.f32 %v2174, %v2287
        %v2289 = vand.u32 %v2288, 4294901760
        %v2290 = vsub.f32 %v2288, %v2289
        %v2291 = vand.u32 %v2290, 4294901760
        %2292 = vmatpush.msra.mxu0 %v2291
        %v2293 = vand.u32 %v2173, 4294901760
        %v2294 = vsub.f32 %v2173, %v2293
        %v2295 = vand.u32 %v2294, 4294901760
        %v2296 = vsub.f32 %v2294, %v2295
        %v2297 = vand.u32 %v2296, 4294901760
        %2298 = vmatpush.msra.mxu0 %v2297
        %v2299 = vand.u32 %v2172, 4294901760
        %v2300 = vsub.f32 %v2172, %v2299
        %v2301 = vand.u32 %v2300, 4294901760
        %v2302 = vsub.f32 %v2300, %v2301
        %v2303 = vand.u32 %v2302, 4294901760
        %2304 = vmatpush.msra.mxu0 %v2303
        %v2305 = vand.u32 %v2171, 4294901760
        %v2306 = vsub.f32 %v2171, %v2305
        %v2307 = vand.u32 %v2306, 4294901760
        %v2308 = vsub.f32 %v2306, %v2307
        %v2309 = vand.u32 %v2308, 4294901760
        %2310 = vmatpush.msra.mxu0 %v2309
        %v2311 = vand.u32 %v2170, 4294901760
        %v2312 = vsub.f32 %v2170, %v2311
        %v2313 = vand.u32 %v2312, 4294901760
        %v2314 = vsub.f32 %v2312, %v2313
        %v2315 = vand.u32 %v2314, 4294901760
        %2316 = vmatpush.msra.mxu0 %v2315
        %v2317 = vand.u32 %v2169, 4294901760
        %v2318 = vsub.f32 %v2169, %v2317
        %v2319 = vand.u32 %v2318, 4294901760
        %v2320 = vsub.f32 %v2318, %v2319
        %v2321 = vand.u32 %v2320, 4294901760
        %2322 = vmatpush.msra.mxu0 %v2321
        %v2323 = vand.u32 %v1442, 4294901760
        %2324 = vmatmul.f32.gmra.mxu0 %v2323
        %v2325 = vpop.f32.mrf.mxu0
        %v2326 = vadd.f32 %v2225, %v2325
        %2327 = vdwg.mxu0
        %v2328 = vand.u32 %v2184, 4294901760
        %v2329 = vsub.f32 %v2184, %v2328
        %2330 = vmatpush.msra.mxu0 %v2329
        %v2331 = vand.u32 %v2183, 4294901760
        %v2332 = vsub.f32 %v2183, %v2331
        %2333 = vmatpush.msra.mxu0 %v2332
        %v2334 = vand.u32 %v2182, 4294901760
        %v2335 = vsub.f32 %v2182, %v2334
        %2336 = vmatpush.msra.mxu0 %v2335
        %v2337 = vand.u32 %v2181, 4294901760
        %v2338 = vsub.f32 %v2181, %v2337
        %2339 = vmatpush.msra.mxu0 %v2338
        %v2340 = vand.u32 %v2180, 4294901760
        %v2341 = vsub.f32 %v2180, %v2340
        %2342 = vmatpush.msra.mxu0 %v2341
        %v2343 = vand.u32 %v2179, 4294901760
        %v2344 = vsub.f32 %v2179, %v2343
        %2345 = vmatpush.msra.mxu0 %v2344
        %v2346 = vand.u32 %v2178, 4294901760
        %v2347 = vsub.f32 %v2178, %v2346
        %2348 = vmatpush.msra.mxu0 %v2347
        %v2349 = vand.u32 %v2177, 4294901760
        %v2350 = vsub.f32 %v2177, %v2349
        %2351 = vmatpush.msra.mxu0 %v2350
        %v2352 = vand.u32 %v2176, 4294901760
        %v2353 = vsub.f32 %v2176, %v2352
        %2354 = vmatpush.msra.mxu0 %v2353
        %v2355 = vand.u32 %v2175, 4294901760
        %v2356 = vsub.f32 %v2175, %v2355
        %2357 = vmatpush.msra.mxu0 %v2356
        %v2358 = vand.u32 %v2174, 4294901760
        %v2359 = vsub.f32 %v2174, %v2358
        %2360 = vmatpush.msra.mxu0 %v2359
        %v2361 = vand.u32 %v2173, 4294901760
        %v2362 = vsub.f32 %v2173, %v2361
        %2363 = vmatpush.msra.mxu0 %v2362
        %v2364 = vand.u32 %v2172, 4294901760
        %v2365 = vsub.f32 %v2172, %v2364
        %2366 = vmatpush.msra.mxu0 %v2365
        %v2367 = vand.u32 %v2171, 4294901760
        %v2368 = vsub.f32 %v2171, %v2367
        %2369 = vmatpush.msra.mxu0 %v2368
        %v2370 = vand.u32 %v2170, 4294901760
        %v2371 = vsub.f32 %v2170, %v2370
        %2372 = vmatpush.msra.mxu0 %v2371
        %v2373 = vand.u32 %v2169, 4294901760
        %v2374 = vsub.f32 %v2169, %v2373
        %2375 = vmatpush.msra.mxu0 %v2374
        %v2376 = vand.u32 %v1442, 4294901760
        %v2377 = vsub.f32 %v1442, %v2376
        %2378 = vmatmul.f32.gmra.mxu0 %v2377
        %v2379 = vpop.f32.mrf.mxu0
        %v2380 = vadd.f32 %v2326, %v2379
        %2381 = vdwg.mxu0
        %v2382 = vand.u32 %v2184, 4294901760
        %2383 = vmatpush.msra.mxu0 %v2382
        %v2384 = vand.u32 %v2183, 4294901760
        %2385 = vmatpush.msra.mxu0 %v2384
        %v2386 = vand.u32 %v2182, 4294901760
        %2387 = vmatpush.msra.mxu0 %v2386
        %v2388 = vand.u32 %v2181, 4294901760
        %2389 = vmatpush.msra.mxu0 %v2388
        %v2390 = vand.u32 %v2180, 4294901760
        %2391 = vmatpush.msra.mxu0 %v2390
        %v2392 = vand.u32 %v2179, 4294901760
        %2393 = vmatpush.msra.mxu0 %v2392
        %v2394 = vand.u32 %v2178, 4294901760
        %2395 = vmatpush.msra.mxu0 %v2394
        %v2396 = vand.u32 %v2177, 4294901760
        %2397 = vmatpush.msra.mxu0 %v2396
        %v2398 = vand.u32 %v2176, 4294901760
        %2399 = vmatpush.msra.mxu0 %v2398
        %v2400 = vand.u32 %v2175, 4294901760
        %2401 = vmatpush.msra.mxu0 %v2400
        %v2402 = vand.u32 %v2174, 4294901760
        %2403 = vmatpush.msra.mxu0 %v2402
        %v2404 = vand.u32 %v2173, 4294901760
        %2405 = vmatpush.msra.mxu0 %v2404
        %v2406 = vand.u32 %v2172, 4294901760
        %2407 = vmatpush.msra.mxu0 %v2406
        %v2408 = vand.u32 %v2171, 4294901760
        %2409 = vmatpush.msra.mxu0 %v2408
        %v2410 = vand.u32 %v2170, 4294901760
        %2411 = vmatpush.msra.mxu0 %v2410
        %v2412 = vand.u32 %v2169, 4294901760
        %2413 = vmatpush.msra.mxu0 %v2412
        %v2414 = vand.u32 %v1442, 4294901760
        %v2415 = vsub.f32 %v1442, %v2414
        %v2416 = vand.u32 %v2415, 4294901760
        %2417 = vmatmul.f32.gmra.mxu0 %v2416
        %v2418 = vpop.f32.mrf.mxu0
        %v2419 = vadd.f32 %v2380, %v2418
        %2420 = vdwg.mxu0
        %v2421 = vand.u32 %v2184, 4294901760
        %v2422 = vsub.f32 %v2184, %v2421
        %v2423 = vand.u32 %v2422, 4294901760
        %2424 = vmatpush.msra.mxu0 %v2423
        %v2425 = vand.u32 %v2183, 4294901760
        %v2426 = vsub.f32 %v2183, %v2425
        %v2427 = vand.u32 %v2426, 4294901760
        %2428 = vmatpush.msra.mxu0 %v2427
        %v2429 = vand.u32 %v2182, 4294901760
        %v2430 = vsub.f32 %v2182, %v2429
        %v2431 = vand.u32 %v2430, 4294901760
        %2432 = vmatpush.msra.mxu0 %v2431
        %v2433 = vand.u32 %v2181, 4294901760
        %v2434 = vsub.f32 %v2181, %v2433
        %v2435 = vand.u32 %v2434, 4294901760
        %2436 = vmatpush.msra.mxu0 %v2435
        %v2437 = vand.u32 %v2180, 4294901760
        %v2438 = vsub.f32 %v2180, %v2437
        %v2439 = vand.u32 %v2438, 4294901760
        %2440 = vmatpush.msra.mxu0 %v2439
        %v2441 = vand.u32 %v2179, 4294901760
        %v2442 = vsub.f32 %v2179, %v2441
        %v2443 = vand.u32 %v2442, 4294901760
        %2444 = vmatpush.msra.mxu0 %v2443
        %v2445 = vand.u32 %v2178, 4294901760
        %v2446 = vsub.f32 %v2178, %v2445
        %v2447 = vand.u32 %v2446, 4294901760
        %2448 = vmatpush.msra.mxu0 %v2447
        %v2449 = vand.u32 %v2177, 4294901760
        %v2450 = vsub.f32 %v2177, %v2449
        %v2451 = vand.u32 %v2450, 4294901760
        %2452 = vmatpush.msra.mxu0 %v2451
        %v2453 = vand.u32 %v2176, 4294901760
        %v2454 = vsub.f32 %v2176, %v2453
        %v2455 = vand.u32 %v2454, 4294901760
        %2456 = vmatpush.msra.mxu0 %v2455
        %v2457 = vand.u32 %v2175, 4294901760
        %v2458 = vsub.f32 %v2175, %v2457
        %v2459 = vand.u32 %v2458, 4294901760
        %2460 = vmatpush.msra.mxu0 %v2459
        %v2461 = vand.u32 %v2174, 4294901760
        %v2462 = vsub.f32 %v2174, %v2461
        %v2463 = vand.u32 %v2462, 4294901760
        %2464 = vmatpush.msra.mxu0 %v2463
        %v2465 = vand.u32 %v2173, 4294901760
        %v2466 = vsub.f32 %v2173, %v2465
        %v2467 = vand.u32 %v2466, 4294901760
        %2468 = vmatpush.msra.mxu0 %v2467
        %v2469 = vand.u32 %v2172, 4294901760
        %v2470 = vsub.f32 %v2172, %v2469
        %v2471 = vand.u32 %v2470, 4294901760
        %2472 = vmatpush.msra.mxu0 %v2471
        %v2473 = vand.u32 %v2171, 4294901760
        %v2474 = vsub.f32 %v2171, %v2473
        %v2475 = vand.u32 %v2474, 4294901760
        %2476 = vmatpush.msra.mxu0 %v2475
        %v2477 = vand.u32 %v2170, 4294901760
        %v2478 = vsub.f32 %v2170, %v2477
        %v2479 = vand.u32 %v2478, 4294901760
        %2480 = vmatpush.msra.mxu0 %v2479
        %v2481 = vand.u32 %v2169, 4294901760
        %v2482 = vsub.f32 %v2169, %v2481
        %v2483 = vand.u32 %v2482, 4294901760
        %2484 = vmatpush.msra.mxu0 %v2483
        %v2485 = vand.u32 %v1442, 4294901760
        %2486 = vmatmul.f32.gmra.mxu0 %v2485
        %v2487 = vpop.f32.mrf.mxu0
        %v2488 = vadd.f32 %v2419, %v2487
        %2489 = vdwg.mxu0
        %v2490 = vand.u32 %v2184, 4294901760
        %2491 = vmatpush.msra.mxu0 %v2490
        %v2492 = vand.u32 %v2183, 4294901760
        %2493 = vmatpush.msra.mxu0 %v2492
        %v2494 = vand.u32 %v2182, 4294901760
        %2495 = vmatpush.msra.mxu0 %v2494
        %v2496 = vand.u32 %v2181, 4294901760
        %2497 = vmatpush.msra.mxu0 %v2496
        %v2498 = vand.u32 %v2180, 4294901760
        %2499 = vmatpush.msra.mxu0 %v2498
        %v2500 = vand.u32 %v2179, 4294901760
        %2501 = vmatpush.msra.mxu0 %v2500
        %v2502 = vand.u32 %v2178, 4294901760
        %2503 = vmatpush.msra.mxu0 %v2502
        %v2504 = vand.u32 %v2177, 4294901760
        %2505 = vmatpush.msra.mxu0 %v2504
        %v2506 = vand.u32 %v2176, 4294901760
        %2507 = vmatpush.msra.mxu0 %v2506
        %v2508 = vand.u32 %v2175, 4294901760
        %2509 = vmatpush.msra.mxu0 %v2508
        %v2510 = vand.u32 %v2174, 4294901760
        %2511 = vmatpush.msra.mxu0 %v2510
        %v2512 = vand.u32 %v2173, 4294901760
        %2513 = vmatpush.msra.mxu0 %v2512
        %v2514 = vand.u32 %v2172, 4294901760
        %2515 = vmatpush.msra.mxu0 %v2514
        %v2516 = vand.u32 %v2171, 4294901760
        %2517 = vmatpush.msra.mxu0 %v2516
        %v2518 = vand.u32 %v2170, 4294901760
        %2519 = vmatpush.msra.mxu0 %v2518
        %v2520 = vand.u32 %v2169, 4294901760
        %2521 = vmatpush.msra.mxu0 %v2520
        %v2522 = vand.u32 %v1442, 4294901760
        %2523 = vmatmul.f32.gmra.mxu0 %v2522
        %v2524 = vpop.f32.mrf.mxu0
        %v2525 = vadd.f32 %v2488, %v2524
        %2526 = vdwg.mxu0
        %v2527 = vmax.f32 %v2525, 0.0
        %s2528 = scalar_lea.vmem [#allocation9], 384
        %v2529 = vld [vmem:[%s2528] sm:$0xff]
        %v2530 = vld [vmem:[%s2528 + $0x8] sm:$0xff]
        %v2531 = vld [vmem:[%s2528 + $0x10] sm:$0xff]
        %v2532 = vld [vmem:[%s2528 + $0x18] sm:$0xff]
        %v2533 = vld [vmem:[%s2528 + $0x20] sm:$0xff]
        %v2534 = vld [vmem:[%s2528 + $0x28] sm:$0xff]
        %v2535 = vld [vmem:[%s2528 + $0x30] sm:$0xff]
        %v2536 = vld [vmem:[%s2528 + $0x38] sm:$0xff]
        %v2537 = vld [vmem:[%s2528 + $0x40] sm:$0xff]
        %v2538 = vld [vmem:[%s2528 + $0x48] sm:$0xff]
        %v2539 = vld [vmem:[%s2528 + $0x50] sm:$0xff]
        %v2540 = vld [vmem:[%s2528 + $0x58] sm:$0xff]
        %v2541 = vld [vmem:[%s2528 + $0x60] sm:$0xff]
        %v2542 = vld [vmem:[%s2528 + $0x68] sm:$0xff]
        %v2543 = vld [vmem:[%s2528 + $0x70] sm:$0xff]
        %v2544 = vld [vmem:[%s2528 + $0x78] sm:$0xff]
        %v2545 = vperm.slane %v1448, 3
        %v2546 = vand.u32 %v2544, 4294901760
        %2547 = vmatpush.msra.mxu0 %v2546
        %v2548 = vand.u32 %v2543, 4294901760
        %2549 = vmatpush.msra.mxu0 %v2548
        %v2550 = vand.u32 %v2542, 4294901760
        %2551 = vmatpush.msra.mxu0 %v2550
        %v2552 = vand.u32 %v2541, 4294901760
        %2553 = vmatpush.msra.mxu0 %v2552
        %v2554 = vand.u32 %v2540, 4294901760
        %2555 = vmatpush.msra.mxu0 %v2554
        %v2556 = vand.u32 %v2539, 4294901760
        %2557 = vmatpush.msra.mxu0 %v2556
        %v2558 = vand.u32 %v2538, 4294901760
        %2559 = vmatpush.msra.mxu0 %v2558
        %v2560 = vand.u32 %v2537, 4294901760
        %2561 = vmatpush.msra.mxu0 %v2560
        %v2562 = vand.u32 %v2536, 4294901760
        %2563 = vmatpush.msra.mxu0 %v2562
        %v2564 = vand.u32 %v2535, 4294901760
        %2565 = vmatpush.msra.mxu0 %v2564
        %v2566 = vand.u32 %v2534, 4294901760
        %2567 = vmatpush.msra.mxu0 %v2566
        %v2568 = vand.u32 %v2533, 4294901760
        %2569 = vmatpush.msra.mxu0 %v2568
        %v2570 = vand.u32 %v2532, 4294901760
        %2571 = vmatpush.msra.mxu0 %v2570
        %v2572 = vand.u32 %v2531, 4294901760
        %2573 = vmatpush.msra.mxu0 %v2572
        %v2574 = vand.u32 %v2530, 4294901760
        %2575 = vmatpush.msra.mxu0 %v2574
        %v2576 = vand.u32 %v2529, 4294901760
        %2577 = vmatpush.msra.mxu0 %v2576
        %v2578 = vand.u32 %v2527, 4294901760
        %v2579 = vsub.f32 %v2527, %v2578
        %v2580 = vand.u32 %v2579, 4294901760
        %v2581 = vsub.f32 %v2579, %v2580
        %v2582 = vand.u32 %v2581, 4294901760
        %2583 = vmatmul.f32.gmra.mxu0 %v2582
        %v2584 = vpop.f32.mrf.mxu0
        %v2585 = vadd.f32 %v2545, %v2584
        %2586 = vdwg.mxu0
        %v2587 = vand.u32 %v2544, 4294901760
        %v2588 = vsub.f32 %v2544, %v2587
        %v2589 = vand.u32 %v2588, 4294901760
        %v2590 = vsub.f32 %v2588, %v2589
        %v2591 = vand.u32 %v2590, 4294901760
        %2592 = vmatpush.msra.mxu0 %v2591
        %v2593 = vand.u32 %v2543, 4294901760
        %v2594 = vsub.f32 %v2543, %v2593
        %v2595 = vand.u32 %v2594, 4294901760
        %v2596 = vsub.f32 %v2594, %v2595
        %v2597 = vand.u32 %v2596, 4294901760
        %2598 = vmatpush.msra.mxu0 %v2597
        %v2599 = vand.u32 %v2542, 4294901760
        %v2600 = vsub.f32 %v2542, %v2599
        %v2601 = vand.u32 %v2600, 4294901760
        %v2602 = vsub.f32 %v2600, %v2601
        %v2603 = vand.u32 %v2602, 4294901760
        %2604 = vmatpush.msra.mxu0 %v2603
        %v2605 = vand.u32 %v2541, 4294901760
        %v2606 = vsub.f32 %v2541, %v2605
        %v2607 = vand.u32 %v2606, 4294901760
        %v2608 = vsub.f32 %v2606, %v2607
        %v2609 = vand.u32 %v2608, 4294901760
        %2610 = vmatpush.msra.mxu0 %v2609
        %v2611 = vand.u32 %v2540, 4294901760
        %v2612 = vsub.f32 %v2540, %v2611
        %v2613 = vand.u32 %v2612, 4294901760
        %v2614 = vsub.f32 %v2612, %v2613
        %v2615 = vand.u32 %v2614, 4294901760
        %2616 = vmatpush.msra.mxu0 %v2615
        %v2617 = vand.u32 %v2539, 4294901760
        %v2618 = vsub.f32 %v2539, %v2617
        %v2619 = vand.u32 %v2618, 4294901760
        %v2620 = vsub.f32 %v2618, %v2619
        %v2621 = vand.u32 %v2620, 4294901760
        %2622 = vmatpush.msra.mxu0 %v2621
        %v2623 = vand.u32 %v2538, 4294901760
        %v2624 = vsub.f32 %v2538, %v2623
        %v2625 = vand.u32 %v2624, 4294901760
        %v2626 = vsub.f32 %v2624, %v2625
        %v2627 = vand.u32 %v2626, 4294901760
        %2628 = vmatpush.msra.mxu0 %v2627
        %v2629 = vand.u32 %v2537, 4294901760
        %v2630 = vsub.f32 %v2537, %v2629
        %v2631 = vand.u32 %v2630, 4294901760
        %v2632 = vsub.f32 %v2630, %v2631
        %v2633 = vand.u32 %v2632, 4294901760
        %2634 = vmatpush.msra.mxu0 %v2633
        %v2635 = vand.u32 %v2536, 4294901760
        %v2636 = vsub.f32 %v2536, %v2635
        %v2637 = vand.u32 %v2636, 4294901760
        %v2638 = vsub.f32 %v2636, %v2637
        %v2639 = vand.u32 %v2638, 4294901760
        %2640 = vmatpush.msra.mxu0 %v2639
        %v2641 = vand.u32 %v2535, 4294901760
        %v2642 = vsub.f32 %v2535, %v2641
        %v2643 = vand.u32 %v2642, 4294901760
        %v2644 = vsub.f32 %v2642, %v2643
        %v2645 = vand.u32 %v2644, 4294901760
        %2646 = vmatpush.msra.mxu0 %v2645
        %v2647 = vand.u32 %v2534, 4294901760
        %v2648 = vsub.f32 %v2534, %v2647
        %v2649 = vand.u32 %v2648, 4294901760
        %v2650 = vsub.f32 %v2648, %v2649
        %v2651 = vand.u32 %v2650, 4294901760
        %2652 = vmatpush.msra.mxu0 %v2651
        %v2653 = vand.u32 %v2533, 4294901760
        %v2654 = vsub.f32 %v2533, %v2653
        %v2655 = vand.u32 %v2654, 4294901760
        %v2656 = vsub.f32 %v2654, %v2655
        %v2657 = vand.u32 %v2656, 4294901760
        %2658 = vmatpush.msra.mxu0 %v2657
        %v2659 = vand.u32 %v2532, 4294901760
        %v2660 = vsub.f32 %v2532, %v2659
        %v2661 = vand.u32 %v2660, 4294901760
        %v2662 = vsub.f32 %v2660, %v2661
        %v2663 = vand.u32 %v2662, 4294901760
        %2664 = vmatpush.msra.mxu0 %v2663
        %v2665 = vand.u32 %v2531, 4294901760
        %v2666 = vsub.f32 %v2531, %v2665
        %v2667 = vand.u32 %v2666, 4294901760
        %v2668 = vsub.f32 %v2666, %v2667
        %v2669 = vand.u32 %v2668, 4294901760
        %2670 = vmatpush.msra.mxu0 %v2669
        %v2671 = vand.u32 %v2530, 4294901760
        %v2672 = vsub.f32 %v2530, %v2671
        %v2673 = vand.u32 %v2672, 4294901760
        %v2674 = vsub.f32 %v2672, %v2673
        %v2675 = vand.u32 %v2674, 4294901760
        %2676 = vmatpush.msra.mxu0 %v2675
        %v2677 = vand.u32 %v2529, 4294901760
        %v2678 = vsub.f32 %v2529, %v2677
        %v2679 = vand.u32 %v2678, 4294901760
        %v2680 = vsub.f32 %v2678, %v2679
        %v2681 = vand.u32 %v2680, 4294901760
        %2682 = vmatpush.msra.mxu0 %v2681
        %v2683 = vand.u32 %v2527, 4294901760
        %2684 = vmatmul.f32.gmra.mxu0 %v2683
        %v2685 = vpop.f32.mrf.mxu0
        %v2686 = vadd.f32 %v2585, %v2685
        %2687 = vdwg.mxu0
        %v2688 = vand.u32 %v2544, 4294901760
        %v2689 = vsub.f32 %v2544, %v2688
        %2690 = vmatpush.msra.mxu0 %v2689
        %v2691 = vand.u32 %v2543, 4294901760
        %v2692 = vsub.f32 %v2543, %v2691
        %2693 = vmatpush.msra.mxu0 %v2692
        %v2694 = vand.u32 %v2542, 4294901760
        %v2695 = vsub.f32 %v2542, %v2694
        %2696 = vmatpush.msra.mxu0 %v2695
        %v2697 = vand.u32 %v2541, 4294901760
        %v2698 = vsub.f32 %v2541, %v2697
        %2699 = vmatpush.msra.mxu0 %v2698
        %v2700 = vand.u32 %v2540, 4294901760
        %v2701 = vsub.f32 %v2540, %v2700
        %2702 = vmatpush.msra.mxu0 %v2701
        %v2703 = vand.u32 %v2539, 4294901760
        %v2704 = vsub.f32 %v2539, %v2703
        %2705 = vmatpush.msra.mxu0 %v2704
        %v2706 = vand.u32 %v2538, 4294901760
        %v2707 = vsub.f32 %v2538, %v2706
        %2708 = vmatpush.msra.mxu0 %v2707
        %v2709 = vand.u32 %v2537, 4294901760
        %v2710 = vsub.f32 %v2537, %v2709
        %2711 = vmatpush.msra.mxu0 %v2710
        %v2712 = vand.u32 %v2536, 4294901760
        %v2713 = vsub.f32 %v2536, %v2712
        %2714 = vmatpush.msra.mxu0 %v2713
        %v2715 = vand.u32 %v2535, 4294901760
        %v2716 = vsub.f32 %v2535, %v2715
        %2717 = vmatpush.msra.mxu0 %v2716
        %v2718 = vand.u32 %v2534, 4294901760
        %v2719 = vsub.f32 %v2534, %v2718
        %2720 = vmatpush.msra.mxu0 %v2719
        %v2721 = vand.u32 %v2533, 4294901760
        %v2722 = vsub.f32 %v2533, %v2721
        %2723 = vmatpush.msra.mxu0 %v2722
        %v2724 = vand.u32 %v2532, 4294901760
        %v2725 = vsub.f32 %v2532, %v2724
        %2726 = vmatpush.msra.mxu0 %v2725
        %v2727 = vand.u32 %v2531, 4294901760
        %v2728 = vsub.f32 %v2531, %v2727
        %2729 = vmatpush.msra.mxu0 %v2728
        %v2730 = vand.u32 %v2530, 4294901760
        %v2731 = vsub.f32 %v2530, %v2730
        %2732 = vmatpush.msra.mxu0 %v2731
        %v2733 = vand.u32 %v2529, 4294901760
        %v2734 = vsub.f32 %v2529, %v2733
        %2735 = vmatpush.msra.mxu0 %v2734
        %v2736 = vand.u32 %v2527, 4294901760
        %v2737 = vsub.f32 %v2527, %v2736
        %2738 = vmatmul.f32.gmra.mxu0 %v2737
        %v2739 = vpop.f32.mrf.mxu0
        %v2740 = vadd.f32 %v2686, %v2739
        %2741 = vdwg.mxu0
        %v2742 = vand.u32 %v2544, 4294901760
        %2743 = vmatpush.msra.mxu0 %v2742
        %v2744 = vand.u32 %v2543, 4294901760
        %2745 = vmatpush.msra.mxu0 %v2744
        %v2746 = vand.u32 %v2542, 4294901760
        %2747 = vmatpush.msra.mxu0 %v2746
        %v2748 = vand.u32 %v2541, 4294901760
        %2749 = vmatpush.msra.mxu0 %v2748
        %v2750 = vand.u32 %v2540, 4294901760
        %2751 = vmatpush.msra.mxu0 %v2750
        %v2752 = vand.u32 %v2539, 4294901760
        %2753 = vmatpush.msra.mxu0 %v2752
        %v2754 = vand.u32 %v2538, 4294901760
        %2755 = vmatpush.msra.mxu0 %v2754
        %v2756 = vand.u32 %v2537, 4294901760
        %2757 = vmatpush.msra.mxu0 %v2756
        %v2758 = vand.u32 %v2536, 4294901760
        %2759 = vmatpush.msra.mxu0 %v2758
        %v2760 = vand.u32 %v2535, 4294901760
        %2761 = vmatpush.msra.mxu0 %v2760
        %v2762 = vand.u32 %v2534, 4294901760
        %2763 = vmatpush.msra.mxu0 %v2762
        %v2764 = vand.u32 %v2533, 4294901760
        %2765 = vmatpush.msra.mxu0 %v2764
        %v2766 = vand.u32 %v2532, 4294901760
        %2767 = vmatpush.msra.mxu0 %v2766
        %v2768 = vand.u32 %v2531, 4294901760
        %2769 = vmatpush.msra.mxu0 %v2768
        %v2770 = vand.u32 %v2530, 4294901760
        %2771 = vmatpush.msra.mxu0 %v2770
        %v2772 = vand.u32 %v2529, 4294901760
        %2773 = vmatpush.msra.mxu0 %v2772
        %v2774 = vand.u32 %v2527, 4294901760
        %v2775 = vsub.f32 %v2527, %v2774
        %v2776 = vand.u32 %v2775, 4294901760
        %2777 = vmatmul.f32.gmra.mxu0 %v2776
        %v2778 = vpop.f32.mrf.mxu0
        %v2779 = vadd.f32 %v2740, %v2778
        %2780 = vdwg.mxu0
        %v2781 = vand.u32 %v2544, 4294901760
        %v2782 = vsub.f32 %v2544, %v2781
        %v2783 = vand.u32 %v2782, 4294901760
        %2784 = vmatpush.msra.mxu0 %v2783
        %v2785 = vand.u32 %v2543, 4294901760
        %v2786 = vsub.f32 %v2543, %v2785
        %v2787 = vand.u32 %v2786, 4294901760
        %2788 = vmatpush.msra.mxu0 %v2787
        %v2789 = vand.u32 %v2542, 4294901760
        %v2790 = vsub.f32 %v2542, %v2789
        %v2791 = vand.u32 %v2790, 4294901760
        %2792 = vmatpush.msra.mxu0 %v2791
        %v2793 = vand.u32 %v2541, 4294901760
        %v2794 = vsub.f32 %v2541, %v2793
        %v2795 = vand.u32 %v2794, 4294901760
        %2796 = vmatpush.msra.mxu0 %v2795
        %v2797 = vand.u32 %v2540, 4294901760
        %v2798 = vsub.f32 %v2540, %v2797
        %v2799 = vand.u32 %v2798, 4294901760
        %2800 = vmatpush.msra.mxu0 %v2799
        %v2801 = vand.u32 %v2539, 4294901760
        %v2802 = vsub.f32 %v2539, %v2801
        %v2803 = vand.u32 %v2802, 4294901760
        %2804 = vmatpush.msra.mxu0 %v2803
        %v2805 = vand.u32 %v2538, 4294901760
        %v2806 = vsub.f32 %v2538, %v2805
        %v2807 = vand.u32 %v2806, 4294901760
        %2808 = vmatpush.msra.mxu0 %v2807
        %v2809 = vand.u32 %v2537, 4294901760
        %v2810 = vsub.f32 %v2537, %v2809
        %v2811 = vand.u32 %v2810, 4294901760
        %2812 = vmatpush.msra.mxu0 %v2811
        %v2813 = vand.u32 %v2536, 4294901760
        %v2814 = vsub.f32 %v2536, %v2813
        %v2815 = vand.u32 %v2814, 4294901760
        %2816 = vmatpush.msra.mxu0 %v2815
        %v2817 = vand.u32 %v2535, 4294901760
        %v2818 = vsub.f32 %v2535, %v2817
        %v2819 = vand.u32 %v2818, 4294901760
        %2820 = vmatpush.msra.mxu0 %v2819
        %v2821 = vand.u32 %v2534, 4294901760
        %v2822 = vsub.f32 %v2534, %v2821
        %v2823 = vand.u32 %v2822, 4294901760
        %2824 = vmatpush.msra.mxu0 %v2823
        %v2825 = vand.u32 %v2533, 4294901760
        %v2826 = vsub.f32 %v2533, %v2825
        %v2827 = vand.u32 %v2826, 4294901760
        %2828 = vmatpush.msra.mxu0 %v2827
        %v2829 = vand.u32 %v2532, 4294901760
        %v2830 = vsub.f32 %v2532, %v2829
        %v2831 = vand.u32 %v2830, 4294901760
        %2832 = vmatpush.msra.mxu0 %v2831
        %v2833 = vand.u32 %v2531, 4294901760
        %v2834 = vsub.f32 %v2531, %v2833
        %v2835 = vand.u32 %v2834, 4294901760
        %2836 = vmatpush.msra.mxu0 %v2835
        %v2837 = vand.u32 %v2530, 4294901760
        %v2838 = vsub.f32 %v2530, %v2837
        %v2839 = vand.u32 %v2838, 4294901760
        %2840 = vmatpush.msra.mxu0 %v2839
        %v2841 = vand.u32 %v2529, 4294901760
        %v2842 = vsub.f32 %v2529, %v2841
        %v2843 = vand.u32 %v2842, 4294901760
        %2844 = vmatpush.msra.mxu0 %v2843
        %v2845 = vand.u32 %v2527, 4294901760
        %2846 = vmatmul.f32.gmra.mxu0 %v2845
        %v2847 = vpop.f32.mrf.mxu0
        %v2848 = vadd.f32 %v2779, %v2847
        %2849 = vdwg.mxu0
        %v2850 = vand.u32 %v2544, 4294901760
        %2851 = vmatpush.msra.mxu0 %v2850
        %v2852 = vand.u32 %v2543, 4294901760
        %2853 = vmatpush.msra.mxu0 %v2852
        %v2854 = vand.u32 %v2542, 4294901760
        %2855 = vmatpush.msra.mxu0 %v2854
        %v2856 = vand.u32 %v2541, 4294901760
        %2857 = vmatpush.msra.mxu0 %v2856
        %v2858 = vand.u32 %v2540, 4294901760
        %2859 = vmatpush.msra.mxu0 %v2858
        %v2860 = vand.u32 %v2539, 4294901760
        %2861 = vmatpush.msra.mxu0 %v2860
        %v2862 = vand.u32 %v2538, 4294901760
        %2863 = vmatpush.msra.mxu0 %v2862
        %v2864 = vand.u32 %v2537, 4294901760
        %2865 = vmatpush.msra.mxu0 %v2864
        %v2866 = vand.u32 %v2536, 4294901760
        %2867 = vmatpush.msra.mxu0 %v2866
        %v2868 = vand.u32 %v2535, 4294901760
        %2869 = vmatpush.msra.mxu0 %v2868
        %v2870 = vand.u32 %v2534, 4294901760
        %2871 = vmatpush.msra.mxu0 %v2870
        %v2872 = vand.u32 %v2533, 4294901760
        %2873 = vmatpush.msra.mxu0 %v2872
        %v2874 = vand.u32 %v2532, 4294901760
        %2875 = vmatpush.msra.mxu0 %v2874
        %v2876 = vand.u32 %v2531, 4294901760
        %2877 = vmatpush.msra.mxu0 %v2876
        %v2878 = vand.u32 %v2530, 4294901760
        %2879 = vmatpush.msra.mxu0 %v2878
        %v2880 = vand.u32 %v2529, 4294901760
        %2881 = vmatpush.msra.mxu0 %v2880
        %v2882 = vand.u32 %v2527, 4294901760
        %2883 = vmatmul.f32.gmra.mxu0 %v2882
        %v2884 = vpop.f32.mrf.mxu0
        %v2885 = vadd.f32 %v2848, %v2884
        %2886 = vdwg.mxu0
        %v2887 = vsel %vm1447, 1, 0
        %vm2888 = vcmp.eq.s32.totalorder %v2887, 1
        %v2889 = vsel %vm2888, %v2885, 0.0
        %s2890 = scalar_lea.vmem [#allocation9], 512
        %v2891 = vld [vmem:[%s2890] sm:$0xff]
        %v2892 = vld [vmem:[%s2890 + $0x8] sm:$0xff]
        %v2893 = vld [vmem:[%s2890 + $0x10] sm:$0xff]
        %v2894 = vld [vmem:[%s2890 + $0x18] sm:$0xff]
        %v2895 = vld [vmem:[%s2890 + $0x20] sm:$0xff]
        %v2896 = vld [vmem:[%s2890 + $0x28] sm:$0xff]
        %v2897 = vld [vmem:[%s2890 + $0x30] sm:$0xff]
        %v2898 = vld [vmem:[%s2890 + $0x38] sm:$0xff]
        %v2899 = vld [vmem:[%s2890 + $0x40] sm:$0xff]
        %v2900 = vld [vmem:[%s2890 + $0x48] sm:$0xff]
        %v2901 = vld [vmem:[%s2890 + $0x50] sm:$0xff]
        %v2902 = vld [vmem:[%s2890 + $0x58] sm:$0xff]
        %v2903 = vld [vmem:[%s2890 + $0x60] sm:$0xff]
        %v2904 = vld [vmem:[%s2890 + $0x68] sm:$0xff]
        %v2905 = vld [vmem:[%s2890 + $0x70] sm:$0xff]
        %v2906 = vld [vmem:[%s2890 + $0x78] sm:$0xff]
        %s2907 = scalar_lea.vmem [#allocation9], 640
        %v2908 = vld [vmem:[%s2907] sm:$0xff]
        %v2909 = vld [vmem:[%s2907 + $0x8] sm:$0xff]
        %v2910 = vld [vmem:[%s2907 + $0x10] sm:$0xff]
        %v2911 = vld [vmem:[%s2907 + $0x18] sm:$0xff]
        %v2912 = vld [vmem:[%s2907 + $0x20] sm:$0xff]
        %v2913 = vld [vmem:[%s2907 + $0x28] sm:$0xff]
        %v2914 = vld [vmem:[%s2907 + $0x30] sm:$0xff]
        %v2915 = vld [vmem:[%s2907 + $0x38] sm:$0xff]
        %v2916 = vld [vmem:[%s2907 + $0x40] sm:$0xff]
        %v2917 = vld [vmem:[%s2907 + $0x48] sm:$0xff]
        %v2918 = vld [vmem:[%s2907 + $0x50] sm:$0xff]
        %v2919 = vld [vmem:[%s2907 + $0x58] sm:$0xff]
        %v2920 = vld [vmem:[%s2907 + $0x60] sm:$0xff]
        %v2921 = vld [vmem:[%s2907 + $0x68] sm:$0xff]
        %v2922 = vld [vmem:[%s2907 + $0x70] sm:$0xff]
        %v2923 = vld [vmem:[%s2907 + $0x78] sm:$0xff]
        %v2924 = vand.u32 %v2923, 4294901760
        %2925 = vmatpush.msra.mxu0 %v2924
        %v2926 = vand.u32 %v2922, 4294901760
        %2927 = vmatpush.msra.mxu0 %v2926
        %v2928 = vand.u32 %v2921, 4294901760
        %2929 = vmatpush.msra.mxu0 %v2928
        %v2930 = vand.u32 %v2920, 4294901760
        %2931 = vmatpush.msra.mxu0 %v2930
        %v2932 = vand.u32 %v2919, 4294901760
        %2933 = vmatpush.msra.mxu0 %v2932
        %v2934 = vand.u32 %v2918, 4294901760
        %2935 = vmatpush.msra.mxu0 %v2934
        %v2936 = vand.u32 %v2917, 4294901760
        %2937 = vmatpush.msra.mxu0 %v2936
        %v2938 = vand.u32 %v2916, 4294901760
        %2939 = vmatpush.msra.mxu0 %v2938
        %v2940 = vand.u32 %v2915, 4294901760
        %2941 = vmatpush.msra.mxu0 %v2940
        %v2942 = vand.u32 %v2914, 4294901760
        %2943 = vmatpush.msra.mxu0 %v2942
        %v2944 = vand.u32 %v2913, 4294901760
        %2945 = vmatpush.msra.mxu0 %v2944
        %v2946 = vand.u32 %v2912, 4294901760
        %2947 = vmatpush.msra.mxu0 %v2946
        %v2948 = vand.u32 %v2911, 4294901760
        %2949 = vmatpush.msra.mxu0 %v2948
        %v2950 = vand.u32 %v2910, 4294901760
        %2951 = vmatpush.msra.mxu0 %v2950
        %v2952 = vand.u32 %v2909, 4294901760
        %2953 = vmatpush.msra.mxu0 %v2952
        %v2954 = vand.u32 %v2908, 4294901760
        %2955 = vmatpush.msra.mxu0 %v2954
        %v2956 = vand.u32 %v2889, 4294901760
        %v2957 = vsub.f32 %v2889, %v2956
        %v2958 = vand.u32 %v2957, 4294901760
        %v2959 = vsub.f32 %v2957, %v2958
        %v2960 = vand.u32 %v2959, 4294901760
        %2961 = vmatmul.f32.gmra.mxu0 %v2960
        %v2962 = vpop.f32.mrf.mxu0
        %v2963 = vadd.f32 0.0, %v2962
        %2964 = vdwg.mxu0
        %v2965 = vand.u32 %v2923, 4294901760
        %v2966 = vsub.f32 %v2923, %v2965
        %v2967 = vand.u32 %v2966, 4294901760
        %v2968 = vsub.f32 %v2966, %v2967
        %v2969 = vand.u32 %v2968, 4294901760
        %2970 = vmatpush.msra.mxu0 %v2969
        %v2971 = vand.u32 %v2922, 4294901760
        %v2972 = vsub.f32 %v2922, %v2971
        %v2973 = vand.u32 %v2972, 4294901760
        %v2974 = vsub.f32 %v2972, %v2973
        %v2975 = vand.u32 %v2974, 4294901760
        %2976 = vmatpush.msra.mxu0 %v2975
        %v2977 = vand.u32 %v2921, 4294901760
        %v2978 = vsub.f32 %v2921, %v2977
        %v2979 = vand.u32 %v2978, 4294901760
        %v2980 = vsub.f32 %v2978, %v2979
        %v2981 = vand.u32 %v2980, 4294901760
        %2982 = vmatpush.msra.mxu0 %v2981
        %v2983 = vand.u32 %v2920, 4294901760
        %v2984 = vsub.f32 %v2920, %v2983
        %v2985 = vand.u32 %v2984, 4294901760
        %v2986 = vsub.f32 %v2984, %v2985
        %v2987 = vand.u32 %v2986, 4294901760
        %2988 = vmatpush.msra.mxu0 %v2987
        %v2989 = vand.u32 %v2919, 4294901760
        %v2990 = vsub.f32 %v2919, %v2989
        %v2991 = vand.u32 %v2990, 4294901760
        %v2992 = vsub.f32 %v2990, %v2991
        %v2993 = vand.u32 %v2992, 4294901760
        %2994 = vmatpush.msra.mxu0 %v2993
        %v2995 = vand.u32 %v2918, 4294901760
        %v2996 = vsub.f32 %v2918, %v2995
        %v2997 = vand.u32 %v2996, 4294901760
        %v2998 = vsub.f32 %v2996, %v2997
        %v2999 = vand.u32 %v2998, 4294901760
        %3000 = vmatpush.msra.mxu0 %v2999
        %v3001 = vand.u32 %v2917, 4294901760
        %v3002 = vsub.f32 %v2917, %v3001
        %v3003 = vand.u32 %v3002, 4294901760
        %v3004 = vsub.f32 %v3002, %v3003
        %v3005 = vand.u32 %v3004, 4294901760
        %3006 = vmatpush.msra.mxu0 %v3005
        %v3007 = vand.u32 %v2916, 4294901760
        %v3008 = vsub.f32 %v2916, %v3007
        %v3009 = vand.u32 %v3008, 4294901760
        %v3010 = vsub.f32 %v3008, %v3009
        %v3011 = vand.u32 %v3010, 4294901760
        %3012 = vmatpush.msra.mxu0 %v3011
        %v3013 = vand.u32 %v2915, 4294901760
        %v3014 = vsub.f32 %v2915, %v3013
        %v3015 = vand.u32 %v3014, 4294901760
        %v3016 = vsub.f32 %v3014, %v3015
        %v3017 = vand.u32 %v3016, 4294901760
        %3018 = vmatpush.msra.mxu0 %v3017
        %v3019 = vand.u32 %v2914, 4294901760
        %v3020 = vsub.f32 %v2914, %v3019
        %v3021 = vand.u32 %v3020, 4294901760
        %v3022 = vsub.f32 %v3020, %v3021
        %v3023 = vand.u32 %v3022, 4294901760
        %3024 = vmatpush.msra.mxu0 %v3023
        %v3025 = vand.u32 %v2913, 4294901760
        %v3026 = vsub.f32 %v2913, %v3025
        %v3027 = vand.u32 %v3026, 4294901760
        %v3028 = vsub.f32 %v3026, %v3027
        %v3029 = vand.u32 %v3028, 4294901760
        %3030 = vmatpush.msra.mxu0 %v3029
        %v3031 = vand.u32 %v2912, 4294901760
        %v3032 = vsub.f32 %v2912, %v3031
        %v3033 = vand.u32 %v3032, 4294901760
        %v3034 = vsub.f32 %v3032, %v3033
        %v3035 = vand.u32 %v3034, 4294901760
        %3036 = vmatpush.msra.mxu0 %v3035
        %v3037 = vand.u32 %v2911, 4294901760
        %v3038 = vsub.f32 %v2911, %v3037
        %v3039 = vand.u32 %v3038, 4294901760
        %v3040 = vsub.f32 %v3038, %v3039
        %v3041 = vand.u32 %v3040, 4294901760
        %3042 = vmatpush.msra.mxu0 %v3041
        %v3043 = vand.u32 %v2910, 4294901760
        %v3044 = vsub.f32 %v2910, %v3043
        %v3045 = vand.u32 %v3044, 4294901760
        %v3046 = vsub.f32 %v3044, %v3045
        %v3047 = vand.u32 %v3046, 4294901760
        %3048 = vmatpush.msra.mxu0 %v3047
        %v3049 = vand.u32 %v2909, 4294901760
        %v3050 = vsub.f32 %v2909, %v3049
        %v3051 = vand.u32 %v3050, 4294901760
        %v3052 = vsub.f32 %v3050, %v3051
        %v3053 = vand.u32 %v3052, 4294901760
        %3054 = vmatpush.msra.mxu0 %v3053
        %v3055 = vand.u32 %v2908, 4294901760
        %v3056 = vsub.f32 %v2908, %v3055
        %v3057 = vand.u32 %v3056, 4294901760
        %v3058 = vsub.f32 %v3056, %v3057
        %v3059 = vand.u32 %v3058, 4294901760
        %3060 = vmatpush.msra.mxu0 %v3059
        %v3061 = vand.u32 %v2889, 4294901760
        %3062 = vmatmul.f32.gmra.mxu0 %v3061
        %v3063 = vpop.f32.mrf.mxu0
        %v3064 = vadd.f32 %v2963, %v3063
        %3065 = vdwg.mxu0
        %v3066 = vand.u32 %v2923, 4294901760
        %v3067 = vsub.f32 %v2923, %v3066
        %3068 = vmatpush.msra.mxu0 %v3067
        %v3069 = vand.u32 %v2922, 4294901760
        %v3070 = vsub.f32 %v2922, %v3069
        %3071 = vmatpush.msra.mxu0 %v3070
        %v3072 = vand.u32 %v2921, 4294901760
        %v3073 = vsub.f32 %v2921, %v3072
        %3074 = vmatpush.msra.mxu0 %v3073
        %v3075 = vand.u32 %v2920, 4294901760
        %v3076 = vsub.f32 %v2920, %v3075
        %3077 = vmatpush.msra.mxu0 %v3076
        %v3078 = vand.u32 %v2919, 4294901760
        %v3079 = vsub.f32 %v2919, %v3078
        %3080 = vmatpush.msra.mxu0 %v3079
        %v3081 = vand.u32 %v2918, 4294901760
        %v3082 = vsub.f32 %v2918, %v3081
        %3083 = vmatpush.msra.mxu0 %v3082
        %v3084 = vand.u32 %v2917, 4294901760
        %v3085 = vsub.f32 %v2917, %v3084
        %3086 = vmatpush.msra.mxu0 %v3085
        %v3087 = vand.u32 %v2916, 4294901760
        %v3088 = vsub.f32 %v2916, %v3087
        %3089 = vmatpush.msra.mxu0 %v3088
        %v3090 = vand.u32 %v2915, 4294901760
        %v3091 = vsub.f32 %v2915, %v3090
        %3092 = vmatpush.msra.mxu0 %v3091
        %v3093 = vand.u32 %v2914, 4294901760
        %v3094 = vsub.f32 %v2914, %v3093
        %3095 = vmatpush.msra.mxu0 %v3094
        %v3096 = vand.u32 %v2913, 4294901760
        %v3097 = vsub.f32 %v2913, %v3096
        %3098 = vmatpush.msra.mxu0 %v3097
        %v3099 = vand.u32 %v2912, 4294901760
        %v3100 = vsub.f32 %v2912, %v3099
        %3101 = vmatpush.msra.mxu0 %v3100
        %v3102 = vand.u32 %v2911, 4294901760
        %v3103 = vsub.f32 %v2911, %v3102
        %3104 = vmatpush.msra.mxu0 %v3103
        %v3105 = vand.u32 %v2910, 4294901760
        %v3106 = vsub.f32 %v2910, %v3105
        %3107 = vmatpush.msra.mxu0 %v3106
        %v3108 = vand.u32 %v2909, 4294901760
        %v3109 = vsub.f32 %v2909, %v3108
        %3110 = vmatpush.msra.mxu0 %v3109
        %v3111 = vand.u32 %v2908, 4294901760
        %v3112 = vsub.f32 %v2908, %v3111
        %3113 = vmatpush.msra.mxu0 %v3112
        %v3114 = vand.u32 %v2889, 4294901760
        %v3115 = vsub.f32 %v2889, %v3114
        %3116 = vmatmul.f32.gmra.mxu0 %v3115
        %v3117 = vpop.f32.mrf.mxu0
        %v3118 = vadd.f32 %v3064, %v3117
        %3119 = vdwg.mxu0
        %v3120 = vand.u32 %v2923, 4294901760
        %3121 = vmatpush.msra.mxu0 %v3120
        %v3122 = vand.u32 %v2922, 4294901760
        %3123 = vmatpush.msra.mxu0 %v3122
        %v3124 = vand.u32 %v2921, 4294901760
        %3125 = vmatpush.msra.mxu0 %v3124
        %v3126 = vand.u32 %v2920, 4294901760
        %3127 = vmatpush.msra.mxu0 %v3126
        %v3128 = vand.u32 %v2919, 4294901760
        %3129 = vmatpush.msra.mxu0 %v3128
        %v3130 = vand.u32 %v2918, 4294901760
        %3131 = vmatpush.msra.mxu0 %v3130
        %v3132 = vand.u32 %v2917, 4294901760
        %3133 = vmatpush.msra.mxu0 %v3132
        %v3134 = vand.u32 %v2916, 4294901760
        %3135 = vmatpush.msra.mxu0 %v3134
        %v3136 = vand.u32 %v2915, 4294901760
        %3137 = vmatpush.msra.mxu0 %v3136
        %v3138 = vand.u32 %v2914, 4294901760
        %3139 = vmatpush.msra.mxu0 %v3138
        %v3140 = vand.u32 %v2913, 4294901760
        %3141 = vmatpush.msra.mxu0 %v3140
        %v3142 = vand.u32 %v2912, 4294901760
        %3143 = vmatpush.msra.mxu0 %v3142
        %v3144 = vand.u32 %v2911, 4294901760
        %3145 = vmatpush.msra.mxu0 %v3144
        %v3146 = vand.u32 %v2910, 4294901760
        %3147 = vmatpush.msra.mxu0 %v3146
        %v3148 = vand.u32 %v2909, 4294901760
        %3149 = vmatpush.msra.mxu0 %v3148
        %v3150 = vand.u32 %v2908, 4294901760
        %3151 = vmatpush.msra.mxu0 %v3150
        %v3152 = vand.u32 %v2889, 4294901760
        %v3153 = vsub.f32 %v2889, %v3152
        %v3154 = vand.u32 %v3153, 4294901760
        %3155 = vmatmul.f32.gmra.mxu0 %v3154
        %v3156 = vpop.f32.mrf.mxu0
        %v3157 = vadd.f32 %v3118, %v3156
        %3158 = vdwg.mxu0
        %v3159 = vand.u32 %v2923, 4294901760
        %v3160 = vsub.f32 %v2923, %v3159
        %v3161 = vand.u32 %v3160, 4294901760
        %3162 = vmatpush.msra.mxu0 %v3161
        %v3163 = vand.u32 %v2922, 4294901760
        %v3164 = vsub.f32 %v2922, %v3163
        %v3165 = vand.u32 %v3164, 4294901760
        %3166 = vmatpush.msra.mxu0 %v3165
        %v3167 = vand.u32 %v2921, 4294901760
        %v3168 = vsub.f32 %v2921, %v3167
        %v3169 = vand.u32 %v3168, 4294901760
        %3170 = vmatpush.msra.mxu0 %v3169
        %v3171 = vand.u32 %v2920, 4294901760
        %v3172 = vsub.f32 %v2920, %v3171
        %v3173 = vand.u32 %v3172, 4294901760
        %3174 = vmatpush.msra.mxu0 %v3173
        %v3175 = vand.u32 %v2919, 4294901760
        %v3176 = vsub.f32 %v2919, %v3175
        %v3177 = vand.u32 %v3176, 4294901760
        %3178 = vmatpush.msra.mxu0 %v3177
        %v3179 = vand.u32 %v2918, 4294901760
        %v3180 = vsub.f32 %v2918, %v3179
        %v3181 = vand.u32 %v3180, 4294901760
        %3182 = vmatpush.msra.mxu0 %v3181
        %v3183 = vand.u32 %v2917, 4294901760
        %v3184 = vsub.f32 %v2917, %v3183
        %v3185 = vand.u32 %v3184, 4294901760
        %3186 = vmatpush.msra.mxu0 %v3185
        %v3187 = vand.u32 %v2916, 4294901760
        %v3188 = vsub.f32 %v2916, %v3187
        %v3189 = vand.u32 %v3188, 4294901760
        %3190 = vmatpush.msra.mxu0 %v3189
        %v3191 = vand.u32 %v2915, 4294901760
        %v3192 = vsub.f32 %v2915, %v3191
        %v3193 = vand.u32 %v3192, 4294901760
        %3194 = vmatpush.msra.mxu0 %v3193
        %v3195 = vand.u32 %v2914, 4294901760
        %v3196 = vsub.f32 %v2914, %v3195
        %v3197 = vand.u32 %v3196, 4294901760
        %3198 = vmatpush.msra.mxu0 %v3197
        %v3199 = vand.u32 %v2913, 4294901760
        %v3200 = vsub.f32 %v2913, %v3199
        %v3201 = vand.u32 %v3200, 4294901760
        %3202 = vmatpush.msra.mxu0 %v3201
        %v3203 = vand.u32 %v2912, 4294901760
        %v3204 = vsub.f32 %v2912, %v3203
        %v3205 = vand.u32 %v3204, 4294901760
        %3206 = vmatpush.msra.mxu0 %v3205
        %v3207 = vand.u32 %v2911, 4294901760
        %v3208 = vsub.f32 %v2911, %v3207
        %v3209 = vand.u32 %v3208, 4294901760
        %3210 = vmatpush.msra.mxu0 %v3209
        %v3211 = vand.u32 %v2910, 4294901760
        %v3212 = vsub.f32 %v2910, %v3211
        %v3213 = vand.u32 %v3212, 4294901760
        %3214 = vmatpush.msra.mxu0 %v3213
        %v3215 = vand.u32 %v2909, 4294901760
        %v3216 = vsub.f32 %v2909, %v3215
        %v3217 = vand.u32 %v3216, 4294901760
        %3218 = vmatpush.msra.mxu0 %v3217
        %v3219 = vand.u32 %v2908, 4294901760
        %v3220 = vsub.f32 %v2908, %v3219
        %v3221 = vand.u32 %v3220, 4294901760
        %3222 = vmatpush.msra.mxu0 %v3221
        %v3223 = vand.u32 %v2889, 4294901760
        %3224 = vmatmul.f32.gmra.mxu0 %v3223
        %v3225 = vpop.f32.mrf.mxu0
        %v3226 = vadd.f32 %v3157, %v3225
        %3227 = vdwg.mxu0
        %v3228 = vand.u32 %v2923, 4294901760
        %3229 = vmatpush.msra.mxu0 %v3228
        %v3230 = vand.u32 %v2922, 4294901760
        %3231 = vmatpush.msra.mxu0 %v3230
        %v3232 = vand.u32 %v2921, 4294901760
        %3233 = vmatpush.msra.mxu0 %v3232
        %v3234 = vand.u32 %v2920, 4294901760
        %3235 = vmatpush.msra.mxu0 %v3234
        %v3236 = vand.u32 %v2919, 4294901760
        %3237 = vmatpush.msra.mxu0 %v3236
        %v3238 = vand.u32 %v2918, 4294901760
        %3239 = vmatpush.msra.mxu0 %v3238
        %v3240 = vand.u32 %v2917, 4294901760
        %3241 = vmatpush.msra.mxu0 %v3240
        %v3242 = vand.u32 %v2916, 4294901760
        %3243 = vmatpush.msra.mxu0 %v3242
        %v3244 = vand.u32 %v2915, 4294901760
        %3245 = vmatpush.msra.mxu0 %v3244
        %v3246 = vand.u32 %v2914, 4294901760
        %3247 = vmatpush.msra.mxu0 %v3246
        %v3248 = vand.u32 %v2913, 4294901760
        %3249 = vmatpush.msra.mxu0 %v3248
        %v3250 = vand.u32 %v2912, 4294901760
        %3251 = vmatpush.msra.mxu0 %v3250
        %v3252 = vand.u32 %v2911, 4294901760
        %3253 = vmatpush.msra.mxu0 %v3252
        %v3254 = vand.u32 %v2910, 4294901760
        %3255 = vmatpush.msra.mxu0 %v3254
        %v3256 = vand.u32 %v2909, 4294901760
        %3257 = vmatpush.msra.mxu0 %v3256
        %v3258 = vand.u32 %v2908, 4294901760
        %3259 = vmatpush.msra.mxu0 %v3258
        %v3260 = vand.u32 %v2889, 4294901760
        %3261 = vmatmul.f32.gmra.mxu0 %v3260
        %v3262 = vpop.f32.mrf.mxu0
        %v3263 = vadd.f32 %v3226, %v3262
        %3264 = vdwg.mxu0
        %v3265 = vand.u32 %v2906, 4294901760
        %3266 = vmatpush.msra.mxu0 %v3265
        %v3267 = vand.u32 %v2905, 4294901760
        %3268 = vmatpush.msra.mxu0 %v3267
        %v3269 = vand.u32 %v2904, 4294901760
        %3270 = vmatpush.msra.mxu0 %v3269
        %v3271 = vand.u32 %v2903, 4294901760
        %3272 = vmatpush.msra.mxu0 %v3271
        %v3273 = vand.u32 %v2902, 4294901760
        %3274 = vmatpush.msra.mxu0 %v3273
        %v3275 = vand.u32 %v2901, 4294901760
        %3276 = vmatpush.msra.mxu0 %v3275
        %v3277 = vand.u32 %v2900, 4294901760
        %3278 = vmatpush.msra.mxu0 %v3277
        %v3279 = vand.u32 %v2899, 4294901760
        %3280 = vmatpush.msra.mxu0 %v3279
        %v3281 = vand.u32 %v2898, 4294901760
        %3282 = vmatpush.msra.mxu0 %v3281
        %v3283 = vand.u32 %v2897, 4294901760
        %3284 = vmatpush.msra.mxu0 %v3283
        %v3285 = vand.u32 %v2896, 4294901760
        %3286 = vmatpush.msra.mxu0 %v3285
        %v3287 = vand.u32 %v2895, 4294901760
        %3288 = vmatpush.msra.mxu0 %v3287
        %v3289 = vand.u32 %v2894, 4294901760
        %3290 = vmatpush.msra.mxu0 %v3289
        %v3291 = vand.u32 %v2893, 4294901760
        %3292 = vmatpush.msra.mxu0 %v3291
        %v3293 = vand.u32 %v2892, 4294901760
        %3294 = vmatpush.msra.mxu0 %v3293
        %v3295 = vand.u32 %v2891, 4294901760
        %3296 = vmatpush.msra.mxu0 %v3295
        %v3297 = vand.u32 %v2167, 4294901760
        %v3298 = vsub.f32 %v2167, %v3297
        %v3299 = vand.u32 %v3298, 4294901760
        %v3300 = vsub.f32 %v3298, %v3299
        %v3301 = vand.u32 %v3300, 4294901760
        %3302 = vmatmul.f32.gmra.mxu0 %v3301
        %v3303 = vpop.f32.mrf.mxu0
        %v3304 = vadd.f32 %v3263, %v3303
        %3305 = vdwg.mxu0
        %v3306 = vand.u32 %v2906, 4294901760
        %v3307 = vsub.f32 %v2906, %v3306
        %v3308 = vand.u32 %v3307, 4294901760
        %v3309 = vsub.f32 %v3307, %v3308
        %v3310 = vand.u32 %v3309, 4294901760
        %3311 = vmatpush.msra.mxu0 %v3310
        %v3312 = vand.u32 %v2905, 4294901760
        %v3313 = vsub.f32 %v2905, %v3312
        %v3314 = vand.u32 %v3313, 4294901760
        %v3315 = vsub.f32 %v3313, %v3314
        %v3316 = vand.u32 %v3315, 4294901760
        %3317 = vmatpush.msra.mxu0 %v3316
        %v3318 = vand.u32 %v2904, 4294901760
        %v3319 = vsub.f32 %v2904, %v3318
        %v3320 = vand.u32 %v3319, 4294901760
        %v3321 = vsub.f32 %v3319, %v3320
        %v3322 = vand.u32 %v3321, 4294901760
        %3323 = vmatpush.msra.mxu0 %v3322
        %v3324 = vand.u32 %v2903, 4294901760
        %v3325 = vsub.f32 %v2903, %v3324
        %v3326 = vand.u32 %v3325, 4294901760
        %v3327 = vsub.f32 %v3325, %v3326
        %v3328 = vand.u32 %v3327, 4294901760
        %3329 = vmatpush.msra.mxu0 %v3328
        %v3330 = vand.u32 %v2902, 4294901760
        %v3331 = vsub.f32 %v2902, %v3330
        %v3332 = vand.u32 %v3331, 4294901760
        %v3333 = vsub.f32 %v3331, %v3332
        %v3334 = vand.u32 %v3333, 4294901760
        %3335 = vmatpush.msra.mxu0 %v3334
        %v3336 = vand.u32 %v2901, 4294901760
        %v3337 = vsub.f32 %v2901, %v3336
        %v3338 = vand.u32 %v3337, 4294901760
        %v3339 = vsub.f32 %v3337, %v3338
        %v3340 = vand.u32 %v3339, 4294901760
        %3341 = vmatpush.msra.mxu0 %v3340
        %v3342 = vand.u32 %v2900, 4294901760
        %v3343 = vsub.f32 %v2900, %v3342
        %v3344 = vand.u32 %v3343, 4294901760
        %v3345 = vsub.f32 %v3343, %v3344
        %v3346 = vand.u32 %v3345, 4294901760
        %3347 = vmatpush.msra.mxu0 %v3346
        %v3348 = vand.u32 %v2899, 4294901760
        %v3349 = vsub.f32 %v2899, %v3348
        %v3350 = vand.u32 %v3349, 4294901760
        %v3351 = vsub.f32 %v3349, %v3350
        %v3352 = vand.u32 %v3351, 4294901760
        %3353 = vmatpush.msra.mxu0 %v3352
        %v3354 = vand.u32 %v2898, 4294901760
        %v3355 = vsub.f32 %v2898, %v3354
        %v3356 = vand.u32 %v3355, 4294901760
        %v3357 = vsub.f32 %v3355, %v3356
        %v3358 = vand.u32 %v3357, 4294901760
        %3359 = vmatpush.msra.mxu0 %v3358
        %v3360 = vand.u32 %v2897, 4294901760
        %v3361 = vsub.f32 %v2897, %v3360
        %v3362 = vand.u32 %v3361, 4294901760
        %v3363 = vsub.f32 %v3361, %v3362
        %v3364 = vand.u32 %v3363, 4294901760
        %3365 = vmatpush.msra.mxu0 %v3364
        %v3366 = vand.u32 %v2896, 4294901760
        %v3367 = vsub.f32 %v2896, %v3366
        %v3368 = vand.u32 %v3367, 4294901760
        %v3369 = vsub.f32 %v3367, %v3368
        %v3370 = vand.u32 %v3369, 4294901760
        %3371 = vmatpush.msra.mxu0 %v3370
        %v3372 = vand.u32 %v2895, 4294901760
        %v3373 = vsub.f32 %v2895, %v3372
        %v3374 = vand.u32 %v3373, 4294901760
        %v3375 = vsub.f32 %v3373, %v3374
        %v3376 = vand.u32 %v3375, 4294901760
        %3377 = vmatpush.msra.mxu0 %v3376
        %v3378 = vand.u32 %v2894, 4294901760
        %v3379 = vsub.f32 %v2894, %v3378
        %v3380 = vand.u32 %v3379, 4294901760
        %v3381 = vsub.f32 %v3379, %v3380
        %v3382 = vand.u32 %v3381, 4294901760
        %3383 = vmatpush.msra.mxu0 %v3382
        %v3384 = vand.u32 %v2893, 4294901760
        %v3385 = vsub.f32 %v2893, %v3384
        %v3386 = vand.u32 %v3385, 4294901760
        %v3387 = vsub.f32 %v3385, %v3386
        %v3388 = vand.u32 %v3387, 4294901760
        %3389 = vmatpush.msra.mxu0 %v3388
        %v3390 = vand.u32 %v2892, 4294901760
        %v3391 = vsub.f32 %v2892, %v3390
        %v3392 = vand.u32 %v3391, 4294901760
        %v3393 = vsub.f32 %v3391, %v3392
        %v3394 = vand.u32 %v3393, 4294901760
        %3395 = vmatpush.msra.mxu0 %v3394
        %v3396 = vand.u32 %v2891, 4294901760
        %v3397 = vsub.f32 %v2891, %v3396
        %v3398 = vand.u32 %v3397, 4294901760
        %v3399 = vsub.f32 %v3397, %v3398
        %v3400 = vand.u32 %v3399, 4294901760
        %3401 = vmatpush.msra.mxu0 %v3400
        %v3402 = vand.u32 %v2167, 4294901760
        %3403 = vmatmul.f32.gmra.mxu0 %v3402
        %v3404 = vpop.f32.mrf.mxu0
        %v3405 = vadd.f32 %v3304, %v3404
        %3406 = vdwg.mxu0
        %v3407 = vand.u32 %v2906, 4294901760
        %v3408 = vsub.f32 %v2906, %v3407
        %3409 = vmatpush.msra.mxu0 %v3408
        %v3410 = vand.u32 %v2905, 4294901760
        %v3411 = vsub.f32 %v2905, %v3410
        %3412 = vmatpush.msra.mxu0 %v3411
        %v3413 = vand.u32 %v2904, 4294901760
        %v3414 = vsub.f32 %v2904, %v3413
        %3415 = vmatpush.msra.mxu0 %v3414
        %v3416 = vand.u32 %v2903, 4294901760
        %v3417 = vsub.f32 %v2903, %v3416
        %3418 = vmatpush.msra.mxu0 %v3417
        %v3419 = vand.u32 %v2902, 4294901760
        %v3420 = vsub.f32 %v2902, %v3419
        %3421 = vmatpush.msra.mxu0 %v3420
        %v3422 = vand.u32 %v2901, 4294901760
        %v3423 = vsub.f32 %v2901, %v3422
        %3424 = vmatpush.msra.mxu0 %v3423
        %v3425 = vand.u32 %v2900, 4294901760
        %v3426 = vsub.f32 %v2900, %v3425
        %3427 = vmatpush.msra.mxu0 %v3426
        %v3428 = vand.u32 %v2899, 4294901760
        %v3429 = vsub.f32 %v2899, %v3428
        %3430 = vmatpush.msra.mxu0 %v3429
        %v3431 = vand.u32 %v2898, 4294901760
        %v3432 = vsub.f32 %v2898, %v3431
        %3433 = vmatpush.msra.mxu0 %v3432
        %v3434 = vand.u32 %v2897, 4294901760
        %v3435 = vsub.f32 %v2897, %v3434
        %3436 = vmatpush.msra.mxu0 %v3435
        %v3437 = vand.u32 %v2896, 4294901760
        %v3438 = vsub.f32 %v2896, %v3437
        %3439 = vmatpush.msra.mxu0 %v3438
        %v3440 = vand.u32 %v2895, 4294901760
        %v3441 = vsub.f32 %v2895, %v3440
        %3442 = vmatpush.msra.mxu0 %v3441
        %v3443 = vand.u32 %v2894, 4294901760
        %v3444 = vsub.f32 %v2894, %v3443
        %3445 = vmatpush.msra.mxu0 %v3444
        %v3446 = vand.u32 %v2893, 4294901760
        %v3447 = vsub.f32 %v2893, %v3446
        %3448 = vmatpush.msra.mxu0 %v3447
        %v3449 = vand.u32 %v2892, 4294901760
        %v3450 = vsub.f32 %v2892, %v3449
        %3451 = vmatpush.msra.mxu0 %v3450
        %v3452 = vand.u32 %v2891, 4294901760
        %v3453 = vsub.f32 %v2891, %v3452
        %3454 = vmatpush.msra.mxu0 %v3453
        %v3455 = vand.u32 %v2167, 4294901760
        %v3456 = vsub.f32 %v2167, %v3455
        %3457 = vmatmul.f32.gmra.mxu0 %v3456
        %v3458 = vpop.f32.mrf.mxu0
        %v3459 = vadd.f32 %v3405, %v3458
        %3460 = vdwg.mxu0
        %v3461 = vand.u32 %v2906, 4294901760
        %3462 = vmatpush.msra.mxu0 %v3461
        %v3463 = vand.u32 %v2905, 4294901760
        %3464 = vmatpush.msra.mxu0 %v3463
        %v3465 = vand.u32 %v2904, 4294901760
        %3466 = vmatpush.msra.mxu0 %v3465
        %v3467 = vand.u32 %v2903, 4294901760
        %3468 = vmatpush.msra.mxu0 %v3467
        %v3469 = vand.u32 %v2902, 4294901760
        %3470 = vmatpush.msra.mxu0 %v3469
        %v3471 = vand.u32 %v2901, 4294901760
        %3472 = vmatpush.msra.mxu0 %v3471
        %v3473 = vand.u32 %v2900, 4294901760
        %3474 = vmatpush.msra.mxu0 %v3473
        %v3475 = vand.u32 %v2899, 4294901760
        %3476 = vmatpush.msra.mxu0 %v3475
        %v3477 = vand.u32 %v2898, 4294901760
        %3478 = vmatpush.msra.mxu0 %v3477
        %v3479 = vand.u32 %v2897, 4294901760
        %3480 = vmatpush.msra.mxu0 %v3479
        %v3481 = vand.u32 %v2896, 4294901760
        %3482 = vmatpush.msra.mxu0 %v3481
        %v3483 = vand.u32 %v2895, 4294901760
        %3484 = vmatpush.msra.mxu0 %v3483
        %v3485 = vand.u32 %v2894, 4294901760
        %3486 = vmatpush.msra.mxu0 %v3485
        %v3487 = vand.u32 %v2893, 4294901760
        %3488 = vmatpush.msra.mxu0 %v3487
        %v3489 = vand.u32 %v2892, 4294901760
        %3490 = vmatpush.msra.mxu0 %v3489
        %v3491 = vand.u32 %v2891, 4294901760
        %3492 = vmatpush.msra.mxu0 %v3491
        %v3493 = vand.u32 %v2167, 4294901760
        %v3494 = vsub.f32 %v2167, %v3493
        %v3495 = vand.u32 %v3494, 4294901760
        %3496 = vmatmul.f32.gmra.mxu0 %v3495
        %v3497 = vpop.f32.mrf.mxu0
        %v3498 = vadd.f32 %v3459, %v3497
        %3499 = vdwg.mxu0
        %v3500 = vand.u32 %v2906, 4294901760
        %v3501 = vsub.f32 %v2906, %v3500
        %v3502 = vand.u32 %v3501, 4294901760
        %3503 = vmatpush.msra.mxu0 %v3502
        %v3504 = vand.u32 %v2905, 4294901760
        %v3505 = vsub.f32 %v2905, %v3504
        %v3506 = vand.u32 %v3505, 4294901760
        %3507 = vmatpush.msra.mxu0 %v3506
        %v3508 = vand.u32 %v2904, 4294901760
        %v3509 = vsub.f32 %v2904, %v3508
        %v3510 = vand.u32 %v3509, 4294901760
        %3511 = vmatpush.msra.mxu0 %v3510
        %v3512 = vand.u32 %v2903, 4294901760
        %v3513 = vsub.f32 %v2903, %v3512
        %v3514 = vand.u32 %v3513, 4294901760
        %3515 = vmatpush.msra.mxu0 %v3514
        %v3516 = vand.u32 %v2902, 4294901760
        %v3517 = vsub.f32 %v2902, %v3516
        %v3518 = vand.u32 %v3517, 4294901760
        %3519 = vmatpush.msra.mxu0 %v3518
        %v3520 = vand.u32 %v2901, 4294901760
        %v3521 = vsub.f32 %v2901, %v3520
        %v3522 = vand.u32 %v3521, 4294901760
        %3523 = vmatpush.msra.mxu0 %v3522
        %v3524 = vand.u32 %v2900, 4294901760
        %v3525 = vsub.f32 %v2900, %v3524
        %v3526 = vand.u32 %v3525, 4294901760
        %3527 = vmatpush.msra.mxu0 %v3526
        %v3528 = vand.u32 %v2899, 4294901760
        %v3529 = vsub.f32 %v2899, %v3528
        %v3530 = vand.u32 %v3529, 4294901760
        %3531 = vmatpush.msra.mxu0 %v3530
        %v3532 = vand.u32 %v2898, 4294901760
        %v3533 = vsub.f32 %v2898, %v3532
        %v3534 = vand.u32 %v3533, 4294901760
        %3535 = vmatpush.msra.mxu0 %v3534
        %v3536 = vand.u32 %v2897, 4294901760
        %v3537 = vsub.f32 %v2897, %v3536
        %v3538 = vand.u32 %v3537, 4294901760
        %3539 = vmatpush.msra.mxu0 %v3538
        %v3540 = vand.u32 %v2896, 4294901760
        %v3541 = vsub.f32 %v2896, %v3540
        %v3542 = vand.u32 %v3541, 4294901760
        %3543 = vmatpush.msra.mxu0 %v3542
        %v3544 = vand.u32 %v2895, 4294901760
        %v3545 = vsub.f32 %v2895, %v3544
        %v3546 = vand.u32 %v3545, 4294901760
        %3547 = vmatpush.msra.mxu0 %v3546
        %v3548 = vand.u32 %v2894, 4294901760
        %v3549 = vsub.f32 %v2894, %v3548
        %v3550 = vand.u32 %v3549, 4294901760
        %3551 = vmatpush.msra.mxu0 %v3550
        %v3552 = vand.u32 %v2893, 4294901760
        %v3553 = vsub.f32 %v2893, %v3552
        %v3554 = vand.u32 %v3553, 4294901760
        %3555 = vmatpush.msra.mxu0 %v3554
        %v3556 = vand.u32 %v2892, 4294901760
        %v3557 = vsub.f32 %v2892, %v3556
        %v3558 = vand.u32 %v3557, 4294901760
        %3559 = vmatpush.msra.mxu0 %v3558
        %v3560 = vand.u32 %v2891, 4294901760
        %v3561 = vsub.f32 %v2891, %v3560
        %v3562 = vand.u32 %v3561, 4294901760
        %3563 = vmatpush.msra.mxu0 %v3562
        %v3564 = vand.u32 %v2167, 4294901760
        %3565 = vmatmul.f32.gmra.mxu0 %v3564
        %v3566 = vpop.f32.mrf.mxu0
        %v3567 = vadd.f32 %v3498, %v3566
        %3568 = vdwg.mxu0
        %v3569 = vand.u32 %v2906, 4294901760
        %3570 = vmatpush.msra.mxu0 %v3569
        %v3571 = vand.u32 %v2905, 4294901760
        %3572 = vmatpush.msra.mxu0 %v3571
        %v3573 = vand.u32 %v2904, 4294901760
        %3574 = vmatpush.msra.mxu0 %v3573
        %v3575 = vand.u32 %v2903, 4294901760
        %3576 = vmatpush.msra.mxu0 %v3575
        %v3577 = vand.u32 %v2902, 4294901760
        %3578 = vmatpush.msra.mxu0 %v3577
        %v3579 = vand.u32 %v2901, 4294901760
        %3580 = vmatpush.msra.mxu0 %v3579
        %v3581 = vand.u32 %v2900, 4294901760
        %3582 = vmatpush.msra.mxu0 %v3581
        %v3583 = vand.u32 %v2899, 4294901760
        %3584 = vmatpush.msra.mxu0 %v3583
        %v3585 = vand.u32 %v2898, 4294901760
        %3586 = vmatpush.msra.mxu0 %v3585
        %v3587 = vand.u32 %v2897, 4294901760
        %3588 = vmatpush.msra.mxu0 %v3587
        %v3589 = vand.u32 %v2896, 4294901760
        %3590 = vmatpush.msra.mxu0 %v3589
        %v3591 = vand.u32 %v2895, 4294901760
        %3592 = vmatpush.msra.mxu0 %v3591
        %v3593 = vand.u32 %v2894, 4294901760
        %3594 = vmatpush.msra.mxu0 %v3593
        %v3595 = vand.u32 %v2893, 4294901760
        %3596 = vmatpush.msra.mxu0 %v3595
        %v3597 = vand.u32 %v2892, 4294901760
        %3598 = vmatpush.msra.mxu0 %v3597
        %v3599 = vand.u32 %v2891, 4294901760
        %3600 = vmatpush.msra.mxu0 %v3599
        %v3601 = vand.u32 %v2167, 4294901760
        %3602 = vmatmul.f32.gmra.mxu0 %v3601
        %v3603 = vpop.f32.mrf.mxu0
        %v3604 = vadd.f32 %v3567, %v3603
        %3605 = vdwg.mxu0
        %v3606 = vperm.slane %v1448, 4
        %v3607 = vadd.f32 %v3604, %v3606
        %v3608 = vmax.f32 %v3607, 0.0
        %s3609 = scalar_lea.vmem [#allocation9], 768
        %v3610 = vld [vmem:[%s3609] sm:$0xff]
        %v3611 = vld [vmem:[%s3609 + $0x8] sm:$0xff]
        %v3612 = vld [vmem:[%s3609 + $0x10] sm:$0xff]
        %v3613 = vld [vmem:[%s3609 + $0x18] sm:$0xff]
        %v3614 = vld [vmem:[%s3609 + $0x20] sm:$0xff]
        %v3615 = vld [vmem:[%s3609 + $0x28] sm:$0xff]
        %v3616 = vld [vmem:[%s3609 + $0x30] sm:$0xff]
        %v3617 = vld [vmem:[%s3609 + $0x38] sm:$0xff]
        %v3618 = vld [vmem:[%s3609 + $0x40] sm:$0xff]
        %v3619 = vld [vmem:[%s3609 + $0x48] sm:$0xff]
        %v3620 = vld [vmem:[%s3609 + $0x50] sm:$0xff]
        %v3621 = vld [vmem:[%s3609 + $0x58] sm:$0xff]
        %v3622 = vld [vmem:[%s3609 + $0x60] sm:$0xff]
        %v3623 = vld [vmem:[%s3609 + $0x68] sm:$0xff]
        %v3624 = vld [vmem:[%s3609 + $0x70] sm:$0xff]
        %v3625 = vld [vmem:[%s3609 + $0x78] sm:$0xff]
        %v3626 = vperm.slane %v1448, 5
        %v3627 = vand.u32 %v3625, 4294901760
        %3628 = vmatpush.msra.mxu0 %v3627
        %v3629 = vand.u32 %v3624, 4294901760
        %3630 = vmatpush.msra.mxu0 %v3629
        %v3631 = vand.u32 %v3623, 4294901760
        %3632 = vmatpush.msra.mxu0 %v3631
        %v3633 = vand.u32 %v3622, 4294901760
        %3634 = vmatpush.msra.mxu0 %v3633
        %v3635 = vand.u32 %v3621, 4294901760
        %3636 = vmatpush.msra.mxu0 %v3635
        %v3637 = vand.u32 %v3620, 4294901760
        %3638 = vmatpush.msra.mxu0 %v3637
        %v3639 = vand.u32 %v3619, 4294901760
        %3640 = vmatpush.msra.mxu0 %v3639
        %v3641 = vand.u32 %v3618, 4294901760
        %3642 = vmatpush.msra.mxu0 %v3641
        %v3643 = vand.u32 %v3617, 4294901760
        %3644 = vmatpush.msra.mxu0 %v3643
        %v3645 = vand.u32 %v3616, 4294901760
        %3646 = vmatpush.msra.mxu0 %v3645
        %v3647 = vand.u32 %v3615, 4294901760
        %3648 = vmatpush.msra.mxu0 %v3647
        %v3649 = vand.u32 %v3614, 4294901760
        %3650 = vmatpush.msra.mxu0 %v3649
        %v3651 = vand.u32 %v3613, 4294901760
        %3652 = vmatpush.msra.mxu0 %v3651
        %v3653 = vand.u32 %v3612, 4294901760
        %3654 = vmatpush.msra.mxu0 %v3653
        %v3655 = vand.u32 %v3611, 4294901760
        %3656 = vmatpush.msra.mxu0 %v3655
        %v3657 = vand.u32 %v3610, 4294901760
        %3658 = vmatpush.msra.mxu0 %v3657
        %v3659 = vand.u32 %v3608, 4294901760
        %v3660 = vsub.f32 %v3608, %v3659
        %v3661 = vand.u32 %v3660, 4294901760
        %v3662 = vsub.f32 %v3660, %v3661
        %v3663 = vand.u32 %v3662, 4294901760
        %3664 = vmatmul.f32.gmra.mxu0 %v3663
        %v3665 = vpop.f32.mrf.mxu0
        %v3666 = vadd.f32 %v3626, %v3665
        %3667 = vdwg.mxu0
        %v3668 = vand.u32 %v3625, 4294901760
        %v3669 = vsub.f32 %v3625, %v3668
        %v3670 = vand.u32 %v3669, 4294901760
        %v3671 = vsub.f32 %v3669, %v3670
        %v3672 = vand.u32 %v3671, 4294901760
        %3673 = vmatpush.msra.mxu0 %v3672
        %v3674 = vand.u32 %v3624, 4294901760
        %v3675 = vsub.f32 %v3624, %v3674
        %v3676 = vand.u32 %v3675, 4294901760
        %v3677 = vsub.f32 %v3675, %v3676
        %v3678 = vand.u32 %v3677, 4294901760
        %3679 = vmatpush.msra.mxu0 %v3678
        %v3680 = vand.u32 %v3623, 4294901760
        %v3681 = vsub.f32 %v3623, %v3680
        %v3682 = vand.u32 %v3681, 4294901760
        %v3683 = vsub.f32 %v3681, %v3682
        %v3684 = vand.u32 %v3683, 4294901760
        %3685 = vmatpush.msra.mxu0 %v3684
        %v3686 = vand.u32 %v3622, 4294901760
        %v3687 = vsub.f32 %v3622, %v3686
        %v3688 = vand.u32 %v3687, 4294901760
        %v3689 = vsub.f32 %v3687, %v3688
        %v3690 = vand.u32 %v3689, 4294901760
        %3691 = vmatpush.msra.mxu0 %v3690
        %v3692 = vand.u32 %v3621, 4294901760
        %v3693 = vsub.f32 %v3621, %v3692
        %v3694 = vand.u32 %v3693, 4294901760
        %v3695 = vsub.f32 %v3693, %v3694
        %v3696 = vand.u32 %v3695, 4294901760
        %3697 = vmatpush.msra.mxu0 %v3696
        %v3698 = vand.u32 %v3620, 4294901760
        %v3699 = vsub.f32 %v3620, %v3698
        %v3700 = vand.u32 %v3699, 4294901760
        %v3701 = vsub.f32 %v3699, %v3700
        %v3702 = vand.u32 %v3701, 4294901760
        %3703 = vmatpush.msra.mxu0 %v3702
        %v3704 = vand.u32 %v3619, 4294901760
        %v3705 = vsub.f32 %v3619, %v3704
        %v3706 = vand.u32 %v3705, 4294901760
        %v3707 = vsub.f32 %v3705, %v3706
        %v3708 = vand.u32 %v3707, 4294901760
        %3709 = vmatpush.msra.mxu0 %v3708
        %v3710 = vand.u32 %v3618, 4294901760
        %v3711 = vsub.f32 %v3618, %v3710
        %v3712 = vand.u32 %v3711, 4294901760
        %v3713 = vsub.f32 %v3711, %v3712
        %v3714 = vand.u32 %v3713, 4294901760
        %3715 = vmatpush.msra.mxu0 %v3714
        %v3716 = vand.u32 %v3617, 4294901760
        %v3717 = vsub.f32 %v3617, %v3716
        %v3718 = vand.u32 %v3717, 4294901760
        %v3719 = vsub.f32 %v3717, %v3718
        %v3720 = vand.u32 %v3719, 4294901760
        %3721 = vmatpush.msra.mxu0 %v3720
        %v3722 = vand.u32 %v3616, 4294901760
        %v3723 = vsub.f32 %v3616, %v3722
        %v3724 = vand.u32 %v3723, 4294901760
        %v3725 = vsub.f32 %v3723, %v3724
        %v3726 = vand.u32 %v3725, 4294901760
        %3727 = vmatpush.msra.mxu0 %v3726
        %v3728 = vand.u32 %v3615, 4294901760
        %v3729 = vsub.f32 %v3615, %v3728
        %v3730 = vand.u32 %v3729, 4294901760
        %v3731 = vsub.f32 %v3729, %v3730
        %v3732 = vand.u32 %v3731, 4294901760
        %3733 = vmatpush.msra.mxu0 %v3732
        %v3734 = vand.u32 %v3614, 4294901760
        %v3735 = vsub.f32 %v3614, %v3734
        %v3736 = vand.u32 %v3735, 4294901760
        %v3737 = vsub.f32 %v3735, %v3736
        %v3738 = vand.u32 %v3737, 4294901760
        %3739 = vmatpush.msra.mxu0 %v3738
        %v3740 = vand.u32 %v3613, 4294901760
        %v3741 = vsub.f32 %v3613, %v3740
        %v3742 = vand.u32 %v3741, 4294901760
        %v3743 = vsub.f32 %v3741, %v3742
        %v3744 = vand.u32 %v3743, 4294901760
        %3745 = vmatpush.msra.mxu0 %v3744
        %v3746 = vand.u32 %v3612, 4294901760
        %v3747 = vsub.f32 %v3612, %v3746
        %v3748 = vand.u32 %v3747, 4294901760
        %v3749 = vsub.f32 %v3747, %v3748
        %v3750 = vand.u32 %v3749, 4294901760
        %3751 = vmatpush.msra.mxu0 %v3750
        %v3752 = vand.u32 %v3611, 4294901760
        %v3753 = vsub.f32 %v3611, %v3752
        %v3754 = vand.u32 %v3753, 4294901760
        %v3755 = vsub.f32 %v3753, %v3754
        %v3756 = vand.u32 %v3755, 4294901760
        %3757 = vmatpush.msra.mxu0 %v3756
        %v3758 = vand.u32 %v3610, 4294901760
        %v3759 = vsub.f32 %v3610, %v3758
        %v3760 = vand.u32 %v3759, 4294901760
        %v3761 = vsub.f32 %v3759, %v3760
        %v3762 = vand.u32 %v3761, 4294901760
        %3763 = vmatpush.msra.mxu0 %v3762
        %v3764 = vand.u32 %v3608, 4294901760
        %3765 = vmatmul.f32.gmra.mxu0 %v3764
        %v3766 = vpop.f32.mrf.mxu0
        %v3767 = vadd.f32 %v3666, %v3766
        %3768 = vdwg.mxu0
        %v3769 = vand.u32 %v3625, 4294901760
        %v3770 = vsub.f32 %v3625, %v3769
        %3771 = vmatpush.msra.mxu0 %v3770
        %v3772 = vand.u32 %v3624, 4294901760
        %v3773 = vsub.f32 %v3624, %v3772
        %3774 = vmatpush.msra.mxu0 %v3773
        %v3775 = vand.u32 %v3623, 4294901760
        %v3776 = vsub.f32 %v3623, %v3775
        %3777 = vmatpush.msra.mxu0 %v3776
        %v3778 = vand.u32 %v3622, 4294901760
        %v3779 = vsub.f32 %v3622, %v3778
        %3780 = vmatpush.msra.mxu0 %v3779
        %v3781 = vand.u32 %v3621, 4294901760
        %v3782 = vsub.f32 %v3621, %v3781
        %3783 = vmatpush.msra.mxu0 %v3782
        %v3784 = vand.u32 %v3620, 4294901760
        %v3785 = vsub.f32 %v3620, %v3784
        %3786 = vmatpush.msra.mxu0 %v3785
        %v3787 = vand.u32 %v3619, 4294901760
        %v3788 = vsub.f32 %v3619, %v3787
        %3789 = vmatpush.msra.mxu0 %v3788
        %v3790 = vand.u32 %v3618, 4294901760
        %v3791 = vsub.f32 %v3618, %v3790
        %3792 = vmatpush.msra.mxu0 %v3791
        %v3793 = vand.u32 %v3617, 4294901760
        %v3794 = vsub.f32 %v3617, %v3793
        %3795 = vmatpush.msra.mxu0 %v3794
        %v3796 = vand.u32 %v3616, 4294901760
        %v3797 = vsub.f32 %v3616, %v3796
        %3798 = vmatpush.msra.mxu0 %v3797
        %v3799 = vand.u32 %v3615, 4294901760
        %v3800 = vsub.f32 %v3615, %v3799
        %3801 = vmatpush.msra.mxu0 %v3800
        %v3802 = vand.u32 %v3614, 4294901760
        %v3803 = vsub.f32 %v3614, %v3802
        %3804 = vmatpush.msra.mxu0 %v3803
        %v3805 = vand.u32 %v3613, 4294901760
        %v3806 = vsub.f32 %v3613, %v3805
        %3807 = vmatpush.msra.mxu0 %v3806
        %v3808 = vand.u32 %v3612, 4294901760
        %v3809 = vsub.f32 %v3612, %v3808
        %3810 = vmatpush.msra.mxu0 %v3809
        %v3811 = vand.u32 %v3611, 4294901760
        %v3812 = vsub.f32 %v3611, %v3811
        %3813 = vmatpush.msra.mxu0 %v3812
        %v3814 = vand.u32 %v3610, 4294901760
        %v3815 = vsub.f32 %v3610, %v3814
        %3816 = vmatpush.msra.mxu0 %v3815
        %v3817 = vand.u32 %v3608, 4294901760
        %v3818 = vsub.f32 %v3608, %v3817
        %3819 = vmatmul.f32.gmra.mxu0 %v3818
        %v3820 = vpop.f32.mrf.mxu0
        %v3821 = vadd.f32 %v3767, %v3820
        %3822 = vdwg.mxu0
        %v3823 = vand.u32 %v3625, 4294901760
        %3824 = vmatpush.msra.mxu0 %v3823
        %v3825 = vand.u32 %v3624, 4294901760
        %3826 = vmatpush.msra.mxu0 %v3825
        %v3827 = vand.u32 %v3623, 4294901760
        %3828 = vmatpush.msra.mxu0 %v3827
        %v3829 = vand.u32 %v3622, 4294901760
        %3830 = vmatpush.msra.mxu0 %v3829
        %v3831 = vand.u32 %v3621, 4294901760
        %3832 = vmatpush.msra.mxu0 %v3831
        %v3833 = vand.u32 %v3620, 4294901760
        %3834 = vmatpush.msra.mxu0 %v3833
        %v3835 = vand.u32 %v3619, 4294901760
        %3836 = vmatpush.msra.mxu0 %v3835
        %v3837 = vand.u32 %v3618, 4294901760
        %3838 = vmatpush.msra.mxu0 %v3837
        %v3839 = vand.u32 %v3617, 4294901760
        %3840 = vmatpush.msra.mxu0 %v3839
        %v3841 = vand.u32 %v3616, 4294901760
        %3842 = vmatpush.msra.mxu0 %v3841
        %v3843 = vand.u32 %v3615, 4294901760
        %3844 = vmatpush.msra.mxu0 %v3843
        %v3845 = vand.u32 %v3614, 4294901760
        %3846 = vmatpush.msra.mxu0 %v3845
        %v3847 = vand.u32 %v3613, 4294901760
        %3848 = vmatpush.msra.mxu0 %v3847
        %v3849 = vand.u32 %v3612, 4294901760
        %3850 = vmatpush.msra.mxu0 %v3849
        %v3851 = vand.u32 %v3611, 4294901760
        %3852 = vmatpush.msra.mxu0 %v3851
        %v3853 = vand.u32 %v3610, 4294901760
        %3854 = vmatpush.msra.mxu0 %v3853
        %v3855 = vand.u32 %v3608, 4294901760
        %v3856 = vsub.f32 %v3608, %v3855
        %v3857 = vand.u32 %v3856, 4294901760
        %3858 = vmatmul.f32.gmra.mxu0 %v3857
        %v3859 = vpop.f32.mrf.mxu0
        %v3860 = vadd.f32 %v3821, %v3859
        %3861 = vdwg.mxu0
        %v3862 = vand.u32 %v3625, 4294901760
        %v3863 = vsub.f32 %v3625, %v3862
        %v3864 = vand.u32 %v3863, 4294901760
        %3865 = vmatpush.msra.mxu0 %v3864
        %v3866 = vand.u32 %v3624, 4294901760
        %v3867 = vsub.f32 %v3624, %v3866
        %v3868 = vand.u32 %v3867, 4294901760
        %3869 = vmatpush.msra.mxu0 %v3868
        %v3870 = vand.u32 %v3623, 4294901760
        %v3871 = vsub.f32 %v3623, %v3870
        %v3872 = vand.u32 %v3871, 4294901760
        %3873 = vmatpush.msra.mxu0 %v3872
        %v3874 = vand.u32 %v3622, 4294901760
        %v3875 = vsub.f32 %v3622, %v3874
        %v3876 = vand.u32 %v3875, 4294901760
        %3877 = vmatpush.msra.mxu0 %v3876
        %v3878 = vand.u32 %v3621, 4294901760
        %v3879 = vsub.f32 %v3621, %v3878
        %v3880 = vand.u32 %v3879, 4294901760
        %3881 = vmatpush.msra.mxu0 %v3880
        %v3882 = vand.u32 %v3620, 4294901760
        %v3883 = vsub.f32 %v3620, %v3882
        %v3884 = vand.u32 %v3883, 4294901760
        %3885 = vmatpush.msra.mxu0 %v3884
        %v3886 = vand.u32 %v3619, 4294901760
        %v3887 = vsub.f32 %v3619, %v3886
        %v3888 = vand.u32 %v3887, 4294901760
        %3889 = vmatpush.msra.mxu0 %v3888
        %v3890 = vand.u32 %v3618, 4294901760
        %v3891 = vsub.f32 %v3618, %v3890
        %v3892 = vand.u32 %v3891, 4294901760
        %3893 = vmatpush.msra.mxu0 %v3892
        %v3894 = vand.u32 %v3617, 4294901760
        %v3895 = vsub.f32 %v3617, %v3894
        %v3896 = vand.u32 %v3895, 4294901760
        %3897 = vmatpush.msra.mxu0 %v3896
        %v3898 = vand.u32 %v3616, 4294901760
        %v3899 = vsub.f32 %v3616, %v3898
        %v3900 = vand.u32 %v3899, 4294901760
        %3901 = vmatpush.msra.mxu0 %v3900
        %v3902 = vand.u32 %v3615, 4294901760
        %v3903 = vsub.f32 %v3615, %v3902
        %v3904 = vand.u32 %v3903, 4294901760
        %3905 = vmatpush.msra.mxu0 %v3904
        %v3906 = vand.u32 %v3614, 4294901760
        %v3907 = vsub.f32 %v3614, %v3906
        %v3908 = vand.u32 %v3907, 4294901760
        %3909 = vmatpush.msra.mxu0 %v3908
        %v3910 = vand.u32 %v3613, 4294901760
        %v3911 = vsub.f32 %v3613, %v3910
        %v3912 = vand.u32 %v3911, 4294901760
        %3913 = vmatpush.msra.mxu0 %v3912
        %v3914 = vand.u32 %v3612, 4294901760
        %v3915 = vsub.f32 %v3612, %v3914
        %v3916 = vand.u32 %v3915, 4294901760
        %3917 = vmatpush.msra.mxu0 %v3916
        %v3918 = vand.u32 %v3611, 4294901760
        %v3919 = vsub.f32 %v3611, %v3918
        %v3920 = vand.u32 %v3919, 4294901760
        %3921 = vmatpush.msra.mxu0 %v3920
        %v3922 = vand.u32 %v3610, 4294901760
        %v3923 = vsub.f32 %v3610, %v3922
        %v3924 = vand.u32 %v3923, 4294901760
        %3925 = vmatpush.msra.mxu0 %v3924
        %v3926 = vand.u32 %v3608, 4294901760
        %3927 = vmatmul.f32.gmra.mxu0 %v3926
        %v3928 = vpop.f32.mrf.mxu0
        %v3929 = vadd.f32 %v3860, %v3928
        %3930 = vdwg.mxu0
        %v3931 = vand.u32 %v3625, 4294901760
        %3932 = vmatpush.msra.mxu0 %v3931
        %v3933 = vand.u32 %v3624, 4294901760
        %3934 = vmatpush.msra.mxu0 %v3933
        %v3935 = vand.u32 %v3623, 4294901760
        %3936 = vmatpush.msra.mxu0 %v3935
        %v3937 = vand.u32 %v3622, 4294901760
        %3938 = vmatpush.msra.mxu0 %v3937
        %v3939 = vand.u32 %v3621, 4294901760
        %3940 = vmatpush.msra.mxu0 %v3939
        %v3941 = vand.u32 %v3620, 4294901760
        %3942 = vmatpush.msra.mxu0 %v3941
        %v3943 = vand.u32 %v3619, 4294901760
        %3944 = vmatpush.msra.mxu0 %v3943
        %v3945 = vand.u32 %v3618, 4294901760
        %3946 = vmatpush.msra.mxu0 %v3945
        %v3947 = vand.u32 %v3617, 4294901760
        %3948 = vmatpush.msra.mxu0 %v3947
        %v3949 = vand.u32 %v3616, 4294901760
        %3950 = vmatpush.msra.mxu0 %v3949
        %v3951 = vand.u32 %v3615, 4294901760
        %3952 = vmatpush.msra.mxu0 %v3951
        %v3953 = vand.u32 %v3614, 4294901760
        %3954 = vmatpush.msra.mxu0 %v3953
        %v3955 = vand.u32 %v3613, 4294901760
        %3956 = vmatpush.msra.mxu0 %v3955
        %v3957 = vand.u32 %v3612, 4294901760
        %3958 = vmatpush.msra.mxu0 %v3957
        %v3959 = vand.u32 %v3611, 4294901760
        %3960 = vmatpush.msra.mxu0 %v3959
        %v3961 = vand.u32 %v3610, 4294901760
        %3962 = vmatpush.msra.mxu0 %v3961
        %v3963 = vand.u32 %v3608, 4294901760
        %3964 = vmatmul.f32.gmra.mxu0 %v3963
        %v3965 = vpop.f32.mrf.mxu0
        %v3966 = vadd.f32 %v3929, %v3965
        %3967 = vdwg.mxu0
        %3968 = vst [vmem:[%s369] sm:$0xff] %v3966
        %s3969 = sand.u32 %s169, 1
        %s3970 = scalar_lea.sflag [#allocation4], %s3969
        %s3971 = sand.u32 %s169, 1
        %s3972 = smul.addr %s3971, 8
        %s3973 = scalar_lea.vmem [#allocation12], %s3972
        // Predicated region
        $region69: #{tpu_custom_call.1} parent=43 // pred_check
          %p3974 = pneg %p179
        $region70: #{tpu_custom_call.1} parent=43 // pred_check_branch
          %3976 = sbr.rel (%p3974) target = $region72
        $region71: #{tpu_custom_call.1} parent=43 // pred_region
          %3978 = vsyncadd %s3970, 0
          %s3979 = smul.addr %s25, 8
          %s3980 = scalar_lea.hbm %s6, %s3979
          %s3982 = sshll.u32 %s3973, 4
          %s3983 = int_to_ptr.vmem [resolvable:$true] %s3982
          %s3984 = sshll.u32 %s3980, 4
          %s3985 = int_to_ptr.hbm [resolvable:$true] %s3984
          %3987 = dma.vmem_to_hbm [thread:$0]  %s3983, 128, %s3985, %s3970
        $region72: #{tpu_custom_call.1} parent=43 // pred_fallthru
          _
      $region44: #{tpu_custom_call.1} parent=5 // pred_fallthru
        _
      %p3988 = scmp.le.s32.totalorder 2, %s20
      // Predicated region
      $region73: #{tpu_custom_call.1} parent=5 // pred_check
        %p3989 = pneg %p3988
      $region74: #{tpu_custom_call.1} parent=5 // pred_check_branch
        %3991 = sbr.rel (%p3989) target = $region76
      $region75: #{tpu_custom_call.1} parent=5 // pred_region
        %s3992 = ssub.s32 %s20, 2
        // Predicated region
        $region77: #{tpu_custom_call.1} parent=75 // pred_check
          %p3993 = pneg %p185
        $region78: #{tpu_custom_call.1} parent=75 // pred_check_branch
          %3995 = sbr.rel (%p3993) target = $region80
        $region79: #{tpu_custom_call.1} parent=75 // pred_region
          %s3996 = sand.u32 %s170, 1
          %s3997 = scalar_lea.sflag [#allocation4], %s3996
          %s3998 = sand.u32 %s170, 1
          %s3999 = smul.addr %s3998, 8
          %s4000 = scalar_lea.vmem [#allocation12], %s3999
          %4002 = dma.done %s3997, 128
        $region80: #{tpu_custom_call.1} parent=75 // pred_fallthru
          _
      $region76: #{tpu_custom_call.1} parent=5 // pred_fallthru
        _
    $region6: #{tpu_custom_call.1} parent=1 // loop_footer
      %s24 = sadd.s32 1, %s20
    $region7: #{tpu_custom_call.1} parent=1 // loop_footer_branch
      %19 = sbr.rel target = $region3
    $region8: #{tpu_custom_call.1} parent=1 // loop_exit
      _
    %4003 = vsyncpa [#allocation3], 1
    %s4004 = scalar_lea.sflag [#allocation3], 1
    %4005 = vsyncpa %s4004, 1
    %4006 = vsyncpa [#allocation6], 1
    %4007 = vsyncpa [#allocation10], 1
    %4008 = vsyncpa [#allocation4], 1
    %s4009 = scalar_lea.sflag [#allocation4], 1
    %4010 = vsyncpa %s4009, 1

</llo_original>
